<compile_context>
chip_gen: v7x
topology: tpu7x:2x2x1
jax: 0.10.0
libtpu: 0.0.40
codegen_flags: <defaults>
</compile_context>

<pallas_src>
import math
import functools

import jax
import jax.numpy as jnp
import numpy as np
from jax import lax
from jax.experimental import pallas as pl
from jax.experimental.pallas import tpu as pltpu


# ------------------------- in-kernel helpers -------------------------

def _layernorm(x, gamma, beta, eps=1e-5):
    # x: (rows, H) f32; gamma/beta: (1, H) f32
    mean = jnp.mean(x, axis=-1, keepdims=True)
    var = jnp.mean((x - mean) ** 2, axis=-1, keepdims=True)
    return (x - mean) * lax.rsqrt(var + eps) * gamma + beta


def _mha(q_in, k_in, v_in, wq_ref, wk_ref, wv_ref, wo_ref, mask, num_heads):
    """Multi-head attention for ONE batch element on 2-D (rows, H) slabs.

    q_in: (Nq, H) f32; k_in / v_in: (Nk, H) f32.
    wq/wk/wv/wo refs: (H, H) bf16 — full merged projections.
    mask: bool, broadcastable to (Nq, Nk).
    """
    Nq, H = q_in.shape
    Nk = k_in.shape[0]
    hd = H // num_heads
    scale = 1.0 / math.sqrt(hd)
    mxu_dtype = wq_ref.dtype

    # One full-width MXU matmul per projection (bf16 operands, f32 accumulate).
    Q = jnp.dot(q_in.astype(mxu_dtype), wq_ref[...],
                preferred_element_type=jnp.float32)
    K = jnp.dot(k_in.astype(mxu_dtype), wk_ref[...],
                preferred_element_type=jnp.float32)
    V = jnp.dot(v_in.astype(mxu_dtype), wv_ref[...],
                preferred_element_type=jnp.float32)
    Qb = Q.astype(mxu_dtype)
    Kb = K.astype(mxu_dtype)
    Vb = V.astype(mxu_dtype)

    # Heads are static lane slices of the projected slab (at production hd is a
    # multiple of 128 -> pure lane-group views, no relayout).
    ctx_heads = []
    for h in range(num_heads):                     # static unroll, nh is small
        sl = slice(h * hd, (h + 1) * hd)
        qh, kh, vh = Qb[:, sl], Kb[:, sl], Vb[:, sl]

        s = jnp.einsum("qd,kd->qk", qh, kh,
                       preferred_element_type=jnp.float32) * scale
        s = jnp.where(mask, s, -1e6)               # d2l masked_softmax fill
        m = jnp.max(s, axis=-1, keepdims=True)
        p = jnp.exp(s - m)
        l = jnp.sum(p, axis=-1, keepdims=True)
        attn = p * pl.reciprocal(l, approx=True)   # EUP divide (free slot)

        ctx_heads.append(jnp.dot(attn.astype(mxu_dtype), vh,
                                 preferred_element_type=jnp.float32))

    # Lane-concatenate heads -> (Nq, H), then ONE full (H,H) output projection.
    ctx = jnp.concatenate(ctx_heads, axis=-1)
    return jnp.dot(ctx.astype(mxu_dtype), wo_ref[...],
                   preferred_element_type=jnp.float32)


# ------------------------- the Pallas kernel -------------------------

def decoder_block_kernel(num_heads,
                         enc_valid_ref,                  # SMEM (B,) int32
                         x_ref, enc_ref,                 # (S,H), (Se,H)
                         wq1_ref, wk1_ref, wv1_ref, wo1_ref, g1_ref, be1_ref,
                         wq2_ref, wk2_ref, wv2_ref, wo2_ref, g2_ref, be2_ref,
                         w1_ref, bf1_ref, w2_ref, bf2_ref, g3_ref, be3_ref,
                         out_ref):
    b = pl.program_id(0)

    X = x_ref[...].astype(jnp.float32)       # (S, H)  residual stream in f32
    E = enc_ref[...].astype(jnp.float32)     # (Se, H)
    S = X.shape[0]
    Se = E.shape[0]

    # ---- masked self-attention (causal == dec_valid_lens = arange(1,S+1)) --
    row = lax.broadcasted_iota(jnp.int32, (S, S), 0)
    col = lax.broadcasted_iota(jnp.int32, (S, S), 1)
    causal = col <= row                                       # (S, S)

    X2 = _mha(X, X, X, wq1_ref, wk1_ref, wv1_ref, wo1_ref, causal, num_heads)
    Y = _layernorm(X + X2, g1_ref[...], be1_ref[...])         # addnorm1 (dropout=id)

    # ---- encoder-decoder cross attention with enc_valid_lens[b] ------------
    # NOTE: enc_valid_lens[b] == 0 yields a uniform softmax over all keys,
    # matching the d2l reference behavior.
    kcol = lax.broadcasted_iota(jnp.int32, (1, Se), 1)
    cross = kcol < enc_valid_ref[b]                           # (1, Se) broadcast

    Y2 = _mha(Y, E, E, wq2_ref, wk2_ref, wv2_ref, wo2_ref, cross, num_heads)
    Z = _layernorm(Y + Y2, g2_ref[...], be2_ref[...])         # addnorm2

    # ---- position-wise FFN (bf16 operands, f32 accumulate) -----------------
    Hf = jnp.maximum(
        jnp.dot(Z.astype(w1_ref.dtype), w1_ref[...],
                preferred_element_type=jnp.float32) + bf1_ref[...],
        0.0)
    Fo = jnp.dot(Hf.astype(w2_ref.dtype), w2_ref[...],
                 preferred_element_type=jnp.float32) + bf2_ref[...]

    out_ref[...] = _layernorm(Z + Fo, g3_ref[...],
                              be3_ref[...]).astype(out_ref.dtype)   # addnorm3


# ------------------------- wrapper -------------------------

def decoder_block(X, enc_outputs, enc_valid_lens, params, num_heads,
                  weight_dtype=jnp.bfloat16):
    B, S, H = X.shape
    _, Se, _ = enc_outputs.shape
    F = params["w1"].shape[1]
    assert H % num_heads == 0

    wd = weight_dtype
    f32 = jnp.float32
    weights = [
        params["wq1"].astype(wd), params["wk1"].astype(wd),
        params["wv1"].astype(wd), params["wo1"].astype(wd),
        params["g1"].astype(f32), params["be1"].astype(f32),
        params["wq2"].astype(wd), params["wk2"].astype(wd),
        params["wv2"].astype(wd), params["wo2"].astype(wd),
        params["g2"].astype(f32), params["be2"].astype(f32),
        params["w1"].astype(wd), params["bf1"].astype(f32),
        params["w2"].astype(wd), params["bf2"].astype(f32),
        params["g3"].astype(f32), params["be3"].astype(f32),
    ]

    def const_spec(shape):
        n = len(shape)
        # Grid-invariant weight block (index_map constant -> fetched once).
        return pl.BlockSpec(shape, lambda b, ev, _n=n: (0,) * _n)

    in_specs = [
        pl.BlockSpec((S, H), lambda b, ev: (b, 0)),      # this batch's dec rows
        pl.BlockSpec((Se, H), lambda b, ev: (b, 0)),     # this batch's enc rows
        const_spec((H, H)), const_spec((H, H)), const_spec((H, H)),
        const_spec((H, H)), const_spec((1, H)), const_spec((1, H)),   # attn1+ln1
        const_spec((H, H)), const_spec((H, H)), const_spec((H, H)),
        const_spec((H, H)), const_spec((1, H)), const_spec((1, H)),   # attn2+ln2
        const_spec((H, F)), const_spec((1, F)),
        const_spec((F, H)), const_spec((1, H)),                       # ffn
        const_spec((1, H)), const_spec((1, H)),                       # ln3
    ]

    grid_spec = pltpu.PrefetchScalarGridSpec(
        num_scalar_prefetch=1,
        grid=(B,),                              # one batch element per grid step
        in_specs=in_specs,
        out_specs=pl.BlockSpec((S, H), lambda b, ev: (b, 0)),
    )

    kernel = functools.partial(decoder_block_kernel, num_heads)

    out2d = pl.pallas_call(
        kernel,
        out_shape=jax.ShapeDtypeStruct((B * S, H), jnp.float32),
        grid_spec=grid_spec,
        compiler_params=pltpu.CompilerParams(
            dimension_semantics=("parallel",),          # shard batch across TCs
            vmem_limit_bytes=32 * 1024 * 1024),
    )(enc_valid_lens.astype(jnp.int32),
      X.reshape(B * S, H),
      enc_outputs.reshape(B * Se, H),
      *weights)

    return out2d.reshape(B, S, H)


# ------------------------- pure-JAX reference -------------------------

def _ref_mha(qi, ki, vi, wq, wk, wv, wo, valid, num_heads):
    B, Sq, H = qi.shape
    Sk = ki.shape[1]
    hd = H // num_heads
    Q = (qi @ wq).reshape(B, Sq, num_heads, hd)
    K = (ki @ wk).reshape(B, Sk, num_heads, hd)
    V = (vi @ wv).reshape(B, Sk, num_heads, hd)
    scores = jnp.einsum("bqhd,bkhd->bhqk", Q, K) / math.sqrt(hd)
    kidx = jnp.arange(Sk)[None, None, None, :]
    mask = kidx < valid[:, None, :, None]
    scores = jnp.where(mask, scores, -1e6)
    attn = jax.nn.softmax(scores, axis=-1)
    out = jnp.einsum("bhqk,bkhd->bqhd", attn, V).reshape(B, Sq, H)
    return out @ wo


def _ref_ln(x, g, b, eps=1e-5):
    mean = jnp.mean(x, axis=-1, keepdims=True)
    var = jnp.mean((x - mean) ** 2, axis=-1, keepdims=True)
    return (x - mean) / jnp.sqrt(var + eps) * g + b


def ref_decoder_block(X, enc, enc_valid_lens, p, num_heads):
    B, S, H = X.shape
    dec_valid = jnp.broadcast_to(jnp.arange(1, S + 1)[None, :], (B, S))
    X2 = _ref_mha(X, X, X, p["wq1"], p["wk1"], p["wv1"], p["wo1"],
                  dec_valid, num_heads)
    Y = _ref_ln(X + X2, p["g1"][0], p["be1"][0])
    enc_valid = jnp.broadcast_to(enc_valid_lens[:, None], (B, S))
    Y2 = _ref_mha(Y, enc, enc, p["wq2"], p["wk2"], p["wv2"], p["wo2"],
                  enc_valid, num_heads)
    Z = _ref_ln(Y + Y2, p["g2"][0], p["be2"][0])
    Hf = jax.nn.relu(Z @ p["w1"] + p["bf1"][0])
    Fo = Hf @ p["w2"] + p["bf2"][0]
    return _ref_ln(Z + Fo, p["g3"][0], p["be3"][0])


# ------------------------- main -------------------------

if __name__ == "__main__":
    B, S, Se = 2, 8, 8
    H, F, num_heads = 32, 64, 4

    key = jax.random.PRNGKey(0)
    keys = jax.random.split(key, 16)

    def w(k, shape, scale=0.1):
        return (scale * jax.random.normal(k, shape)).astype(jnp.float32)

    params = {
        "wq1": w(keys[0], (H, H)), "wk1": w(keys[1], (H, H)),
        "wv1": w(keys[2], (H, H)), "wo1": w(keys[3], (H, H)),
        "g1": jnp.ones((1, H), jnp.float32), "be1": jnp.zeros((1, H), jnp.float32),
        "wq2": w(keys[4], (H, H)), "wk2": w(keys[5], (H, H)),
        "wv2": w(keys[6], (H, H)), "wo2": w(keys[7], (H, H)),
        "g2": jnp.ones((1, H), jnp.float32), "be2": jnp.zeros((1, H), jnp.float32),
        "w1": w(keys[8], (H, F)), "bf1": w(keys[9], (1, F), 0.01),
        "w2": w(keys[10], (F, H)), "bf2": w(keys[11], (1, H), 0.01),
        "g3": jnp.ones((1, H), jnp.float32), "be3": jnp.zeros((1, H), jnp.float32),
    }

    X = w(keys[12], (B, S, H), 1.0)
    enc_outputs = w(keys[13], (B, Se, H), 1.0)
    enc_valid_lens = jnp.array([5, 8], dtype=jnp.int32)

    out = decoder_block(X, enc_outputs, enc_valid_lens, params, num_heads)
    out = jax.block_until_ready(out)

    ref = ref_decoder_block(X, enc_outputs, enc_valid_lens, params, num_heads)
    # Tolerance accounts for bf16 matmul operands (f32 accumulation) and the
    # approx reciprocal in the softmax normalization.
    np.testing.assert_allclose(np.asarray(out), np.asarray(ref),
                               atol=2e-2, rtol=2e-2)

    print("KERNEL_OK")
</pallas_src>

<mosaic_0001>
module attributes {stable_mosaic.version = 11 : i64} {
  func.func @decoder_block_kernel(%arg0: i32, %arg1: memref<2xi32, #tpu.memory_space<smem>>, %arg2: memref<8x32xf32, #tpu.memory_space<vmem>>, %arg3: memref<8x32xf32, #tpu.memory_space<vmem>>, %arg4: memref<32x32xbf16, #tpu.memory_space<vmem>>, %arg5: memref<32x32xbf16, #tpu.memory_space<vmem>>, %arg6: memref<32x32xbf16, #tpu.memory_space<vmem>>, %arg7: memref<32x32xbf16, #tpu.memory_space<vmem>>, %arg8: memref<1x32xf32, #tpu.memory_space<vmem>>, %arg9: memref<1x32xf32, #tpu.memory_space<vmem>>, %arg10: memref<32x32xbf16, #tpu.memory_space<vmem>>, %arg11: memref<32x32xbf16, #tpu.memory_space<vmem>>, %arg12: memref<32x32xbf16, #tpu.memory_space<vmem>>, %arg13: memref<32x32xbf16, #tpu.memory_space<vmem>>, %arg14: memref<1x32xf32, #tpu.memory_space<vmem>>, %arg15: memref<1x32xf32, #tpu.memory_space<vmem>>, %arg16: memref<32x64xbf16, #tpu.memory_space<vmem>>, %arg17: memref<1x64xf32, #tpu.memory_space<vmem>>, %arg18: memref<64x32xbf16, #tpu.memory_space<vmem>>, %arg19: memref<1x32xf32, #tpu.memory_space<vmem>>, %arg20: memref<1x32xf32, #tpu.memory_space<vmem>>, %arg21: memref<1x32xf32, #tpu.memory_space<vmem>>, %arg22: memref<8x32xf32, #tpu.memory_space<vmem>>) attributes {dimension_semantics = [#tpu.dimension_semantics<parallel>], iteration_bounds = array<i64: 2>, scalar_prefetch = 1 : i64, scratch_operands = 0 : i64, tpu.core_type = #tpu.core_type<tc>, window_params = [{transform_indices = @transform_0, window_bounds = array<i64: 8, 32>}, {transform_indices = @transform_1, window_bounds = array<i64: 8, 32>}, {pipeline_mode = #tpu.pipeline_mode<synchronous>, transform_indices = @transform_2, window_bounds = array<i64: 32, 32>}, {pipeline_mode = #tpu.pipeline_mode<synchronous>, transform_indices = @transform_3, window_bounds = array<i64: 32, 32>}, {pipeline_mode = #tpu.pipeline_mode<synchronous>, transform_indices = @transform_4, window_bounds = array<i64: 32, 32>}, {pipeline_mode = #tpu.pipeline_mode<synchronous>, transform_indices = @transform_5, window_bounds = array<i64: 32, 32>}, {pipeline_mode = #tpu.pipeline_mode<synchronous>, transform_indices = @transform_6, window_bounds = array<i64: 1, 32>}, {pipeline_mode = #tpu.pipeline_mode<synchronous>, transform_indices = @transform_7, window_bounds = array<i64: 1, 32>}, {pipeline_mode = #tpu.pipeline_mode<synchronous>, transform_indices = @transform_8, window_bounds = array<i64: 32, 32>}, {pipeline_mode = #tpu.pipeline_mode<synchronous>, transform_indices = @transform_9, window_bounds = array<i64: 32, 32>}, {pipeline_mode = #tpu.pipeline_mode<synchronous>, transform_indices = @transform_10, window_bounds = array<i64: 32, 32>}, {pipeline_mode = #tpu.pipeline_mode<synchronous>, transform_indices = @transform_11, window_bounds = array<i64: 32, 32>}, {pipeline_mode = #tpu.pipeline_mode<synchronous>, transform_indices = @transform_12, window_bounds = array<i64: 1, 32>}, {pipeline_mode = #tpu.pipeline_mode<synchronous>, transform_indices = @transform_13, window_bounds = array<i64: 1, 32>}, {pipeline_mode = #tpu.pipeline_mode<synchronous>, transform_indices = @transform_14, window_bounds = array<i64: 32, 64>}, {pipeline_mode = #tpu.pipeline_mode<synchronous>, transform_indices = @transform_15, window_bounds = array<i64: 1, 64>}, {pipeline_mode = #tpu.pipeline_mode<synchronous>, transform_indices = @transform_16, window_bounds = array<i64: 64, 32>}, {pipeline_mode = #tpu.pipeline_mode<synchronous>, transform_indices = @transform_17, window_bounds = array<i64: 1, 32>}, {pipeline_mode = #tpu.pipeline_mode<synchronous>, transform_indices = @transform_18, window_bounds = array<i64: 1, 32>}, {pipeline_mode = #tpu.pipeline_mode<synchronous>, transform_indices = @transform_19, window_bounds = array<i64: 1, 32>}, {transform_indices = @transform_20, window_bounds = array<i64: 8, 32>}]} {
    %c0 = arith.constant 0 : index
    %c0_0 = arith.constant 0 : index
    %0 = vector.load %arg2[%c0, %c0_0] : memref<8x32xf32, #tpu.memory_space<vmem>>, vector<8x32xf32>
    %c0_1 = arith.constant 0 : index
    %c0_2 = arith.constant 0 : index
    %1 = vector.load %arg3[%c0_1, %c0_2] : memref<8x32xf32, #tpu.memory_space<vmem>>, vector<8x32xf32>
    %2 = tpu.iota {dimensions = array<i32: 0>} : vector<8x8xi32>
    %3 = tpu.iota {dimensions = array<i32: 1>} : vector<8x8xi32>
    %4 = arith.cmpi sle, %3, %2 : vector<8x8xi32>
    %5 = arith.truncf %0 : vector<8x32xf32> to vector<8x32xbf16>
    %c0_3 = arith.constant 0 : index
    %c0_4 = arith.constant 0 : index
    %6 = vector.load %arg4[%c0_3, %c0_4] : memref<32x32xbf16, #tpu.memory_space<vmem>>, vector<32x32xbf16>
    %cst = arith.constant dense<0.000000e+00> : vector<8x32xf32>
    %7 = tpu.matmul %5, %6, %cst {dimension_numbers = #tpu.dot_dimension_numbers<[1], [0], [0], [1], [0, 0, 1, 1], [], []>} : vector<8x32xbf16>, vector<32x32xbf16>, vector<8x32xf32> -> vector<8x32xf32>
    %8 = arith.truncf %0 : vector<8x32xf32> to vector<8x32xbf16>
    %c0_5 = arith.constant 0 : index
    %c0_6 = arith.constant 0 : index
    %9 = vector.load %arg5[%c0_5, %c0_6] : memref<32x32xbf16, #tpu.memory_space<vmem>>, vector<32x32xbf16>
    %cst_7 = arith.constant dense<0.000000e+00> : vector<8x32xf32>
    %10 = tpu.matmul %8, %9, %cst_7 {dimension_numbers = #tpu.dot_dimension_numbers<[1], [0], [0], [1], [0, 0, 1, 1], [], []>} : vector<8x32xbf16>, vector<32x32xbf16>, vector<8x32xf32> -> vector<8x32xf32>
    %11 = arith.truncf %0 : vector<8x32xf32> to vector<8x32xbf16>
    %c0_8 = arith.constant 0 : index
    %c0_9 = arith.constant 0 : index
    %12 = vector.load %arg6[%c0_8, %c0_9] : memref<32x32xbf16, #tpu.memory_space<vmem>>, vector<32x32xbf16>
    %cst_10 = arith.constant dense<0.000000e+00> : vector<8x32xf32>
    %13 = tpu.matmul %11, %12, %cst_10 {dimension_numbers = #tpu.dot_dimension_numbers<[1], [0], [0], [1], [0, 0, 1, 1], [], []>} : vector<8x32xbf16>, vector<32x32xbf16>, vector<8x32xf32> -> vector<8x32xf32>
    %14 = arith.truncf %7 : vector<8x32xf32> to vector<8x32xbf16>
    %15 = arith.truncf %10 : vector<8x32xf32> to vector<8x32xbf16>
    %16 = arith.truncf %13 : vector<8x32xf32> to vector<8x32xbf16>
    %17 = vector.extract_strided_slice %14 {offsets = [0, 0], sizes = [8, 8], strides = [1, 1]} : vector<8x32xbf16> to vector<8x8xbf16>
    %18 = vector.extract_strided_slice %15 {offsets = [0, 0], sizes = [8, 8], strides = [1, 1]} : vector<8x32xbf16> to vector<8x8xbf16>
    %19 = vector.extract_strided_slice %16 {offsets = [0, 0], sizes = [8, 8], strides = [1, 1]} : vector<8x32xbf16> to vector<8x8xbf16>
    "tpu.trace_start"() <{level = 10 : i32, message = "qd,kd->qk"}> : () -> ()
    %cst_11 = arith.constant dense<0.000000e+00> : vector<8x8xf32>
    %20 = tpu.matmul %17, %18, %cst_11 {dimension_numbers = #tpu.dot_dimension_numbers<[1], [1], [0], [0], [0, 0, 1, 0], [], []>} : vector<8x8xbf16>, vector<8x8xbf16>, vector<8x8xf32> -> vector<8x8xf32>
    "tpu.trace_stop"() : () -> ()
    %cst_12 = arith.constant 0.353553385 : f32
    %21 = vector.broadcast %cst_12 : f32 to vector<8x8xf32>
    %22 = arith.mulf %20, %21 : vector<8x8xf32>
    %cst_13 = arith.constant -1.000000e+06 : f32
    %23 = vector.broadcast %cst_13 : f32 to vector<8x8xf32>
    %24 = arith.select %4, %22, %23 : vector<8x8xi1>, vector<8x8xf32>
    %cst_14 = arith.constant dense<0xFF800000> : vector<8xf32>
    %25 = vector.multi_reduction <maximumf>, %24, %cst_14 [1] : vector<8x8xf32> to vector<8xf32>
    %26 = vector.shape_cast %25 : vector<8xf32> to vector<8x1xf32>
    %27 = vector.broadcast %26 : vector<8x1xf32> to vector<8x8xf32>
    %28 = arith.subf %24, %27 : vector<8x8xf32>
    %29 = math.exp %28 : vector<8x8xf32>
    %cst_15 = arith.constant dense<0.000000e+00> : vector<8xf32>
    %30 = vector.multi_reduction <add>, %29, %cst_15 [1] : vector<8x8xf32> to vector<8xf32>
    %31 = vector.shape_cast %30 : vector<8xf32> to vector<8x1xf32>
    %32 = tpu.reciprocal %31 {approx = true} : vector<8x1xf32> -> vector<8x1xf32>
    %33 = vector.broadcast %32 : vector<8x1xf32> to vector<8x8xf32>
    %34 = arith.mulf %29, %33 : vector<8x8xf32>
    %35 = arith.truncf %34 : vector<8x8xf32> to vector<8x8xbf16>
    %cst_16 = arith.constant dense<0.000000e+00> : vector<8x8xf32>
    %36 = tpu.matmul %35, %19, %cst_16 {dimension_numbers = #tpu.dot_dimension_numbers<[1], [0], [0], [1], [0, 0, 1, 1], [], []>} : vector<8x8xbf16>, vector<8x8xbf16>, vector<8x8xf32> -> vector<8x8xf32>
    %37 = vector.extract_strided_slice %14 {offsets = [0, 8], sizes = [8, 8], strides = [1, 1]} : vector<8x32xbf16> to vector<8x8xbf16>
    %38 = vector.extract_strided_slice %15 {offsets = [0, 8], sizes = [8, 8], strides = [1, 1]} : vector<8x32xbf16> to vector<8x8xbf16>
    %39 = vector.extract_strided_slice %16 {offsets = [0, 8], sizes = [8, 8], strides = [1, 1]} : vector<8x32xbf16> to vector<8x8xbf16>
    "tpu.trace_start"() <{level = 10 : i32, message = "qd,kd->qk"}> : () -> ()
    %cst_17 = arith.constant dense<0.000000e+00> : vector<8x8xf32>
    %40 = tpu.matmul %37, %38, %cst_17 {dimension_numbers = #tpu.dot_dimension_numbers<[1], [1], [0], [0], [0, 0, 1, 0], [], []>} : vector<8x8xbf16>, vector<8x8xbf16>, vector<8x8xf32> -> vector<8x8xf32>
    "tpu.trace_stop"() : () -> ()
    %cst_18 = arith.constant 0.353553385 : f32
    %41 = vector.broadcast %cst_18 : f32 to vector<8x8xf32>
    %42 = arith.mulf %40, %41 : vector<8x8xf32>
    %cst_19 = arith.constant -1.000000e+06 : f32
    %43 = vector.broadcast %cst_19 : f32 to vector<8x8xf32>
    %44 = arith.select %4, %42, %43 : vector<8x8xi1>, vector<8x8xf32>
    %cst_20 = arith.constant dense<0xFF800000> : vector<8xf32>
    %45 = vector.multi_reduction <maximumf>, %44, %cst_20 [1] : vector<8x8xf32> to vector<8xf32>
    %46 = vector.shape_cast %45 : vector<8xf32> to vector<8x1xf32>
    %47 = vector.broadcast %46 : vector<8x1xf32> to vector<8x8xf32>
    %48 = arith.subf %44, %47 : vector<8x8xf32>
    %49 = math.exp %48 : vector<8x8xf32>
    %cst_21 = arith.constant dense<0.000000e+00> : vector<8xf32>
    %50 = vector.multi_reduction <add>, %49, %cst_21 [1] : vector<8x8xf32> to vector<8xf32>
    %51 = vector.shape_cast %50 : vector<8xf32> to vector<8x1xf32>
    %52 = tpu.reciprocal %51 {approx = true} : vector<8x1xf32> -> vector<8x1xf32>
    %53 = vector.broadcast %52 : vector<8x1xf32> to vector<8x8xf32>
    %54 = arith.mulf %49, %53 : vector<8x8xf32>
    %55 = arith.truncf %54 : vector<8x8xf32> to vector<8x8xbf16>
    %cst_22 = arith.constant dense<0.000000e+00> : vector<8x8xf32>
    %56 = tpu.matmul %55, %39, %cst_22 {dimension_numbers = #tpu.dot_dimension_numbers<[1], [0], [0], [1], [0, 0, 1, 1], [], []>} : vector<8x8xbf16>, vector<8x8xbf16>, vector<8x8xf32> -> vector<8x8xf32>
    %57 = vector.extract_strided_slice %14 {offsets = [0, 16], sizes = [8, 8], strides = [1, 1]} : vector<8x32xbf16> to vector<8x8xbf16>
    %58 = vector.extract_strided_slice %15 {offsets = [0, 16], sizes = [8, 8], strides = [1, 1]} : vector<8x32xbf16> to vector<8x8xbf16>
    %59 = vector.extract_strided_slice %16 {offsets = [0, 16], sizes = [8, 8], strides = [1, 1]} : vector<8x32xbf16> to vector<8x8xbf16>
    "tpu.trace_start"() <{level = 10 : i32, message = "qd,kd->qk"}> : () -> ()
    %cst_23 = arith.constant dense<0.000000e+00> : vector<8x8xf32>
    %60 = tpu.matmul %57, %58, %cst_23 {dimension_numbers = #tpu.dot_dimension_numbers<[1], [1], [0], [0], [0, 0, 1, 0], [], []>} : vector<8x8xbf16>, vector<8x8xbf16>, vector<8x8xf32> -> vector<8x8xf32>
    "tpu.trace_stop"() : () -> ()
    %cst_24 = arith.constant 0.353553385 : f32
    %61 = vector.broadcast %cst_24 : f32 to vector<8x8xf32>
    %62 = arith.mulf %60, %61 : vector<8x8xf32>
    %cst_25 = arith.constant -1.000000e+06 : f32
    %63 = vector.broadcast %cst_25 : f32 to vector<8x8xf32>
    %64 = arith.select %4, %62, %63 : vector<8x8xi1>, vector<8x8xf32>
    %cst_26 = arith.constant dense<0xFF800000> : vector<8xf32>
    %65 = vector.multi_reduction <maximumf>, %64, %cst_26 [1] : vector<8x8xf32> to vector<8xf32>
    %66 = vector.shape_cast %65 : vector<8xf32> to vector<8x1xf32>
    %67 = vector.broadcast %66 : vector<8x1xf32> to vector<8x8xf32>
    %68 = arith.subf %64, %67 : vector<8x8xf32>
    %69 = math.exp %68 : vector<8x8xf32>
    %cst_27 = arith.constant dense<0.000000e+00> : vector<8xf32>
    %70 = vector.multi_reduction <add>, %69, %cst_27 [1] : vector<8x8xf32> to vector<8xf32>
    %71 = vector.shape_cast %70 : vector<8xf32> to vector<8x1xf32>
    %72 = tpu.reciprocal %71 {approx = true} : vector<8x1xf32> -> vector<8x1xf32>
    %73 = vector.broadcast %72 : vector<8x1xf32> to vector<8x8xf32>
    %74 = arith.mulf %69, %73 : vector<8x8xf32>
    %75 = arith.truncf %74 : vector<8x8xf32> to vector<8x8xbf16>
    %cst_28 = arith.constant dense<0.000000e+00> : vector<8x8xf32>
    %76 = tpu.matmul %75, %59, %cst_28 {dimension_numbers = #tpu.dot_dimension_numbers<[1], [0], [0], [1], [0, 0, 1, 1], [], []>} : vector<8x8xbf16>, vector<8x8xbf16>, vector<8x8xf32> -> vector<8x8xf32>
    %77 = vector.extract_strided_slice %14 {offsets = [0, 24], sizes = [8, 8], strides = [1, 1]} : vector<8x32xbf16> to vector<8x8xbf16>
    %78 = vector.extract_strided_slice %15 {offsets = [0, 24], sizes = [8, 8], strides = [1, 1]} : vector<8x32xbf16> to vector<8x8xbf16>
    %79 = vector.extract_strided_slice %16 {offsets = [0, 24], sizes = [8, 8], strides = [1, 1]} : vector<8x32xbf16> to vector<8x8xbf16>
    "tpu.trace_start"() <{level = 10 : i32, message = "qd,kd->qk"}> : () -> ()
    %cst_29 = arith.constant dense<0.000000e+00> : vector<8x8xf32>
    %80 = tpu.matmul %77, %78, %cst_29 {dimension_numbers = #tpu.dot_dimension_numbers<[1], [1], [0], [0], [0, 0, 1, 0], [], []>} : vector<8x8xbf16>, vector<8x8xbf16>, vector<8x8xf32> -> vector<8x8xf32>
    "tpu.trace_stop"() : () -> ()
    %cst_30 = arith.constant 0.353553385 : f32
    %81 = vector.broadcast %cst_30 : f32 to vector<8x8xf32>
    %82 = arith.mulf %80, %81 : vector<8x8xf32>
    %cst_31 = arith.constant -1.000000e+06 : f32
    %83 = vector.broadcast %cst_31 : f32 to vector<8x8xf32>
    %84 = arith.select %4, %82, %83 : vector<8x8xi1>, vector<8x8xf32>
    %cst_32 = arith.constant dense<0xFF800000> : vector<8xf32>
    %85 = vector.multi_reduction <maximumf>, %84, %cst_32 [1] : vector<8x8xf32> to vector<8xf32>
    %86 = vector.shape_cast %85 : vector<8xf32> to vector<8x1xf32>
    %87 = vector.broadcast %86 : vector<8x1xf32> to vector<8x8xf32>
    %88 = arith.subf %84, %87 : vector<8x8xf32>
    %89 = math.exp %88 : vector<8x8xf32>
    %cst_33 = arith.constant dense<0.000000e+00> : vector<8xf32>
    %90 = vector.multi_reduction <add>, %89, %cst_33 [1] : vector<8x8xf32> to vector<8xf32>
    %91 = vector.shape_cast %90 : vector<8xf32> to vector<8x1xf32>
    %92 = tpu.reciprocal %91 {approx = true} : vector<8x1xf32> -> vector<8x1xf32>
    %93 = vector.broadcast %92 : vector<8x1xf32> to vector<8x8xf32>
    %94 = arith.mulf %89, %93 : vector<8x8xf32>
    %95 = arith.truncf %94 : vector<8x8xf32> to vector<8x8xbf16>
    %cst_34 = arith.constant dense<0.000000e+00> : vector<8x8xf32>
    %96 = tpu.matmul %95, %79, %cst_34 {dimension_numbers = #tpu.dot_dimension_numbers<[1], [0], [0], [1], [0, 0, 1, 1], [], []>} : vector<8x8xbf16>, vector<8x8xbf16>, vector<8x8xf32> -> vector<8x8xf32>
    %97 = tpu.concatenate %36, %56, %76, %96 in 1 : vector<8x8xf32>, vector<8x8xf32>, vector<8x8xf32>, vector<8x8xf32> -> vector<8x32xf32>
    %98 = arith.truncf %97 : vector<8x32xf32> to vector<8x32xbf16>
    %c0_35 = arith.constant 0 : index
    %c0_36 = arith.constant 0 : index
    %99 = vector.load %arg7[%c0_35, %c0_36] : memref<32x32xbf16, #tpu.memory_space<vmem>>, vector<32x32xbf16>
    %cst_37 = arith.constant dense<0.000000e+00> : vector<8x32xf32>
    %100 = tpu.matmul %98, %99, %cst_37 {dimension_numbers = #tpu.dot_dimension_numbers<[1], [0], [0], [1], [0, 0, 1, 1], [], []>} : vector<8x32xbf16>, vector<32x32xbf16>, vector<8x32xf32> -> vector<8x32xf32>
    %101 = arith.addf %0, %100 : vector<8x32xf32>
    %c0_38 = arith.constant 0 : index
    %c0_39 = arith.constant 0 : index
    %102 = vector.load %arg8[%c0_38, %c0_39] : memref<1x32xf32, #tpu.memory_space<vmem>>, vector<1x32xf32>
    %c0_40 = arith.constant 0 : index
    %c0_41 = arith.constant 0 : index
    %103 = vector.load %arg9[%c0_40, %c0_41] : memref<1x32xf32, #tpu.memory_space<vmem>>, vector<1x32xf32>
    %cst_42 = arith.constant dense<0.000000e+00> : vector<8xf32>
    %104 = vector.multi_reduction <add>, %101, %cst_42 [1] : vector<8x32xf32> to vector<8xf32>
    %105 = vector.shape_cast %104 : vector<8xf32> to vector<8x1xf32>
    %cst_43 = arith.constant 3.200000e+01 : f32
    %106 = vector.broadcast %cst_43 : f32 to vector<8x1xf32>
    %107 = arith.divf %105, %106 : vector<8x1xf32>
    %108 = vector.broadcast %107 : vector<8x1xf32> to vector<8x32xf32>
    %109 = arith.subf %101, %108 : vector<8x32xf32>
    %110 = arith.mulf %109, %109 : vector<8x32xf32>
    %cst_44 = arith.constant dense<0.000000e+00> : vector<8xf32>
    %111 = vector.multi_reduction <add>, %110, %cst_44 [1] : vector<8x32xf32> to vector<8xf32>
    %112 = vector.shape_cast %111 : vector<8xf32> to vector<8x1xf32>
    %cst_45 = arith.constant 3.200000e+01 : f32
    %113 = vector.broadcast %cst_45 : f32 to vector<8x1xf32>
    %114 = arith.divf %112, %113 : vector<8x1xf32>
    %115 = vector.broadcast %107 : vector<8x1xf32> to vector<8x32xf32>
    %116 = arith.subf %101, %115 : vector<8x32xf32>
    %cst_46 = arith.constant 9.99999974E-6 : f32
    %117 = vector.broadcast %cst_46 : f32 to vector<8x1xf32>
    %118 = arith.addf %114, %117 : vector<8x1xf32>
    %119 = math.rsqrt %118 : vector<8x1xf32>
    %120 = vector.broadcast %119 : vector<8x1xf32> to vector<8x32xf32>
    %121 = arith.mulf %116, %120 : vector<8x32xf32>
    %122 = vector.broadcast %102 : vector<1x32xf32> to vector<8x32xf32>
    %123 = arith.mulf %121, %122 : vector<8x32xf32>
    %124 = vector.broadcast %103 : vector<1x32xf32> to vector<8x32xf32>
    %125 = arith.addf %123, %124 : vector<8x32xf32>
    %126 = tpu.iota {dimensions = array<i32: 1>} : vector<1x8xi32>
    %127 = arith.index_cast %arg0 : i32 to index
    %128 = memref.load %arg1[%127] : memref<2xi32, #tpu.memory_space<smem>>
    %129 = vector.broadcast %128 : i32 to vector<1x8xi32>
    %130 = arith.cmpi slt, %126, %129 : vector<1x8xi32>
    %131 = arith.truncf %125 : vector<8x32xf32> to vector<8x32xbf16>
    %c0_47 = arith.constant 0 : index
    %c0_48 = arith.constant 0 : index
    %132 = vector.load %arg10[%c0_47, %c0_48] : memref<32x32xbf16, #tpu.memory_space<vmem>>, vector<32x32xbf16>
    %cst_49 = arith.constant dense<0.000000e+00> : vector<8x32xf32>
    %133 = tpu.matmul %131, %132, %cst_49 {dimension_numbers = #tpu.dot_dimension_numbers<[1], [0], [0], [1], [0, 0, 1, 1], [], []>} : vector<8x32xbf16>, vector<32x32xbf16>, vector<8x32xf32> -> vector<8x32xf32>
    %134 = arith.truncf %1 : vector<8x32xf32> to vector<8x32xbf16>
    %c0_50 = arith.constant 0 : index
    %c0_51 = arith.constant 0 : index
    %135 = vector.load %arg11[%c0_50, %c0_51] : memref<32x32xbf16, #tpu.memory_space<vmem>>, vector<32x32xbf16>
    %cst_52 = arith.constant dense<0.000000e+00> : vector<8x32xf32>
    %136 = tpu.matmul %134, %135, %cst_52 {dimension_numbers = #tpu.dot_dimension_numbers<[1], [0], [0], [1], [0, 0, 1, 1], [], []>} : vector<8x32xbf16>, vector<32x32xbf16>, vector<8x32xf32> -> vector<8x32xf32>
    %137 = arith.truncf %1 : vector<8x32xf32> to vector<8x32xbf16>
    %c0_53 = arith.constant 0 : index
    %c0_54 = arith.constant 0 : index
    %138 = vector.load %arg12[%c0_53, %c0_54] : memref<32x32xbf16, #tpu.memory_space<vmem>>, vector<32x32xbf16>
    %cst_55 = arith.constant dense<0.000000e+00> : vector<8x32xf32>
    %139 = tpu.matmul %137, %138, %cst_55 {dimension_numbers = #tpu.dot_dimension_numbers<[1], [0], [0], [1], [0, 0, 1, 1], [], []>} : vector<8x32xbf16>, vector<32x32xbf16>, vector<8x32xf32> -> vector<8x32xf32>
    %140 = arith.truncf %133 : vector<8x32xf32> to vector<8x32xbf16>
    %141 = arith.truncf %136 : vector<8x32xf32> to vector<8x32xbf16>
    %142 = arith.truncf %139 : vector<8x32xf32> to vector<8x32xbf16>
    %143 = vector.extract_strided_slice %140 {offsets = [0, 0], sizes = [8, 8], strides = [1, 1]} : vector<8x32xbf16> to vector<8x8xbf16>
    %144 = vector.extract_strided_slice %141 {offsets = [0, 0], sizes = [8, 8], strides = [1, 1]} : vector<8x32xbf16> to vector<8x8xbf16>
    %145 = vector.extract_strided_slice %142 {offsets = [0, 0], sizes = [8, 8], strides = [1, 1]} : vector<8x32xbf16> to vector<8x8xbf16>
    "tpu.trace_start"() <{level = 10 : i32, message = "qd,kd->qk"}> : () -> ()
    %cst_56 = arith.constant dense<0.000000e+00> : vector<8x8xf32>
    %146 = tpu.matmul %143, %144, %cst_56 {dimension_numbers = #tpu.dot_dimension_numbers<[1], [1], [0], [0], [0, 0, 1, 0], [], []>} : vector<8x8xbf16>, vector<8x8xbf16>, vector<8x8xf32> -> vector<8x8xf32>
    "tpu.trace_stop"() : () -> ()
    %cst_57 = arith.constant 0.353553385 : f32
    %147 = vector.broadcast %cst_57 : f32 to vector<8x8xf32>
    %148 = arith.mulf %146, %147 : vector<8x8xf32>
    %cst_58 = arith.constant -1.000000e+06 : f32
    %149 = vector.shape_cast %130 : vector<1x8xi1> to vector<1x8xi1>
    %150 = vector.broadcast %149 : vector<1x8xi1> to vector<8x8xi1>
    %151 = vector.broadcast %cst_58 : f32 to vector<8x8xf32>
    %152 = arith.select %150, %148, %151 : vector<8x8xi1>, vector<8x8xf32>
    %cst_59 = arith.constant dense<0xFF800000> : vector<8xf32>
    %153 = vector.multi_reduction <maximumf>, %152, %cst_59 [1] : vector<8x8xf32> to vector<8xf32>
    %154 = vector.shape_cast %153 : vector<8xf32> to vector<8x1xf32>
    %155 = vector.broadcast %154 : vector<8x1xf32> to vector<8x8xf32>
    %156 = arith.subf %152, %155 : vector<8x8xf32>
    %157 = math.exp %156 : vector<8x8xf32>
    %cst_60 = arith.constant dense<0.000000e+00> : vector<8xf32>
    %158 = vector.multi_reduction <add>, %157, %cst_60 [1] : vector<8x8xf32> to vector<8xf32>
    %159 = vector.shape_cast %158 : vector<8xf32> to vector<8x1xf32>
    %160 = tpu.reciprocal %159 {approx = true} : vector<8x1xf32> -> vector<8x1xf32>
    %161 = vector.broadcast %160 : vector<8x1xf32> to vector<8x8xf32>
    %162 = arith.mulf %157, %161 : vector<8x8xf32>
    %163 = arith.truncf %162 : vector<8x8xf32> to vector<8x8xbf16>
    %cst_61 = arith.constant dense<0.000000e+00> : vector<8x8xf32>
    %164 = tpu.matmul %163, %145, %cst_61 {dimension_numbers = #tpu.dot_dimension_numbers<[1], [0], [0], [1], [0, 0, 1, 1], [], []>} : vector<8x8xbf16>, vector<8x8xbf16>, vector<8x8xf32> -> vector<8x8xf32>
    %165 = vector.extract_strided_slice %140 {offsets = [0, 8], sizes = [8, 8], strides = [1, 1]} : vector<8x32xbf16> to vector<8x8xbf16>
    %166 = vector.extract_strided_slice %141 {offsets = [0, 8], sizes = [8, 8], strides = [1, 1]} : vector<8x32xbf16> to vector<8x8xbf16>
    %167 = vector.extract_strided_slice %142 {offsets = [0, 8], sizes = [8, 8], strides = [1, 1]} : vector<8x32xbf16> to vector<8x8xbf16>
    "tpu.trace_start"() <{level = 10 : i32, message = "qd,kd->qk"}> : () -> ()
    %cst_62 = arith.constant dense<0.000000e+00> : vector<8x8xf32>
    %168 = tpu.matmul %165, %166, %cst_62 {dimension_numbers = #tpu.dot_dimension_numbers<[1], [1], [0], [0], [0, 0, 1, 0], [], []>} : vector<8x8xbf16>, vector<8x8xbf16>, vector<8x8xf32> -> vector<8x8xf32>
    "tpu.trace_stop"() : () -> ()
    %cst_63 = arith.constant 0.353553385 : f32
    %169 = vector.broadcast %cst_63 : f32 to vector<8x8xf32>
    %170 = arith.mulf %168, %169 : vector<8x8xf32>
    %cst_64 = arith.constant -1.000000e+06 : f32
    %171 = vector.shape_cast %130 : vector<1x8xi1> to vector<1x8xi1>
    %172 = vector.broadcast %171 : vector<1x8xi1> to vector<8x8xi1>
    %173 = vector.broadcast %cst_64 : f32 to vector<8x8xf32>
    %174 = arith.select %172, %170, %173 : vector<8x8xi1>, vector<8x8xf32>
    %cst_65 = arith.constant dense<0xFF800000> : vector<8xf32>
    %175 = vector.multi_reduction <maximumf>, %174, %cst_65 [1] : vector<8x8xf32> to vector<8xf32>
    %176 = vector.shape_cast %175 : vector<8xf32> to vector<8x1xf32>
    %177 = vector.broadcast %176 : vector<8x1xf32> to vector<8x8xf32>
    %178 = arith.subf %174, %177 : vector<8x8xf32>
    %179 = math.exp %178 : vector<8x8xf32>
    %cst_66 = arith.constant dense<0.000000e+00> : vector<8xf32>
    %180 = vector.multi_reduction <add>, %179, %cst_66 [1] : vector<8x8xf32> to vector<8xf32>
    %181 = vector.shape_cast %180 : vector<8xf32> to vector<8x1xf32>
    %182 = tpu.reciprocal %181 {approx = true} : vector<8x1xf32> -> vector<8x1xf32>
    %183 = vector.broadcast %182 : vector<8x1xf32> to vector<8x8xf32>
    %184 = arith.mulf %179, %183 : vector<8x8xf32>
    %185 = arith.truncf %184 : vector<8x8xf32> to vector<8x8xbf16>
    %cst_67 = arith.constant dense<0.000000e+00> : vector<8x8xf32>
    %186 = tpu.matmul %185, %167, %cst_67 {dimension_numbers = #tpu.dot_dimension_numbers<[1], [0], [0], [1], [0, 0, 1, 1], [], []>} : vector<8x8xbf16>, vector<8x8xbf16>, vector<8x8xf32> -> vector<8x8xf32>
    %187 = vector.extract_strided_slice %140 {offsets = [0, 16], sizes = [8, 8], strides = [1, 1]} : vector<8x32xbf16> to vector<8x8xbf16>
    %188 = vector.extract_strided_slice %141 {offsets = [0, 16], sizes = [8, 8], strides = [1, 1]} : vector<8x32xbf16> to vector<8x8xbf16>
    %189 = vector.extract_strided_slice %142 {offsets = [0, 16], sizes = [8, 8], strides = [1, 1]} : vector<8x32xbf16> to vector<8x8xbf16>
    "tpu.trace_start"() <{level = 10 : i32, message = "qd,kd->qk"}> : () -> ()
    %cst_68 = arith.constant dense<0.000000e+00> : vector<8x8xf32>
    %190 = tpu.matmul %187, %188, %cst_68 {dimension_numbers = #tpu.dot_dimension_numbers<[1], [1], [0], [0], [0, 0, 1, 0], [], []>} : vector<8x8xbf16>, vector<8x8xbf16>, vector<8x8xf32> -> vector<8x8xf32>
    "tpu.trace_stop"() : () -> ()
    %cst_69 = arith.constant 0.353553385 : f32
    %191 = vector.broadcast %cst_69 : f32 to vector<8x8xf32>
    %192 = arith.mulf %190, %191 : vector<8x8xf32>
    %cst_70 = arith.constant -1.000000e+06 : f32
    %193 = vector.shape_cast %130 : vector<1x8xi1> to vector<1x8xi1>
    %194 = vector.broadcast %193 : vector<1x8xi1> to vector<8x8xi1>
    %195 = vector.broadcast %cst_70 : f32 to vector<8x8xf32>
    %196 = arith.select %194, %192, %195 : vector<8x8xi1>, vector<8x8xf32>
    %cst_71 = arith.constant dense<0xFF800000> : vector<8xf32>
    %197 = vector.multi_reduction <maximumf>, %196, %cst_71 [1] : vector<8x8xf32> to vector<8xf32>
    %198 = vector.shape_cast %197 : vector<8xf32> to vector<8x1xf32>
    %199 = vector.broadcast %198 : vector<8x1xf32> to vector<8x8xf32>
    %200 = arith.subf %196, %199 : vector<8x8xf32>
    %201 = math.exp %200 : vector<8x8xf32>
    %cst_72 = arith.constant dense<0.000000e+00> : vector<8xf32>
    %202 = vector.multi_reduction <add>, %201, %cst_72 [1] : vector<8x8xf32> to vector<8xf32>
    %203 = vector.shape_cast %202 : vector<8xf32> to vector<8x1xf32>
    %204 = tpu.reciprocal %203 {approx = true} : vector<8x1xf32> -> vector<8x1xf32>
    %205 = vector.broadcast %204 : vector<8x1xf32> to vector<8x8xf32>
    %206 = arith.mulf %201, %205 : vector<8x8xf32>
    %207 = arith.truncf %206 : vector<8x8xf32> to vector<8x8xbf16>
    %cst_73 = arith.constant dense<0.000000e+00> : vector<8x8xf32>
    %208 = tpu.matmul %207, %189, %cst_73 {dimension_numbers = #tpu.dot_dimension_numbers<[1], [0], [0], [1], [0, 0, 1, 1], [], []>} : vector<8x8xbf16>, vector<8x8xbf16>, vector<8x8xf32> -> vector<8x8xf32>
    %209 = vector.extract_strided_slice %140 {offsets = [0, 24], sizes = [8, 8], strides = [1, 1]} : vector<8x32xbf16> to vector<8x8xbf16>
    %210 = vector.extract_strided_slice %141 {offsets = [0, 24], sizes = [8, 8], strides = [1, 1]} : vector<8x32xbf16> to vector<8x8xbf16>
    %211 = vector.extract_strided_slice %142 {offsets = [0, 24], sizes = [8, 8], strides = [1, 1]} : vector<8x32xbf16> to vector<8x8xbf16>
    "tpu.trace_start"() <{level = 10 : i32, message = "qd,kd->qk"}> : () -> ()
    %cst_74 = arith.constant dense<0.000000e+00> : vector<8x8xf32>
    %212 = tpu.matmul %209, %210, %cst_74 {dimension_numbers = #tpu.dot_dimension_numbers<[1], [1], [0], [0], [0, 0, 1, 0], [], []>} : vector<8x8xbf16>, vector<8x8xbf16>, vector<8x8xf32> -> vector<8x8xf32>
    "tpu.trace_stop"() : () -> ()
    %cst_75 = arith.constant 0.353553385 : f32
    %213 = vector.broadcast %cst_75 : f32 to vector<8x8xf32>
    %214 = arith.mulf %212, %213 : vector<8x8xf32>
    %cst_76 = arith.constant -1.000000e+06 : f32
    %215 = vector.shape_cast %130 : vector<1x8xi1> to vector<1x8xi1>
    %216 = vector.broadcast %215 : vector<1x8xi1> to vector<8x8xi1>
    %217 = vector.broadcast %cst_76 : f32 to vector<8x8xf32>
    %218 = arith.select %216, %214, %217 : vector<8x8xi1>, vector<8x8xf32>
    %cst_77 = arith.constant dense<0xFF800000> : vector<8xf32>
    %219 = vector.multi_reduction <maximumf>, %218, %cst_77 [1] : vector<8x8xf32> to vector<8xf32>
    %220 = vector.shape_cast %219 : vector<8xf32> to vector<8x1xf32>
    %221 = vector.broadcast %220 : vector<8x1xf32> to vector<8x8xf32>
    %222 = arith.subf %218, %221 : vector<8x8xf32>
    %223 = math.exp %222 : vector<8x8xf32>
    %cst_78 = arith.constant dense<0.000000e+00> : vector<8xf32>
    %224 = vector.multi_reduction <add>, %223, %cst_78 [1] : vector<8x8xf32> to vector<8xf32>
    %225 = vector.shape_cast %224 : vector<8xf32> to vector<8x1xf32>
    %226 = tpu.reciprocal %225 {approx = true} : vector<8x1xf32> -> vector<8x1xf32>
    %227 = vector.broadcast %226 : vector<8x1xf32> to vector<8x8xf32>
    %228 = arith.mulf %223, %227 : vector<8x8xf32>
    %229 = arith.truncf %228 : vector<8x8xf32> to vector<8x8xbf16>
    %cst_79 = arith.constant dense<0.000000e+00> : vector<8x8xf32>
    %230 = tpu.matmul %229, %211, %cst_79 {dimension_numbers = #tpu.dot_dimension_numbers<[1], [0], [0], [1], [0, 0, 1, 1], [], []>} : vector<8x8xbf16>, vector<8x8xbf16>, vector<8x8xf32> -> vector<8x8xf32>
    %231 = tpu.concatenate %164, %186, %208, %230 in 1 : vector<8x8xf32>, vector<8x8xf32>, vector<8x8xf32>, vector<8x8xf32> -> vector<8x32xf32>
    %232 = arith.truncf %231 : vector<8x32xf32> to vector<8x32xbf16>
    %c0_80 = arith.constant 0 : index
    %c0_81 = arith.constant 0 : index
    %233 = vector.load %arg13[%c0_80, %c0_81] : memref<32x32xbf16, #tpu.memory_space<vmem>>, vector<32x32xbf16>
    %cst_82 = arith.constant dense<0.000000e+00> : vector<8x32xf32>
    %234 = tpu.matmul %232, %233, %cst_82 {dimension_numbers = #tpu.dot_dimension_numbers<[1], [0], [0], [1], [0, 0, 1, 1], [], []>} : vector<8x32xbf16>, vector<32x32xbf16>, vector<8x32xf32> -> vector<8x32xf32>
    %235 = arith.addf %125, %234 : vector<8x32xf32>
    %c0_83 = arith.constant 0 : index
    %c0_84 = arith.constant 0 : index
    %236 = vector.load %arg14[%c0_83, %c0_84] : memref<1x32xf32, #tpu.memory_space<vmem>>, vector<1x32xf32>
    %c0_85 = arith.constant 0 : index
    %c0_86 = arith.constant 0 : index
    %237 = vector.load %arg15[%c0_85, %c0_86] : memref<1x32xf32, #tpu.memory_space<vmem>>, vector<1x32xf32>
    %cst_87 = arith.constant dense<0.000000e+00> : vector<8xf32>
    %238 = vector.multi_reduction <add>, %235, %cst_87 [1] : vector<8x32xf32> to vector<8xf32>
    %239 = vector.shape_cast %238 : vector<8xf32> to vector<8x1xf32>
    %cst_88 = arith.constant 3.200000e+01 : f32
    %240 = vector.broadcast %cst_88 : f32 to vector<8x1xf32>
    %241 = arith.divf %239, %240 : vector<8x1xf32>
    %242 = vector.broadcast %241 : vector<8x1xf32> to vector<8x32xf32>
    %243 = arith.subf %235, %242 : vector<8x32xf32>
    %244 = arith.mulf %243, %243 : vector<8x32xf32>
    %cst_89 = arith.constant dense<0.000000e+00> : vector<8xf32>
    %245 = vector.multi_reduction <add>, %244, %cst_89 [1] : vector<8x32xf32> to vector<8xf32>
    %246 = vector.shape_cast %245 : vector<8xf32> to vector<8x1xf32>
    %cst_90 = arith.constant 3.200000e+01 : f32
    %247 = vector.broadcast %cst_90 : f32 to vector<8x1xf32>
    %248 = arith.divf %246, %247 : vector<8x1xf32>
    %249 = vector.broadcast %241 : vector<8x1xf32> to vector<8x32xf32>
    %250 = arith.subf %235, %249 : vector<8x32xf32>
    %cst_91 = arith.constant 9.99999974E-6 : f32
    %251 = vector.broadcast %cst_91 : f32 to vector<8x1xf32>
    %252 = arith.addf %248, %251 : vector<8x1xf32>
    %253 = math.rsqrt %252 : vector<8x1xf32>
    %254 = vector.broadcast %253 : vector<8x1xf32> to vector<8x32xf32>
    %255 = arith.mulf %250, %254 : vector<8x32xf32>
    %256 = vector.broadcast %236 : vector<1x32xf32> to vector<8x32xf32>
    %257 = arith.mulf %255, %256 : vector<8x32xf32>
    %258 = vector.broadcast %237 : vector<1x32xf32> to vector<8x32xf32>
    %259 = arith.addf %257, %258 : vector<8x32xf32>
    %260 = arith.truncf %259 : vector<8x32xf32> to vector<8x32xbf16>
    %c0_92 = arith.constant 0 : index
    %c0_93 = arith.constant 0 : index
    %261 = vector.load %arg16[%c0_92, %c0_93] : memref<32x64xbf16, #tpu.memory_space<vmem>>, vector<32x64xbf16>
    %cst_94 = arith.constant dense<0.000000e+00> : vector<8x64xf32>
    %262 = tpu.matmul %260, %261, %cst_94 {dimension_numbers = #tpu.dot_dimension_numbers<[1], [0], [0], [1], [0, 0, 1, 1], [], []>} : vector<8x32xbf16>, vector<32x64xbf16>, vector<8x64xf32> -> vector<8x64xf32>
    %c0_95 = arith.constant 0 : index
    %c0_96 = arith.constant 0 : index
    %263 = vector.load %arg17[%c0_95, %c0_96] : memref<1x64xf32, #tpu.memory_space<vmem>>, vector<1x64xf32>
    %264 = vector.broadcast %263 : vector<1x64xf32> to vector<8x64xf32>
    %265 = arith.addf %262, %264 : vector<8x64xf32>
    %cst_97 = arith.constant 0.000000e+00 : f32
    %266 = vector.broadcast %cst_97 : f32 to vector<8x64xf32>
    %267 = arith.maximumf %265, %266 : vector<8x64xf32>
    %268 = arith.truncf %267 : vector<8x64xf32> to vector<8x64xbf16>
    %c0_98 = arith.constant 0 : index
    %c0_99 = arith.constant 0 : index
    %269 = vector.load %arg18[%c0_98, %c0_99] : memref<64x32xbf16, #tpu.memory_space<vmem>>, vector<64x32xbf16>
    %cst_100 = arith.constant dense<0.000000e+00> : vector<8x32xf32>
    %270 = tpu.matmul %268, %269, %cst_100 {dimension_numbers = #tpu.dot_dimension_numbers<[1], [0], [0], [1], [0, 0, 1, 1], [], []>} : vector<8x64xbf16>, vector<64x32xbf16>, vector<8x32xf32> -> vector<8x32xf32>
    %c0_101 = arith.constant 0 : index
    %c0_102 = arith.constant 0 : index
    %271 = vector.load %arg19[%c0_101, %c0_102] : memref<1x32xf32, #tpu.memory_space<vmem>>, vector<1x32xf32>
    %272 = vector.broadcast %271 : vector<1x32xf32> to vector<8x32xf32>
    %273 = arith.addf %270, %272 : vector<8x32xf32>
    %274 = arith.addf %259, %273 : vector<8x32xf32>
    %c0_103 = arith.constant 0 : index
    %c0_104 = arith.constant 0 : index
    %275 = vector.load %arg20[%c0_103, %c0_104] : memref<1x32xf32, #tpu.memory_space<vmem>>, vector<1x32xf32>
    %c0_105 = arith.constant 0 : index
    %c0_106 = arith.constant 0 : index
    %276 = vector.load %arg21[%c0_105, %c0_106] : memref<1x32xf32, #tpu.memory_space<vmem>>, vector<1x32xf32>
    %cst_107 = arith.constant dense<0.000000e+00> : vector<8xf32>
    %277 = vector.multi_reduction <add>, %274, %cst_107 [1] : vector<8x32xf32> to vector<8xf32>
    %278 = vector.shape_cast %277 : vector<8xf32> to vector<8x1xf32>
    %cst_108 = arith.constant 3.200000e+01 : f32
    %279 = vector.broadcast %cst_108 : f32 to vector<8x1xf32>
    %280 = arith.divf %278, %279 : vector<8x1xf32>
    %281 = vector.broadcast %280 : vector<8x1xf32> to vector<8x32xf32>
    %282 = arith.subf %274, %281 : vector<8x32xf32>
    %283 = arith.mulf %282, %282 : vector<8x32xf32>
    %cst_109 = arith.constant dense<0.000000e+00> : vector<8xf32>
    %284 = vector.multi_reduction <add>, %283, %cst_109 [1] : vector<8x32xf32> to vector<8xf32>
    %285 = vector.shape_cast %284 : vector<8xf32> to vector<8x1xf32>
    %cst_110 = arith.constant 3.200000e+01 : f32
    %286 = vector.broadcast %cst_110 : f32 to vector<8x1xf32>
    %287 = arith.divf %285, %286 : vector<8x1xf32>
    %288 = vector.broadcast %280 : vector<8x1xf32> to vector<8x32xf32>
    %289 = arith.subf %274, %288 : vector<8x32xf32>
    %cst_111 = arith.constant 9.99999974E-6 : f32
    %290 = vector.broadcast %cst_111 : f32 to vector<8x1xf32>
    %291 = arith.addf %287, %290 : vector<8x1xf32>
    %292 = math.rsqrt %291 : vector<8x1xf32>
    %293 = vector.broadcast %292 : vector<8x1xf32> to vector<8x32xf32>
    %294 = arith.mulf %289, %293 : vector<8x32xf32>
    %295 = vector.broadcast %275 : vector<1x32xf32> to vector<8x32xf32>
    %296 = arith.mulf %294, %295 : vector<8x32xf32>
    %297 = vector.broadcast %276 : vector<1x32xf32> to vector<8x32xf32>
    %298 = arith.addf %296, %297 : vector<8x32xf32>
    %c0_112 = arith.constant 0 : index
    %c0_113 = arith.constant 0 : index
    %299 = vector.load %arg22[%c0_112, %c0_113] : memref<8x32xf32, #tpu.memory_space<vmem>>, vector<8x32xf32>
    tpu.vector_store %arg22[%c0_112, %c0_113], %298 {strides = array<i32>} : memref<8x32xf32, #tpu.memory_space<vmem>>, vector<8x32xf32>,
    return
  }
  func.func @transform_0(%arg0: i32, %arg1: memref<2xi32, #tpu.memory_space<smem>>) -> (i32, i32) {
    %c0_i32 = arith.constant 0 : i32
    %c0_i32_0 = arith.constant 0 : i32
    return %arg0, %c0_i32 : i32, i32
  }
  func.func @transform_1(%arg0: i32, %arg1: memref<2xi32, #tpu.memory_space<smem>>) -> (i32, i32) {
    %c0_i32 = arith.constant 0 : i32
    %c0_i32_0 = arith.constant 0 : i32
    return %arg0, %c0_i32 : i32, i32
  }
  func.func @transform_2(%arg0: i32, %arg1: memref<2xi32, #tpu.memory_space<smem>>) -> (i32, i32) {
    %c0_i32 = arith.constant 0 : i32
    %c0_i32_0 = arith.constant 0 : i32
    %c0_i32_1 = arith.constant 0 : i32
    return %c0_i32, %c0_i32_0 : i32, i32
  }
  func.func @transform_3(%arg0: i32, %arg1: memref<2xi32, #tpu.memory_space<smem>>) -> (i32, i32) {
    %c0_i32 = arith.constant 0 : i32
    %c0_i32_0 = arith.constant 0 : i32
    %c0_i32_1 = arith.constant 0 : i32
    return %c0_i32, %c0_i32_0 : i32, i32
  }
  func.func @transform_4(%arg0: i32, %arg1: memref<2xi32, #tpu.memory_space<smem>>) -> (i32, i32) {
    %c0_i32 = arith.constant 0 : i32
    %c0_i32_0 = arith.constant 0 : i32
    %c0_i32_1 = arith.constant 0 : i32
    return %c0_i32, %c0_i32_0 : i32, i32
  }
  func.func @transform_5(%arg0: i32, %arg1: memref<2xi32, #tpu.memory_space<smem>>) -> (i32, i32) {
    %c0_i32 = arith.constant 0 : i32
    %c0_i32_0 = arith.constant 0 : i32
    %c0_i32_1 = arith.constant 0 : i32
    return %c0_i32, %c0_i32_0 : i32, i32
  }
  func.func @transform_6(%arg0: i32, %arg1: memref<2xi32, #tpu.memory_space<smem>>) -> (i32, i32) {
    %c0_i32 = arith.constant 0 : i32
    %c0_i32_0 = arith.constant 0 : i32
    %c0_i32_1 = arith.constant 0 : i32
    return %c0_i32, %c0_i32_0 : i32, i32
  }
  func.func @transform_7(%arg0: i32, %arg1: memref<2xi32, #tpu.memory_space<smem>>) -> (i32, i32) {
    %c0_i32 = arith.constant 0 : i32
    %c0_i32_0 = arith.constant 0 : i32
    %c0_i32_1 = arith.constant 0 : i32
    return %c0_i32, %c0_i32_0 : i32, i32
  }
  func.func @transform_8(%arg0: i32, %arg1: memref<2xi32, #tpu.memory_space<smem>>) -> (i32, i32) {
    %c0_i32 = arith.constant 0 : i32
    %c0_i32_0 = arith.constant 0 : i32
    %c0_i32_1 = arith.constant 0 : i32
    return %c0_i32, %c0_i32_0 : i32, i32
  }
  func.func @transform_9(%arg0: i32, %arg1: memref<2xi32, #tpu.memory_space<smem>>) -> (i32, i32) {
    %c0_i32 = arith.constant 0 : i32
    %c0_i32_0 = arith.constant 0 : i32
    %c0_i32_1 = arith.constant 0 : i32
    return %c0_i32, %c0_i32_0 : i32, i32
  }
  func.func @transform_10(%arg0: i32, %arg1: memref<2xi32, #tpu.memory_space<smem>>) -> (i32, i32) {
    %c0_i32 = arith.constant 0 : i32
    %c0_i32_0 = arith.constant 0 : i32
    %c0_i32_1 = arith.constant 0 : i32
    return %c0_i32, %c0_i32_0 : i32, i32
  }
  func.func @transform_11(%arg0: i32, %arg1: memref<2xi32, #tpu.memory_space<smem>>) -> (i32, i32) {
    %c0_i32 = arith.constant 0 : i32
    %c0_i32_0 = arith.constant 0 : i32
    %c0_i32_1 = arith.constant 0 : i32
    return %c0_i32, %c0_i32_0 : i32, i32
  }
  func.func @transform_12(%arg0: i32, %arg1: memref<2xi32, #tpu.memory_space<smem>>) -> (i32, i32) {
    %c0_i32 = arith.constant 0 : i32
    %c0_i32_0 = arith.constant 0 : i32
    %c0_i32_1 = arith.constant 0 : i32
    return %c0_i32, %c0_i32_0 : i32, i32
  }
  func.func @transform_13(%arg0: i32, %arg1: memref<2xi32, #tpu.memory_space<smem>>) -> (i32, i32) {
    %c0_i32 = arith.constant 0 : i32
    %c0_i32_0 = arith.constant 0 : i32
    %c0_i32_1 = arith.constant 0 : i32
    return %c0_i32, %c0_i32_0 : i32, i32
  }
  func.func @transform_14(%arg0: i32, %arg1: memref<2xi32, #tpu.memory_space<smem>>) -> (i32, i32) {
    %c0_i32 = arith.constant 0 : i32
    %c0_i32_0 = arith.constant 0 : i32
    %c0_i32_1 = arith.constant 0 : i32
    return %c0_i32, %c0_i32_0 : i32, i32
  }
  func.func @transform_15(%arg0: i32, %arg1: memref<2xi32, #tpu.memory_space<smem>>) -> (i32, i32) {
    %c0_i32 = arith.constant 0 : i32
    %c0_i32_0 = arith.constant 0 : i32
    %c0_i32_1 = arith.constant 0 : i32
    return %c0_i32, %c0_i32_0 : i32, i32
  }
  func.func @transform_16(%arg0: i32, %arg1: memref<2xi32, #tpu.memory_space<smem>>) -> (i32, i32) {
    %c0_i32 = arith.constant 0 : i32
    %c0_i32_0 = arith.constant 0 : i32
    %c0_i32_1 = arith.constant 0 : i32
    return %c0_i32, %c0_i32_0 : i32, i32
  }
  func.func @transform_17(%arg0: i32, %arg1: memref<2xi32, #tpu.memory_space<smem>>) -> (i32, i32) {
    %c0_i32 = arith.constant 0 : i32
    %c0_i32_0 = arith.constant 0 : i32
    %c0_i32_1 = arith.constant 0 : i32
    return %c0_i32, %c0_i32_0 : i32, i32
  }
  func.func @transform_18(%arg0: i32, %arg1: memref<2xi32, #tpu.memory_space<smem>>) -> (i32, i32) {
    %c0_i32 = arith.constant 0 : i32
    %c0_i32_0 = arith.constant 0 : i32
    %c0_i32_1 = arith.constant 0 : i32
    return %c0_i32, %c0_i32_0 : i32, i32
  }
  func.func @transform_19(%arg0: i32, %arg1: memref<2xi32, #tpu.memory_space<smem>>) -> (i32, i32) {
    %c0_i32 = arith.constant 0 : i32
    %c0_i32_0 = arith.constant 0 : i32
    %c0_i32_1 = arith.constant 0 : i32
    return %c0_i32, %c0_i32_0 : i32, i32
  }
  func.func @transform_20(%arg0: i32, %arg1: memref<2xi32, #tpu.memory_space<smem>>) -> (i32, i32) {
    %c0_i32 = arith.constant 0 : i32
    %c0_i32_0 = arith.constant 0 : i32
    return %arg0, %c0_i32 : i32, i32
  }
}

</mosaic_0001>

<llo_original>
// kernel: tpu_custom_call.1
$region0: #{tpu_custom_call.1}
  #allocation0 [shape = 'u32[]', space=smem, size = 0x4, offset = 0x4, fixed_abs, tag = 'smem constant byte address 0x4 - core index']
  #allocation1 [shape = 'u32[144,128]{1,0:T(1,128)}', space=vmem, size = 0x12000, scoped, tag = 'internal scratch']
  #allocation2 [shape = 's32[1]{0}', space=sflag, size = 0x4, scoped, tag = 'scoped memory for tpu_custom_call.1']
  #allocation3 [shape = 'u8[512]{0}', space=smem, size = 0x200, scoped, tag = 'prefetched SMEM operand 0']
  %s0 = inlined_call_operand.hbm [shape: s32[2], index: 0, kind: input, shape index: {}]
  %s1 = inlined_call_operand.vmem [shape: f32[16,32], index: 1, kind: input, shape index: {}]
  %s2 = inlined_call_operand.vmem [shape: f32[16,32], index: 2, kind: input, shape index: {}]
  %s3 = inlined_call_operand.vmem [shape: bf16[32,32], index: 3, kind: input, shape index: {}]
  %s4 = inlined_call_operand.hbm [shape: bf16[32,32], index: 4, kind: input, shape index: {}]
  %s5 = inlined_call_operand.hbm [shape: bf16[32,32], index: 5, kind: input, shape index: {}]
  %s6 = inlined_call_operand.hbm [shape: bf16[32,32], index: 6, kind: input, shape index: {}]
  %s7 = inlined_call_operand.vmem [shape: f32[1,32], index: 7, kind: input, shape index: {}]
  %s8 = inlined_call_operand.hbm [shape: f32[1,32], index: 8, kind: input, shape index: {}]
  %s9 = inlined_call_operand.vmem [shape: bf16[32,32], index: 9, kind: input, shape index: {}]
  %s10 = inlined_call_operand.hbm [shape: bf16[32,32], index: 10, kind: input, shape index: {}]
  %s11 = inlined_call_operand.hbm [shape: bf16[32,32], index: 11, kind: input, shape index: {}]
  %s12 = inlined_call_operand.hbm [shape: bf16[32,32], index: 12, kind: input, shape index: {}]
  %s13 = inlined_call_operand.hbm [shape: f32[1,32], index: 13, kind: input, shape index: {}]
  %s14 = inlined_call_operand.vmem [shape: f32[1,32], index: 14, kind: input, shape index: {}]
  %s15 = inlined_call_operand.vmem [shape: bf16[32,64], index: 15, kind: input, shape index: {}]
  %s16 = inlined_call_operand.vmem [shape: f32[1,64], index: 16, kind: input, shape index: {}]
  %s17 = inlined_call_operand.vmem [shape: bf16[64,32], index: 17, kind: input, shape index: {}]
  %s18 = inlined_call_operand.vmem [shape: f32[1,32], index: 18, kind: input, shape index: {}]
  %s19 = inlined_call_operand.vmem [shape: f32[1,32], index: 19, kind: input, shape index: {}]
  %s20 = inlined_call_operand.vmem [shape: f32[1,32], index: 20, kind: input, shape index: {}]
  %s21 = inlined_call_operand.hbm [shape: f32[16,32], index: 21, kind: output, shape index: {}]
  %s22 = sld [smem:[#allocation0]]
  $region145: #{tpu_custom_call.1} parent=0
    _
  %s24 = ssub.s32 1, %s22
  %s25 = scalar_select 0, %s24, %s22
  %27 = dma.hbm_to_smem %s0, 16, [#allocation3], [#allocation2]
  %28 = dma.done [#allocation2], 16
  %29 = sfence
  $region1: #{tpu_custom_call.1} parent=0
    #allocation4 [shape = 'u8[8192]{0}', space=vmem, size = 0x2000, scoped, tag = 'input window, operand 4, single buffered']
    #allocation5 [shape = 's32[2]{0}', space=sflag, size = 0x8, scoped, tag = 'scoped memory for tpu_custom_call.1']
    #allocation6 [shape = 's32[2]{0}', space=sflag, size = 0x8, scoped, tag = 'scoped memory for tpu_custom_call.1']
    #allocation7 [shape = 'u8[8192]{0}', space=vmem, size = 0x2000, scoped, tag = 'input window, operand 5, single buffered']
    #allocation8 [shape = 's32[1]{0}', space=sflag, size = 0x4, scoped, tag = 'scoped memory for tpu_custom_call.1']
    #allocation9 [shape = 'u8[8192]{0}', space=vmem, size = 0x2000, scoped, tag = 'input window, operand 6, single buffered']
    #allocation10 [shape = 'u8[512]{0}', space=vmem, size = 0x400, scoped, tag = 'input window, operand 8, single buffered']
    #allocation11 [shape = 's32[1]{0}', space=sflag, size = 0x4, scoped, tag = 'scoped memory for tpu_custom_call.1']
    #allocation12 [shape = 'u8[8192]{0}', space=vmem, size = 0x2000, scoped, tag = 'input window, operand 10, single buffered']
    #allocation13 [shape = 'u8[8192]{0}', space=vmem, size = 0x2000, scoped, tag = 'input window, operand 11, single buffered']
    #allocation14 [shape = 's32[1]{0}', space=sflag, size = 0x4, scoped, tag = 'scoped memory for tpu_custom_call.1']
    #allocation15 [shape = 'u8[8192]{0}', space=vmem, size = 0x2000, scoped, tag = 'input window, operand 12, single buffered']
    #allocation16 [shape = 'u8[512]{0}', space=vmem, size = 0x400, scoped, tag = 'input window, operand 13, single buffered']
    #allocation17 [shape = 's32[1]{0}', space=sflag, size = 0x4, scoped, tag = 'scoped memory for tpu_custom_call.1']
    #allocation18 [shape = 'u8[8192]{0}', space=vmem, size = 0x2000, scoped, tag = 'output window, operand 0']
    %30 = vsyncpa [#allocation5], 0
    %31 = vsyncpa [#allocation8], 0
    %32 = vsyncpa [#allocation11], 0
    %33 = vsyncpa [#allocation14], 0
    %34 = vsyncpa [#allocation17], 0
    %35 = vsyncpa [#allocation6], 0
    %s36 = scalar_lea.sflag [#allocation6], 1
    %37 = vsyncpa %s36, 0
    loop: start=0, step=1, limit=4
    $region2: #{tpu_custom_call.1} parent=1 // loop_pre_header
      _
    $region3: #{tpu_custom_call.1} parent=1 // loop_header
      %s39 = sphi 0, %s43
      %p40 = scmp.ge.s32.totalorder %s39, 4
      %s49 = sphi 0, %s51
      %s52 = sphi 0, %s49
      %s53 = sphi 0, %s52
      %s69 = sphi 0, %s53
      %s75 = sphi 0, %s77
      %s78 = sphi 0, %s75
      %s79 = sphi 0, %s78
      %s95 = sphi 0, %s79
      %s99 = sphi 0, %s99
      %s101 = sphi 0, %s99
      %s102 = sphi 0, %s101
      %s116 = sphi 0, %s102
      %s120 = sphi 0, %s120
      %s122 = sphi 0, %s120
      %s123 = sphi 0, %s122
      %s137 = sphi 0, %s123
      %s141 = sphi 0, %s141
      %s143 = sphi 0, %s141
      %s144 = sphi 0, %s143
      %s158 = sphi 0, %s144
      %s162 = sphi 0, %s162
      %s164 = sphi 0, %s162
      %s165 = sphi 0, %s164
      %s179 = sphi 0, %s165
      %s183 = sphi 0, %s183
      %s185 = sphi 0, %s183
      %s186 = sphi 0, %s185
      %s200 = sphi 0, %s186
      %s204 = sphi 0, %s204
      %s206 = sphi 0, %s204
      %s207 = sphi 0, %s206
      %s221 = sphi 0, %s207
      %s225 = sphi 0, %s225
      %s227 = sphi 0, %s225
      %s228 = sphi 0, %s227
      %s242 = sphi 0, %s228
      %s246 = sphi 0, %s246
      %s248 = sphi 0, %s246
      %s249 = sphi 0, %s248
      %s263 = sphi 0, %s249
      %s267 = sphi 0, %s267
      %s269 = sphi 0, %s267
      %s270 = sphi 0, %s269
      %s284 = sphi 0, %s270
      %s288 = sphi 0, %s288
      %s290 = sphi 0, %s288
      %s291 = sphi 0, %s290
      %s305 = sphi 0, %s291
      %s309 = sphi 0, %s309
      %s311 = sphi 0, %s309
      %s312 = sphi 0, %s311
      %s326 = sphi 0, %s312
      %s330 = sphi 0, %s330
      %s332 = sphi 0, %s330
      %s333 = sphi 0, %s332
      %s347 = sphi 0, %s333
      %s351 = sphi 0, %s351
      %s353 = sphi 0, %s351
      %s354 = sphi 0, %s353
      %s368 = sphi 0, %s354
      %s372 = sphi 0, %s372
      %s374 = sphi 0, %s372
      %s375 = sphi 0, %s374
      %s389 = sphi 0, %s375
      %s393 = sphi 0, %s393
      %s395 = sphi 0, %s393
      %s396 = sphi 0, %s395
      %s410 = sphi 0, %s396
      %s414 = sphi 0, %s414
      %s416 = sphi 0, %s414
      %s417 = sphi 0, %s416
      %s431 = sphi 0, %s417
      %s435 = sphi 0, %s435
      %s437 = sphi 0, %s435
      %s438 = sphi 0, %s437
      %s452 = sphi 0, %s438
      %s456 = sphi 0, %s456
      %s458 = sphi 0, %s456
      %s459 = sphi 0, %s458
      %s473 = sphi 0, %s459
      %s479 = sphi 0, %s481
      %s482 = sphi 0, %s479
      %s483 = sphi 0, %s482
      %s499 = sphi 0, %s483
    $region4: #{tpu_custom_call.1} parent=1 // loop_header_branch
      %42 = sbr.rel (%p40) target = $region8
    $region5: #{tpu_custom_call.1} parent=1 // loop_body
      %s44 = ssub.s32 %s39, 1
      %s45 = ssub.s32 %s39, 2
      %s46 = sadd.s32 %s39, 1
      %s47 = ssub.s32 %s39, %s46
      %p48 = scmp.eq.s32.totalorder %s47, 0
      %s50 = sadd.s32 %s49, 1
      %s51 = scalar_select %p48, %s49, %s50
      %p54 = pneg %p48
      %p55 = scmp.eq.s32.totalorder %s39, 1
      %p56 = por %p54, %p55
      %p57 = scmp.ne.s32.totalorder %s49, %s52
      %p58 = scmp.eq.s32.totalorder %s39, 0
      %p59 = por %p57, %p58
      %p60 = scmp.ne.s32.totalorder %s49, %s52
      %p61 = scmp.eq.s32.totalorder %s44, 1
      %p62 = por %p60, %p61
      %p63 = scmp.ne.s32.totalorder %s52, %s53
      %p64 = scmp.eq.s32.totalorder %s44, 0
      %p65 = por %p63, %p64
      %p66 = scmp.ne.s32.totalorder %s52, %s53
      %p67 = scmp.eq.s32.totalorder %s45, 1
      %p68 = por %p66, %p67
      %p70 = scmp.ne.s32.totalorder %s53, %s69
      %p71 = scmp.eq.s32.totalorder %s45, 0
      %p72 = por %p70, %p71
      %s73 = ssub.s32 %s39, %s46
      %p74 = scmp.eq.s32.totalorder %s73, 0
      %s76 = sadd.s32 %s75, 1
      %s77 = scalar_select %p74, %s75, %s76
      %p80 = pneg %p74
      %p81 = scmp.eq.s32.totalorder %s39, 1
      %p82 = por %p80, %p81
      %p83 = scmp.ne.s32.totalorder %s75, %s78
      %p84 = scmp.eq.s32.totalorder %s39, 0
      %p85 = por %p83, %p84
      %p86 = scmp.ne.s32.totalorder %s75, %s78
      %p87 = scmp.eq.s32.totalorder %s44, 1
      %p88 = por %p86, %p87
      %p89 = scmp.ne.s32.totalorder %s78, %s79
      %p90 = scmp.eq.s32.totalorder %s44, 0
      %p91 = por %p89, %p90
      %p92 = scmp.ne.s32.totalorder %s78, %s79
      %p93 = scmp.eq.s32.totalorder %s45, 1
      %p94 = por %p92, %p93
      %p96 = scmp.ne.s32.totalorder %s79, %s95
      %p97 = scmp.eq.s32.totalorder %s45, 0
      %p98 = por %p96, %p97
      %s100 = sadd.s32 %s99, 1
      %p103 = scmp.eq.s32.totalorder %s39, 1
      %p104 = scmp.ne.s32.totalorder %s99, %s101
      %p105 = scmp.eq.s32.totalorder %s39, 0
      %p106 = por %p104, %p105
      %p107 = scmp.ne.s32.totalorder %s99, %s101
      %p108 = scmp.eq.s32.totalorder %s44, 1
      %p109 = por %p107, %p108
      %p110 = scmp.ne.s32.totalorder %s101, %s102
      %p111 = scmp.eq.s32.totalorder %s44, 0
      %p112 = por %p110, %p111
      %p113 = scmp.ne.s32.totalorder %s101, %s102
      %p114 = scmp.eq.s32.totalorder %s45, 1
      %p115 = por %p113, %p114
      %p117 = scmp.ne.s32.totalorder %s102, %s116
      %p118 = scmp.eq.s32.totalorder %s45, 0
      %p119 = por %p117, %p118
      %s121 = sadd.s32 %s120, 1
      %p124 = scmp.eq.s32.totalorder %s39, 1
      %p125 = scmp.ne.s32.totalorder %s120, %s122
      %p126 = scmp.eq.s32.totalorder %s39, 0
      %p127 = por %p125, %p126
      %p128 = scmp.ne.s32.totalorder %s120, %s122
      %p129 = scmp.eq.s32.totalorder %s44, 1
      %p130 = por %p128, %p129
      %p131 = scmp.ne.s32.totalorder %s122, %s123
      %p132 = scmp.eq.s32.totalorder %s44, 0
      %p133 = por %p131, %p132
      %p134 = scmp.ne.s32.totalorder %s122, %s123
      %p135 = scmp.eq.s32.totalorder %s45, 1
      %p136 = por %p134, %p135
      %p138 = scmp.ne.s32.totalorder %s123, %s137
      %p139 = scmp.eq.s32.totalorder %s45, 0
      %p140 = por %p138, %p139
      %s142 = sadd.s32 %s141, 1
      %p145 = scmp.eq.s32.totalorder %s39, 1
      %p146 = scmp.ne.s32.totalorder %s141, %s143
      %p147 = scmp.eq.s32.totalorder %s39, 0
      %p148 = por %p146, %p147
      %p149 = scmp.ne.s32.totalorder %s141, %s143
      %p150 = scmp.eq.s32.totalorder %s44, 1
      %p151 = por %p149, %p150
      %p152 = scmp.ne.s32.totalorder %s143, %s144
      %p153 = scmp.eq.s32.totalorder %s44, 0
      %p154 = por %p152, %p153
      %p155 = scmp.ne.s32.totalorder %s143, %s144
      %p156 = scmp.eq.s32.totalorder %s45, 1
      %p157 = por %p155, %p156
      %p159 = scmp.ne.s32.totalorder %s144, %s158
      %p160 = scmp.eq.s32.totalorder %s45, 0
      %p161 = por %p159, %p160
      %s163 = sadd.s32 %s162, 1
      %p166 = scmp.eq.s32.totalorder %s39, 1
      %p167 = scmp.ne.s32.totalorder %s162, %s164
      %p168 = scmp.eq.s32.totalorder %s39, 0
      %p169 = por %p167, %p168
      %p170 = scmp.ne.s32.totalorder %s162, %s164
      %p171 = scmp.eq.s32.totalorder %s44, 1
      %p172 = por %p170, %p171
      %p173 = scmp.ne.s32.totalorder %s164, %s165
      %p174 = scmp.eq.s32.totalorder %s44, 0
      %p175 = por %p173, %p174
      %p176 = scmp.ne.s32.totalorder %s164, %s165
      %p177 = scmp.eq.s32.totalorder %s45, 1
      %p178 = por %p176, %p177
      %p180 = scmp.ne.s32.totalorder %s165, %s179
      %p181 = scmp.eq.s32.totalorder %s45, 0
      %p182 = por %p180, %p181
      %s184 = sadd.s32 %s183, 1
      %p187 = scmp.eq.s32.totalorder %s39, 1
      %p188 = scmp.ne.s32.totalorder %s183, %s185
      %p189 = scmp.eq.s32.totalorder %s39, 0
      %p190 = por %p188, %p189
      %p191 = scmp.ne.s32.totalorder %s183, %s185
      %p192 = scmp.eq.s32.totalorder %s44, 1
      %p193 = por %p191, %p192
      %p194 = scmp.ne.s32.totalorder %s185, %s186
      %p195 = scmp.eq.s32.totalorder %s44, 0
      %p196 = por %p194, %p195
      %p197 = scmp.ne.s32.totalorder %s185, %s186
      %p198 = scmp.eq.s32.totalorder %s45, 1
      %p199 = por %p197, %p198
      %p201 = scmp.ne.s32.totalorder %s186, %s200
      %p202 = scmp.eq.s32.totalorder %s45, 0
      %p203 = por %p201, %p202
      %s205 = sadd.s32 %s204, 1
      %p208 = scmp.eq.s32.totalorder %s39, 1
      %p209 = scmp.ne.s32.totalorder %s204, %s206
      %p210 = scmp.eq.s32.totalorder %s39, 0
      %p211 = por %p209, %p210
      %p212 = scmp.ne.s32.totalorder %s204, %s206
      %p213 = scmp.eq.s32.totalorder %s44, 1
      %p214 = por %p212, %p213
      %p215 = scmp.ne.s32.totalorder %s206, %s207
      %p216 = scmp.eq.s32.totalorder %s44, 0
      %p217 = por %p215, %p216
      %p218 = scmp.ne.s32.totalorder %s206, %s207
      %p219 = scmp.eq.s32.totalorder %s45, 1
      %p220 = por %p218, %p219
      %p222 = scmp.ne.s32.totalorder %s207, %s221
      %p223 = scmp.eq.s32.totalorder %s45, 0
      %p224 = por %p222, %p223
      %s226 = sadd.s32 %s225, 1
      %p229 = scmp.eq.s32.totalorder %s39, 1
      %p230 = scmp.ne.s32.totalorder %s225, %s227
      %p231 = scmp.eq.s32.totalorder %s39, 0
      %p232 = por %p230, %p231
      %p233 = scmp.ne.s32.totalorder %s225, %s227
      %p234 = scmp.eq.s32.totalorder %s44, 1
      %p235 = por %p233, %p234
      %p236 = scmp.ne.s32.totalorder %s227, %s228
      %p237 = scmp.eq.s32.totalorder %s44, 0
      %p238 = por %p236, %p237
      %p239 = scmp.ne.s32.totalorder %s227, %s228
      %p240 = scmp.eq.s32.totalorder %s45, 1
      %p241 = por %p239, %p240
      %p243 = scmp.ne.s32.totalorder %s228, %s242
      %p244 = scmp.eq.s32.totalorder %s45, 0
      %p245 = por %p243, %p244
      %s247 = sadd.s32 %s246, 1
      %p250 = scmp.eq.s32.totalorder %s39, 1
      %p251 = scmp.ne.s32.totalorder %s246, %s248
      %p252 = scmp.eq.s32.totalorder %s39, 0
      %p253 = por %p251, %p252
      %p254 = scmp.ne.s32.totalorder %s246, %s248
      %p255 = scmp.eq.s32.totalorder %s44, 1
      %p256 = por %p254, %p255
      %p257 = scmp.ne.s32.totalorder %s248, %s249
      %p258 = scmp.eq.s32.totalorder %s44, 0
      %p259 = por %p257, %p258
      %p260 = scmp.ne.s32.totalorder %s248, %s249
      %p261 = scmp.eq.s32.totalorder %s45, 1
      %p262 = por %p260, %p261
      %p264 = scmp.ne.s32.totalorder %s249, %s263
      %p265 = scmp.eq.s32.totalorder %s45, 0
      %p266 = por %p264, %p265
      %s268 = sadd.s32 %s267, 1
      %p271 = scmp.eq.s32.totalorder %s39, 1
      %p272 = scmp.ne.s32.totalorder %s267, %s269
      %p273 = scmp.eq.s32.totalorder %s39, 0
      %p274 = por %p272, %p273
      %p275 = scmp.ne.s32.totalorder %s267, %s269
      %p276 = scmp.eq.s32.totalorder %s44, 1
      %p277 = por %p275, %p276
      %p278 = scmp.ne.s32.totalorder %s269, %s270
      %p279 = scmp.eq.s32.totalorder %s44, 0
      %p280 = por %p278, %p279
      %p281 = scmp.ne.s32.totalorder %s269, %s270
      %p282 = scmp.eq.s32.totalorder %s45, 1
      %p283 = por %p281, %p282
      %p285 = scmp.ne.s32.totalorder %s270, %s284
      %p286 = scmp.eq.s32.totalorder %s45, 0
      %p287 = por %p285, %p286
      %s289 = sadd.s32 %s288, 1
      %p292 = scmp.eq.s32.totalorder %s39, 1
      %p293 = scmp.ne.s32.totalorder %s288, %s290
      %p294 = scmp.eq.s32.totalorder %s39, 0
      %p295 = por %p293, %p294
      %p296 = scmp.ne.s32.totalorder %s288, %s290
      %p297 = scmp.eq.s32.totalorder %s44, 1
      %p298 = por %p296, %p297
      %p299 = scmp.ne.s32.totalorder %s290, %s291
      %p300 = scmp.eq.s32.totalorder %s44, 0
      %p301 = por %p299, %p300
      %p302 = scmp.ne.s32.totalorder %s290, %s291
      %p303 = scmp.eq.s32.totalorder %s45, 1
      %p304 = por %p302, %p303
      %p306 = scmp.ne.s32.totalorder %s291, %s305
      %p307 = scmp.eq.s32.totalorder %s45, 0
      %p308 = por %p306, %p307
      %s310 = sadd.s32 %s309, 1
      %p313 = scmp.eq.s32.totalorder %s39, 1
      %p314 = scmp.ne.s32.totalorder %s309, %s311
      %p315 = scmp.eq.s32.totalorder %s39, 0
      %p316 = por %p314, %p315
      %p317 = scmp.ne.s32.totalorder %s309, %s311
      %p318 = scmp.eq.s32.totalorder %s44, 1
      %p319 = por %p317, %p318
      %p320 = scmp.ne.s32.totalorder %s311, %s312
      %p321 = scmp.eq.s32.totalorder %s44, 0
      %p322 = por %p320, %p321
      %p323 = scmp.ne.s32.totalorder %s311, %s312
      %p324 = scmp.eq.s32.totalorder %s45, 1
      %p325 = por %p323, %p324
      %p327 = scmp.ne.s32.totalorder %s312, %s326
      %p328 = scmp.eq.s32.totalorder %s45, 0
      %p329 = por %p327, %p328
      %s331 = sadd.s32 %s330, 1
      %p334 = scmp.eq.s32.totalorder %s39, 1
      %p335 = scmp.ne.s32.totalorder %s330, %s332
      %p336 = scmp.eq.s32.totalorder %s39, 0
      %p337 = por %p335, %p336
      %p338 = scmp.ne.s32.totalorder %s330, %s332
      %p339 = scmp.eq.s32.totalorder %s44, 1
      %p340 = por %p338, %p339
      %p341 = scmp.ne.s32.totalorder %s332, %s333
      %p342 = scmp.eq.s32.totalorder %s44, 0
      %p343 = por %p341, %p342
      %p344 = scmp.ne.s32.totalorder %s332, %s333
      %p345 = scmp.eq.s32.totalorder %s45, 1
      %p346 = por %p344, %p345
      %p348 = scmp.ne.s32.totalorder %s333, %s347
      %p349 = scmp.eq.s32.totalorder %s45, 0
      %p350 = por %p348, %p349
      %s352 = sadd.s32 %s351, 1
      %p355 = scmp.eq.s32.totalorder %s39, 1
      %p356 = scmp.ne.s32.totalorder %s351, %s353
      %p357 = scmp.eq.s32.totalorder %s39, 0
      %p358 = por %p356, %p357
      %p359 = scmp.ne.s32.totalorder %s351, %s353
      %p360 = scmp.eq.s32.totalorder %s44, 1
      %p361 = por %p359, %p360
      %p362 = scmp.ne.s32.totalorder %s353, %s354
      %p363 = scmp.eq.s32.totalorder %s44, 0
      %p364 = por %p362, %p363
      %p365 = scmp.ne.s32.totalorder %s353, %s354
      %p366 = scmp.eq.s32.totalorder %s45, 1
      %p367 = por %p365, %p366
      %p369 = scmp.ne.s32.totalorder %s354, %s368
      %p370 = scmp.eq.s32.totalorder %s45, 0
      %p371 = por %p369, %p370
      %s373 = sadd.s32 %s372, 1
      %p376 = scmp.eq.s32.totalorder %s39, 1
      %p377 = scmp.ne.s32.totalorder %s372, %s374
      %p378 = scmp.eq.s32.totalorder %s39, 0
      %p379 = por %p377, %p378
      %p380 = scmp.ne.s32.totalorder %s372, %s374
      %p381 = scmp.eq.s32.totalorder %s44, 1
      %p382 = por %p380, %p381
      %p383 = scmp.ne.s32.totalorder %s374, %s375
      %p384 = scmp.eq.s32.totalorder %s44, 0
      %p385 = por %p383, %p384
      %p386 = scmp.ne.s32.totalorder %s374, %s375
      %p387 = scmp.eq.s32.totalorder %s45, 1
      %p388 = por %p386, %p387
      %p390 = scmp.ne.s32.totalorder %s375, %s389
      %p391 = scmp.eq.s32.totalorder %s45, 0
      %p392 = por %p390, %p391
      %s394 = sadd.s32 %s393, 1
      %p397 = scmp.eq.s32.totalorder %s39, 1
      %p398 = scmp.ne.s32.totalorder %s393, %s395
      %p399 = scmp.eq.s32.totalorder %s39, 0
      %p400 = por %p398, %p399
      %p401 = scmp.ne.s32.totalorder %s393, %s395
      %p402 = scmp.eq.s32.totalorder %s44, 1
      %p403 = por %p401, %p402
      %p404 = scmp.ne.s32.totalorder %s395, %s396
      %p405 = scmp.eq.s32.totalorder %s44, 0
      %p406 = por %p404, %p405
      %p407 = scmp.ne.s32.totalorder %s395, %s396
      %p408 = scmp.eq.s32.totalorder %s45, 1
      %p409 = por %p407, %p408
      %p411 = scmp.ne.s32.totalorder %s396, %s410
      %p412 = scmp.eq.s32.totalorder %s45, 0
      %p413 = por %p411, %p412
      %s415 = sadd.s32 %s414, 1
      %p418 = scmp.eq.s32.totalorder %s39, 1
      %p419 = scmp.ne.s32.totalorder %s414, %s416
      %p420 = scmp.eq.s32.totalorder %s39, 0
      %p421 = por %p419, %p420
      %p422 = scmp.ne.s32.totalorder %s414, %s416
      %p423 = scmp.eq.s32.totalorder %s44, 1
      %p424 = por %p422, %p423
      %p425 = scmp.ne.s32.totalorder %s416, %s417
      %p426 = scmp.eq.s32.totalorder %s44, 0
      %p427 = por %p425, %p426
      %p428 = scmp.ne.s32.totalorder %s416, %s417
      %p429 = scmp.eq.s32.totalorder %s45, 1
      %p430 = por %p428, %p429
      %p432 = scmp.ne.s32.totalorder %s417, %s431
      %p433 = scmp.eq.s32.totalorder %s45, 0
      %p434 = por %p432, %p433
      %s436 = sadd.s32 %s435, 1
      %p439 = scmp.eq.s32.totalorder %s39, 1
      %p440 = scmp.ne.s32.totalorder %s435, %s437
      %p441 = scmp.eq.s32.totalorder %s39, 0
      %p442 = por %p440, %p441
      %p443 = scmp.ne.s32.totalorder %s435, %s437
      %p444 = scmp.eq.s32.totalorder %s44, 1
      %p445 = por %p443, %p444
      %p446 = scmp.ne.s32.totalorder %s437, %s438
      %p447 = scmp.eq.s32.totalorder %s44, 0
      %p448 = por %p446, %p447
      %p449 = scmp.ne.s32.totalorder %s437, %s438
      %p450 = scmp.eq.s32.totalorder %s45, 1
      %p451 = por %p449, %p450
      %p453 = scmp.ne.s32.totalorder %s438, %s452
      %p454 = scmp.eq.s32.totalorder %s45, 0
      %p455 = por %p453, %p454
      %s457 = sadd.s32 %s456, 1
      %p460 = scmp.eq.s32.totalorder %s39, 1
      %p461 = scmp.ne.s32.totalorder %s456, %s458
      %p462 = scmp.eq.s32.totalorder %s39, 0
      %p463 = por %p461, %p462
      %p464 = scmp.ne.s32.totalorder %s456, %s458
      %p465 = scmp.eq.s32.totalorder %s44, 1
      %p466 = por %p464, %p465
      %p467 = scmp.ne.s32.totalorder %s458, %s459
      %p468 = scmp.eq.s32.totalorder %s44, 0
      %p469 = por %p467, %p468
      %p470 = scmp.ne.s32.totalorder %s458, %s459
      %p471 = scmp.eq.s32.totalorder %s45, 1
      %p472 = por %p470, %p471
      %p474 = scmp.ne.s32.totalorder %s459, %s473
      %p475 = scmp.eq.s32.totalorder %s45, 0
      %p476 = por %p474, %p475
      %s477 = ssub.s32 %s39, %s46
      %p478 = scmp.eq.s32.totalorder %s477, 0
      %s480 = sadd.s32 %s479, 1
      %s481 = scalar_select %p478, %s479, %s480
      %p484 = pneg %p478
      %p485 = scmp.eq.s32.totalorder %s39, 1
      %p486 = por %p484, %p485
      %p487 = scmp.ne.s32.totalorder %s479, %s482
      %p488 = scmp.eq.s32.totalorder %s39, 0
      %p489 = por %p487, %p488
      %p490 = scmp.ne.s32.totalorder %s479, %s482
      %p491 = scmp.eq.s32.totalorder %s44, 1
      %p492 = por %p490, %p491
      %p493 = scmp.ne.s32.totalorder %s482, %s483
      %p494 = scmp.eq.s32.totalorder %s44, 0
      %p495 = por %p493, %p494
      %p496 = scmp.ne.s32.totalorder %s482, %s483
      %p497 = scmp.eq.s32.totalorder %s45, 1
      %p498 = por %p496, %p497
      %p500 = scmp.ne.s32.totalorder %s483, %s499
      %p501 = scmp.eq.s32.totalorder %s45, 0
      %p502 = por %p500, %p501
      %p503 = scmp.le.s32.totalorder 1, %s39
      %p504 = scmp.lt.s32.totalorder %s39, 3
      %p505 = pnand %p503, %p504
      %p506 = pneg %p505
      // Predicated region
      $region9: #{tpu_custom_call.1} parent=5 // pred_check
        _
      $region10: #{tpu_custom_call.1} parent=5 // pred_check_branch
        %508 = sbr.rel (%p505) target = $region12
      $region11: #{tpu_custom_call.1} parent=5 // pred_region
        %s509 = ssub.s32 %s39, 1
        // Predicated region
        $region13: #{tpu_custom_call.1} parent=11 // pred_check
          %p510 = pneg %p112
        $region14: #{tpu_custom_call.1} parent=11 // pred_check_branch
          %512 = sbr.rel (%p510) target = $region16
        $region15: #{tpu_custom_call.1} parent=11 // pred_region
          _
        $region16: #{tpu_custom_call.1} parent=11 // pred_fallthru
          _
        // Predicated region
        $region17: #{tpu_custom_call.1} parent=11 // pred_check
          %p513 = pneg %p133
        $region18: #{tpu_custom_call.1} parent=11 // pred_check_branch
          %515 = sbr.rel (%p513) target = $region20
        $region19: #{tpu_custom_call.1} parent=11 // pred_region
          %s517 = ssub.s32 256, 256
          %518 = vsyncadd [#allocation5], %s517
          %s519 = sshll.u32 [#allocation4], 4
          %s520 = int_to_ptr.vmem [resolvable:$true] %s519
          %525 = dma.hbm_to_vmem [thread:$0]  %s4, 256, %s520, [#allocation5], 64, 64, 4
        $region20: #{tpu_custom_call.1} parent=11 // pred_fallthru
          _
        // Predicated region
        $region21: #{tpu_custom_call.1} parent=11 // pred_check
          %p526 = pneg %p154
        $region22: #{tpu_custom_call.1} parent=11 // pred_check_branch
          %528 = sbr.rel (%p526) target = $region24
        $region23: #{tpu_custom_call.1} parent=11 // pred_region
          %s530 = ssub.s32 256, 256
          %531 = vsyncadd [#allocation8], %s530
          %s532 = sshll.u32 [#allocation7], 4
          %s533 = int_to_ptr.vmem [resolvable:$true] %s532
          %538 = dma.hbm_to_vmem [thread:$0]  %s5, 256, %s533, [#allocation8], 64, 64, 4
        $region24: #{tpu_custom_call.1} parent=11 // pred_fallthru
          _
        // Predicated region
        $region25: #{tpu_custom_call.1} parent=11 // pred_check
          %p539 = pneg %p175
        $region26: #{tpu_custom_call.1} parent=11 // pred_check_branch
          %541 = sbr.rel (%p539) target = $region28
        $region27: #{tpu_custom_call.1} parent=11 // pred_region
          %s543 = ssub.s32 256, 256
          %544 = vsyncadd [#allocation8], %s543
          %s545 = sshll.u32 [#allocation9], 4
          %s546 = int_to_ptr.vmem [resolvable:$true] %s545
          %551 = dma.hbm_to_vmem [thread:$0]  %s6, 256, %s546, [#allocation8], 64, 64, 4
        $region28: #{tpu_custom_call.1} parent=11 // pred_fallthru
          _
        // Predicated region
        $region29: #{tpu_custom_call.1} parent=11 // pred_check
          %p552 = pneg %p196
        $region30: #{tpu_custom_call.1} parent=11 // pred_check_branch
          %554 = sbr.rel (%p552) target = $region32
        $region31: #{tpu_custom_call.1} parent=11 // pred_region
          _
        $region32: #{tpu_custom_call.1} parent=11 // pred_fallthru
          _
        // Predicated region
        $region33: #{tpu_custom_call.1} parent=11 // pred_check
          %p555 = pneg %p217
        $region34: #{tpu_custom_call.1} parent=11 // pred_check_branch
          %557 = sbr.rel (%p555) target = $region36
        $region35: #{tpu_custom_call.1} parent=11 // pred_region
          %s559 = ssub.s32 16, 16
          %560 = vsyncadd [#allocation11], %s559
          %s562 = sshll.u32 [#allocation10], 4
          %s563 = int_to_ptr.vmem [resolvable:$true] %s562
          %565 = dma.hbm_to_vmem [thread:$0]  %s8, 16, %s563, [#allocation11]
        $region36: #{tpu_custom_call.1} parent=11 // pred_fallthru
          _
        // Predicated region
        $region37: #{tpu_custom_call.1} parent=11 // pred_check
          %p566 = pneg %p238
        $region38: #{tpu_custom_call.1} parent=11 // pred_check_branch
          %568 = sbr.rel (%p566) target = $region40
        $region39: #{tpu_custom_call.1} parent=11 // pred_region
          _
        $region40: #{tpu_custom_call.1} parent=11 // pred_fallthru
          _
        // Predicated region
        $region41: #{tpu_custom_call.1} parent=11 // pred_check
          %p569 = pneg %p259
        $region42: #{tpu_custom_call.1} parent=11 // pred_check_branch
          %571 = sbr.rel (%p569) target = $region44
        $region43: #{tpu_custom_call.1} parent=11 // pred_region
          %s573 = ssub.s32 256, 256
          %574 = vsyncadd [#allocation11], %s573
          %s575 = sshll.u32 [#allocation12], 4
          %s576 = int_to_ptr.vmem [resolvable:$true] %s575
          %581 = dma.hbm_to_vmem [thread:$0]  %s10, 256, %s576, [#allocation11], 64, 64, 4
        $region44: #{tpu_custom_call.1} parent=11 // pred_fallthru
          _
        // Predicated region
        $region45: #{tpu_custom_call.1} parent=11 // pred_check
          %p582 = pneg %p280
        $region46: #{tpu_custom_call.1} parent=11 // pred_check_branch
          %584 = sbr.rel (%p582) target = $region48
        $region47: #{tpu_custom_call.1} parent=11 // pred_region
          %s586 = ssub.s32 256, 256
          %587 = vsyncadd [#allocation14], %s586
          %s588 = sshll.u32 [#allocation13], 4
          %s589 = int_to_ptr.vmem [resolvable:$true] %s588
          %594 = dma.hbm_to_vmem [thread:$0]  %s11, 256, %s589, [#allocation14], 64, 64, 4
        $region48: #{tpu_custom_call.1} parent=11 // pred_fallthru
          _
        // Predicated region
        $region49: #{tpu_custom_call.1} parent=11 // pred_check
          %p595 = pneg %p301
        $region50: #{tpu_custom_call.1} parent=11 // pred_check_branch
          %597 = sbr.rel (%p595) target = $region52
        $region51: #{tpu_custom_call.1} parent=11 // pred_region
          %s599 = ssub.s32 256, 256
          %600 = vsyncadd [#allocation14], %s599
          %s601 = sshll.u32 [#allocation15], 4
          %s602 = int_to_ptr.vmem [resolvable:$true] %s601
          %607 = dma.hbm_to_vmem [thread:$0]  %s12, 256, %s602, [#allocation14], 64, 64, 4
        $region52: #{tpu_custom_call.1} parent=11 // pred_fallthru
          _
        // Predicated region
        $region53: #{tpu_custom_call.1} parent=11 // pred_check
          %p608 = pneg %p322
        $region54: #{tpu_custom_call.1} parent=11 // pred_check_branch
          %610 = sbr.rel (%p608) target = $region56
        $region55: #{tpu_custom_call.1} parent=11 // pred_region
          %s612 = ssub.s32 16, 16
          %613 = vsyncadd [#allocation17], %s612
          %s615 = sshll.u32 [#allocation16], 4
          %s616 = int_to_ptr.vmem [resolvable:$true] %s615
          %618 = dma.hbm_to_vmem [thread:$0]  %s13, 16, %s616, [#allocation17]
        $region56: #{tpu_custom_call.1} parent=11 // pred_fallthru
          _
        // Predicated region
        $region57: #{tpu_custom_call.1} parent=11 // pred_check
          %p619 = pneg %p343
        $region58: #{tpu_custom_call.1} parent=11 // pred_check_branch
          %621 = sbr.rel (%p619) target = $region60
        $region59: #{tpu_custom_call.1} parent=11 // pred_region
          _
        $region60: #{tpu_custom_call.1} parent=11 // pred_fallthru
          _
        // Predicated region
        $region61: #{tpu_custom_call.1} parent=11 // pred_check
          %p622 = pneg %p364
        $region62: #{tpu_custom_call.1} parent=11 // pred_check_branch
          %624 = sbr.rel (%p622) target = $region64
        $region63: #{tpu_custom_call.1} parent=11 // pred_region
          _
        $region64: #{tpu_custom_call.1} parent=11 // pred_fallthru
          _
        // Predicated region
        $region65: #{tpu_custom_call.1} parent=11 // pred_check
          %p625 = pneg %p385
        $region66: #{tpu_custom_call.1} parent=11 // pred_check_branch
          %627 = sbr.rel (%p625) target = $region68
        $region67: #{tpu_custom_call.1} parent=11 // pred_region
          _
        $region68: #{tpu_custom_call.1} parent=11 // pred_fallthru
          _
        // Predicated region
        $region69: #{tpu_custom_call.1} parent=11 // pred_check
          %p628 = pneg %p406
        $region70: #{tpu_custom_call.1} parent=11 // pred_check_branch
          %630 = sbr.rel (%p628) target = $region72
        $region71: #{tpu_custom_call.1} parent=11 // pred_region
          _
        $region72: #{tpu_custom_call.1} parent=11 // pred_fallthru
          _
        // Predicated region
        $region73: #{tpu_custom_call.1} parent=11 // pred_check
          %p631 = pneg %p427
        $region74: #{tpu_custom_call.1} parent=11 // pred_check_branch
          %633 = sbr.rel (%p631) target = $region76
        $region75: #{tpu_custom_call.1} parent=11 // pred_region
          _
        $region76: #{tpu_custom_call.1} parent=11 // pred_fallthru
          _
        // Predicated region
        $region77: #{tpu_custom_call.1} parent=11 // pred_check
          %p634 = pneg %p448
        $region78: #{tpu_custom_call.1} parent=11 // pred_check_branch
          %636 = sbr.rel (%p634) target = $region80
        $region79: #{tpu_custom_call.1} parent=11 // pred_region
          _
        $region80: #{tpu_custom_call.1} parent=11 // pred_fallthru
          _
        // Predicated region
        $region81: #{tpu_custom_call.1} parent=11 // pred_check
          %p637 = pneg %p469
        $region82: #{tpu_custom_call.1} parent=11 // pred_check_branch
          %639 = sbr.rel (%p637) target = $region84
        $region83: #{tpu_custom_call.1} parent=11 // pred_region
          _
        $region84: #{tpu_custom_call.1} parent=11 // pred_fallthru
          _
      $region12: #{tpu_custom_call.1} parent=5 // pred_fallthru
        _
      %p640 = scmp.lt.s32.totalorder %s39, 2
      // Predicated region
      $region85: #{tpu_custom_call.1} parent=5 // pred_check
        %p641 = pneg %p640
      $region86: #{tpu_custom_call.1} parent=5 // pred_check_branch
        %643 = sbr.rel (%p641) target = $region88
      $region87: #{tpu_custom_call.1} parent=5 // pred_region
        // Predicated region
        $region89: #{tpu_custom_call.1} parent=87 // pred_check
          %p644 = pneg %p59
        $region90: #{tpu_custom_call.1} parent=87 // pred_check_branch
          %646 = sbr.rel (%p644) target = $region92
        $region91: #{tpu_custom_call.1} parent=87 // pred_region
          %p647 = scmp.lt.s32.totalorder %s39, 1
          %s648 = scalar_select %p647, %s39, 1
          %s649 = smul.addr %s648, 8
          %s650 = scalar_lea.vmem %s1, %s649
        $region92: #{tpu_custom_call.1} parent=87 // pred_fallthru
          _
        // Predicated region
        $region93: #{tpu_custom_call.1} parent=87 // pred_check
          %p651 = pneg %p85
        $region94: #{tpu_custom_call.1} parent=87 // pred_check_branch
          %653 = sbr.rel (%p651) target = $region96
        $region95: #{tpu_custom_call.1} parent=87 // pred_region
          %p654 = scmp.lt.s32.totalorder %s39, 1
          %s655 = scalar_select %p654, %s39, 1
          %s656 = smul.addr %s655, 8
          %s657 = scalar_lea.vmem %s2, %s656
        $region96: #{tpu_custom_call.1} parent=87 // pred_fallthru
          _
      $region88: #{tpu_custom_call.1} parent=5 // pred_fallthru
        _
      %p658 = scmp.le.s32.totalorder 1, %s39
      %p659 = scmp.lt.s32.totalorder %s39, 3
      %p660 = pnand %p658, %p659
      %p661 = pneg %p660
      // Predicated region
      $region97: #{tpu_custom_call.1} parent=5 // pred_check
        _
      $region98: #{tpu_custom_call.1} parent=5 // pred_check_branch
        %663 = sbr.rel (%p660) target = $region100
      $region99: #{tpu_custom_call.1} parent=5 // pred_region
        %s664 = ssub.s32 %s39, 1
        // Predicated region
        $region101: #{tpu_custom_call.1} parent=99 // pred_check
          %p665 = pneg %p133
        $region102: #{tpu_custom_call.1} parent=99 // pred_check_branch
          %667 = sbr.rel (%p665) target = $region104
        $region103: #{tpu_custom_call.1} parent=99 // pred_region
          %668 = dma.done [#allocation5], 256
        $region104: #{tpu_custom_call.1} parent=99 // pred_fallthru
          _
        // Predicated region
        $region105: #{tpu_custom_call.1} parent=99 // pred_check
          %p669 = pneg %p154
        $region106: #{tpu_custom_call.1} parent=99 // pred_check_branch
          %671 = sbr.rel (%p669) target = $region108
        $region107: #{tpu_custom_call.1} parent=99 // pred_region
          %672 = dma.done [#allocation8], 256
        $region108: #{tpu_custom_call.1} parent=99 // pred_fallthru
          _
        // Predicated region
        $region109: #{tpu_custom_call.1} parent=99 // pred_check
          %p673 = pneg %p175
        $region110: #{tpu_custom_call.1} parent=99 // pred_check_branch
          %675 = sbr.rel (%p673) target = $region112
        $region111: #{tpu_custom_call.1} parent=99 // pred_region
          %676 = dma.done [#allocation8], 256
        $region112: #{tpu_custom_call.1} parent=99 // pred_fallthru
          _
        // Predicated region
        $region113: #{tpu_custom_call.1} parent=99 // pred_check
          %p677 = pneg %p217
        $region114: #{tpu_custom_call.1} parent=99 // pred_check_branch
          %679 = sbr.rel (%p677) target = $region116
        $region115: #{tpu_custom_call.1} parent=99 // pred_region
          %680 = dma.done [#allocation11], 16
        $region116: #{tpu_custom_call.1} parent=99 // pred_fallthru
          _
        // Predicated region
        $region117: #{tpu_custom_call.1} parent=99 // pred_check
          %p681 = pneg %p259
        $region118: #{tpu_custom_call.1} parent=99 // pred_check_branch
          %683 = sbr.rel (%p681) target = $region120
        $region119: #{tpu_custom_call.1} parent=99 // pred_region
          %684 = dma.done [#allocation11], 256
        $region120: #{tpu_custom_call.1} parent=99 // pred_fallthru
          _
        // Predicated region
        $region121: #{tpu_custom_call.1} parent=99 // pred_check
          %p685 = pneg %p280
        $region122: #{tpu_custom_call.1} parent=99 // pred_check_branch
          %687 = sbr.rel (%p685) target = $region124
        $region123: #{tpu_custom_call.1} parent=99 // pred_region
          %688 = dma.done [#allocation14], 256
        $region124: #{tpu_custom_call.1} parent=99 // pred_fallthru
          _
        // Predicated region
        $region125: #{tpu_custom_call.1} parent=99 // pred_check
          %p689 = pneg %p301
        $region126: #{tpu_custom_call.1} parent=99 // pred_check_branch
          %691 = sbr.rel (%p689) target = $region128
        $region127: #{tpu_custom_call.1} parent=99 // pred_region
          %692 = dma.done [#allocation14], 256
        $region128: #{tpu_custom_call.1} parent=99 // pred_fallthru
          _
        // Predicated region
        $region129: #{tpu_custom_call.1} parent=99 // pred_check
          %p693 = pneg %p322
        $region130: #{tpu_custom_call.1} parent=99 // pred_check_branch
          %695 = sbr.rel (%p693) target = $region132
        $region131: #{tpu_custom_call.1} parent=99 // pred_region
          %696 = dma.done [#allocation17], 16
        $region132: #{tpu_custom_call.1} parent=99 // pred_fallthru
          _
        %p697 = scmp.lt.s32.totalorder %s44, 1
        %s698 = scalar_select %p697, %s44, 1
        %s699 = smul.addr %s698, 8
        %s700 = scalar_lea.vmem %s1, %s699
        %p701 = pneg %p65
        %p702 = pneg %p62
        %p703 = scmp.lt.s32.totalorder %s44, 1
        %s704 = scalar_select %p703, %s44, 1
        %s705 = smul.addr %s704, 8
        %s706 = scalar_lea.vmem %s2, %s705
        %p707 = pneg %p91
        %p708 = pneg %p88
        %p709 = pneg %p112
        %p710 = pneg %p109
        %p711 = pneg %p133
        %p712 = pneg %p130
        %p713 = pneg %p154
        %p714 = pneg %p151
        %p715 = pneg %p175
        %p716 = pneg %p172
        %p717 = pneg %p196
        %p718 = pneg %p193
        %p719 = pneg %p217
        %p720 = pneg %p214
        %p721 = pneg %p238
        %p722 = pneg %p235
        %p723 = pneg %p259
        %p724 = pneg %p256
        %p725 = pneg %p280
        %p726 = pneg %p277
        %p727 = pneg %p301
        %p728 = pneg %p298
        %p729 = pneg %p322
        %p730 = pneg %p319
        %p731 = pneg %p343
        %p732 = pneg %p340
        %p733 = pneg %p364
        %p734 = pneg %p361
        %p735 = pneg %p385
        %p736 = pneg %p382
        %p737 = pneg %p406
        %p738 = pneg %p403
        %p739 = pneg %p427
        %p740 = pneg %p424
        %p741 = pneg %p448
        %p742 = pneg %p445
        %p743 = pneg %p469
        %p744 = pneg %p466
        %p745 = pneg %p495
        %p746 = pneg %p492
        %s747 = sand.u32 %s482, 1
        %s748 = scalar_lea.sflag [#allocation6], %s747
        %s749 = sand.u32 %s482, 1
        %s750 = smul.addr %s749, 8
        %s751 = scalar_lea.vmem [#allocation18], %s750
        %p752 = scmp.lt.s32.totalorder %s44, 1
        %s753 = scalar_select %p752, %s44, 1
        %s754 = smul.addr %s753, 8
        %s755 = scalar_lea.vmem %s1, %s754
        %p756 = scmp.lt.s32.totalorder %s44, 1
        %s757 = scalar_select %p756, %s44, 1
        %s758 = smul.addr %s757, 8
        %s759 = scalar_lea.vmem %s2, %s758
        %v761 = vld [vmem:[%s755] sm:$0xff]
        %v762 = vld [vmem:[%s759] sm:$0xff]
        %v763 = vlaneseq
        %v764 = vshrl.u32 %v763, 7
        %v765 = vlaneseq
        %v766 = vand.u32 %v765, 127
        %vm767 = vcmp.le.s32.totalorder %v766, %v764
        %v768 = vpack.c.bf16 %v761, %v761
        %v769 = vld [vmem:[%s3] sm:$0xf]
        %v770 = vld [vmem:[%s3 + $0x4] sm:$0xf]
        %v771 = vld [vmem:[%s3 + $0x8] sm:$0xf]
        %v772 = vld [vmem:[%s3 + $0xc] sm:$0xf]
        %v777 = vunpack.c.l.b16 %v769
        %v778 = vunpack.c.l.b16 %v770
        %v779 = vunpack.c.l.b16 %v771
        %v780 = vunpack.c.l.b16 %v772
        %v781 = vpack.c.b16 %v778, %v777
        %v782 = vpack.c.b16 %v780, %v779
        %vm785 = vcmask 261120
        %v787 = vsel %vm785, %v768, 0
        %789 = vmatprep.subr.bf16.mxu0 0
        %790 = vmatpush1.bf16.msra.mxu0 %v781
        %791 = vmatprep.subr.bf16.mxu0 0
        %792 = vmatpush1.bf16.msra.mxu0 %v782
        %793 = vmatprep.subr.bf16.mxu0 0
        %794 = vmatpush1.bf16.msra.mxu0 0
        %795 = vmatprep.subr.bf16.mxu0 0
        %796 = vmatpush1.bf16.msra.mxu0 0
        %797 = vmatprep.subr.bf16.mxu0 0
        %798 = vmatpush1.bf16.msra.mxu0 0
        %799 = vmatprep.subr.bf16.mxu0 0
        %800 = vmatpush1.bf16.msra.mxu0 0
        %801 = vmatprep.subr.bf16.mxu0 0
        %802 = vmatpush1.bf16.msra.mxu0 0
        %803 = vmatprep.subr.bf16.mxu0 0
        %804 = vmatpush1.bf16.msra.mxu0 0
        %805 = vmatprep.subr.bf16.mxu0 0
        %806 = vmatpush1.bf16.msra.mxu0 0
        %807 = vmatprep.subr.bf16.mxu0 0
        %808 = vmatpush1.bf16.msra.mxu0 0
        %809 = vmatprep.subr.bf16.mxu0 0
        %810 = vmatpush1.bf16.msra.mxu0 0
        %811 = vmatprep.subr.bf16.mxu0 0
        %812 = vmatpush1.bf16.msra.mxu0 0
        %813 = vmatprep.subr.bf16.mxu0 0
        %814 = vmatpush1.bf16.msra.mxu0 0
        %815 = vmatprep.subr.bf16.mxu0 0
        %816 = vmatpush1.bf16.msra.mxu0 0
        %817 = vmatprep.subr.bf16.mxu0 0
        %818 = vmatpush1.bf16.msra.mxu0 0
        %819 = vmatprep.subr.bf16.mxu0 0
        %820 = vmatpush1.bf16.msra.mxu0 0
        %821 = vmatprep.mubr.bf16.mxu0 0
        %822 = vmatmul.mubr.bf16.gmra.mrb[0].mxu0 %v787
        %v823 = vpop.f32.mrb[0].mxu0
        %v824 = vadd.f32 0.0, %v823
        %v825 = vpop.f32.mrb[0].mxu0
        %v826 = vpop.f32.mrb[0].mxu0
        %v827 = vpop.f32.mrb[0].mxu0
        %828 = vdwg.mxu0
        %v829 = vld [vmem:[#allocation4] sm:$0xf]
        %v830 = vld [vmem:[#allocation4 + $0x4] sm:$0xf]
        %v831 = vld [vmem:[#allocation4 + $0x8] sm:$0xf]
        %v832 = vld [vmem:[#allocation4 + $0xc] sm:$0xf]
        %v837 = vunpack.c.l.b16 %v829
        %v838 = vunpack.c.l.b16 %v830
        %v839 = vunpack.c.l.b16 %v831
        %v840 = vunpack.c.l.b16 %v832
        %v841 = vpack.c.b16 %v838, %v837
        %v842 = vpack.c.b16 %v840, %v839
        %845 = vmatprep.subr.bf16.mxu0 0
        %846 = vmatpush1.bf16.msra.mxu0 %v841
        %847 = vmatprep.subr.bf16.mxu0 0
        %848 = vmatpush1.bf16.msra.mxu0 %v842
        %849 = vmatprep.subr.bf16.mxu0 0
        %850 = vmatpush1.bf16.msra.mxu0 0
        %851 = vmatprep.subr.bf16.mxu0 0
        %852 = vmatpush1.bf16.msra.mxu0 0
        %853 = vmatprep.subr.bf16.mxu0 0
        %854 = vmatpush1.bf16.msra.mxu0 0
        %855 = vmatprep.subr.bf16.mxu0 0
        %856 = vmatpush1.bf16.msra.mxu0 0
        %857 = vmatprep.subr.bf16.mxu0 0
        %858 = vmatpush1.bf16.msra.mxu0 0
        %859 = vmatprep.subr.bf16.mxu0 0
        %860 = vmatpush1.bf16.msra.mxu0 0
        %861 = vmatprep.subr.bf16.mxu0 0
        %862 = vmatpush1.bf16.msra.mxu0 0
        %863 = vmatprep.subr.bf16.mxu0 0
        %864 = vmatpush1.bf16.msra.mxu0 0
        %865 = vmatprep.subr.bf16.mxu0 0
        %866 = vmatpush1.bf16.msra.mxu0 0
        %867 = vmatprep.subr.bf16.mxu0 0
        %868 = vmatpush1.bf16.msra.mxu0 0
        %869 = vmatprep.subr.bf16.mxu0 0
        %870 = vmatpush1.bf16.msra.mxu0 0
        %871 = vmatprep.subr.bf16.mxu0 0
        %872 = vmatpush1.bf16.msra.mxu0 0
        %873 = vmatprep.subr.bf16.mxu0 0
        %874 = vmatpush1.bf16.msra.mxu0 0
        %875 = vmatprep.subr.bf16.mxu0 0
        %876 = vmatpush1.bf16.msra.mxu0 0
        %877 = vmatprep.mubr.bf16.mxu0 0
        %878 = vmatmul.mubr.bf16.gmra.mrb[0].mxu0 %v787
        %v879 = vpop.f32.mrb[0].mxu0
        %v880 = vadd.f32 0.0, %v879
        %v881 = vpop.f32.mrb[0].mxu0
        %v882 = vpop.f32.mrb[0].mxu0
        %v883 = vpop.f32.mrb[0].mxu0
        %884 = vdwg.mxu0
        %v885 = vld [vmem:[#allocation7] sm:$0xf]
        %v886 = vld [vmem:[#allocation7 + $0x4] sm:$0xf]
        %v887 = vld [vmem:[#allocation7 + $0x8] sm:$0xf]
        %v888 = vld [vmem:[#allocation7 + $0xc] sm:$0xf]
        %v893 = vunpack.c.l.b16 %v885
        %v894 = vunpack.c.l.b16 %v886
        %v895 = vunpack.c.l.b16 %v887
        %v896 = vunpack.c.l.b16 %v888
        %v897 = vpack.c.b16 %v894, %v893
        %v898 = vpack.c.b16 %v896, %v895
        %901 = vmatprep.subr.bf16.mxu0 0
        %902 = vmatpush1.bf16.msra.mxu0 %v897
        %903 = vmatprep.subr.bf16.mxu0 0
        %904 = vmatpush1.bf16.msra.mxu0 %v898
        %905 = vmatprep.subr.bf16.mxu0 0
        %906 = vmatpush1.bf16.msra.mxu0 0
        %907 = vmatprep.subr.bf16.mxu0 0
        %908 = vmatpush1.bf16.msra.mxu0 0
        %909 = vmatprep.subr.bf16.mxu0 0
        %910 = vmatpush1.bf16.msra.mxu0 0
        %911 = vmatprep.subr.bf16.mxu0 0
        %912 = vmatpush1.bf16.msra.mxu0 0
        %913 = vmatprep.subr.bf16.mxu0 0
        %914 = vmatpush1.bf16.msra.mxu0 0
        %915 = vmatprep.subr.bf16.mxu0 0
        %916 = vmatpush1.bf16.msra.mxu0 0
        %917 = vmatprep.subr.bf16.mxu0 0
        %918 = vmatpush1.bf16.msra.mxu0 0
        %919 = vmatprep.subr.bf16.mxu0 0
        %920 = vmatpush1.bf16.msra.mxu0 0
        %921 = vmatprep.subr.bf16.mxu0 0
        %922 = vmatpush1.bf16.msra.mxu0 0
        %923 = vmatprep.subr.bf16.mxu0 0
        %924 = vmatpush1.bf16.msra.mxu0 0
        %925 = vmatprep.subr.bf16.mxu0 0
        %926 = vmatpush1.bf16.msra.mxu0 0
        %927 = vmatprep.subr.bf16.mxu0 0
        %928 = vmatpush1.bf16.msra.mxu0 0
        %929 = vmatprep.subr.bf16.mxu0 0
        %930 = vmatpush1.bf16.msra.mxu0 0
        %931 = vmatprep.subr.bf16.mxu0 0
        %932 = vmatpush1.bf16.msra.mxu0 0
        %933 = vmatprep.mubr.bf16.mxu0 0
        %934 = vmatmul.mubr.bf16.gmra.mrb[0].mxu0 %v787
        %v935 = vpop.f32.mrb[0].mxu0
        %v936 = vadd.f32 0.0, %v935
        %v937 = vpop.f32.mrb[0].mxu0
        %v938 = vpop.f32.mrb[0].mxu0
        %v939 = vpop.f32.mrb[0].mxu0
        %940 = vdwg.mxu0
        %v941 = vpack.c.bf16 %v824, %v824
        %v942 = vpack.c.bf16 %v880, %v880
        %v943 = vpack.c.bf16 %v936, %v936
        %vm944 = vcmask 64512
        %v946 = vsel %vm944, %v941, 0
        %v949 = vsel %vm944, %v942, 0
        %951 = vmatprep.subr.bf16.mxu0 0
        %952 = vmatpush1.bf16.xpose.msra.mxu0 %v949
        %953 = vmatprep.subr.bf16.mxu0 0
        %954 = vmatpush1.bf16.xpose.msra.mxu0 0
        %955 = vmatprep.subr.bf16.mxu0 0
        %956 = vmatpush1.bf16.xpose.msra.mxu0 0
        %957 = vmatprep.subr.bf16.mxu0 0
        %958 = vmatpush1.bf16.xpose.msra.mxu0 0
        %959 = vmatprep.subr.bf16.mxu0 0
        %960 = vmatpush1.bf16.xpose.msra.mxu0 0
        %961 = vmatprep.subr.bf16.mxu0 0
        %962 = vmatpush1.bf16.xpose.msra.mxu0 0
        %963 = vmatprep.subr.bf16.mxu0 0
        %964 = vmatpush1.bf16.xpose.msra.mxu0 0
        %965 = vmatprep.subr.bf16.mxu0 0
        %966 = vmatpush1.bf16.xpose.msra.mxu0 0
        %967 = vmatprep.subr.bf16.mxu0 0
        %968 = vmatpush1.bf16.xpose.msra.mxu0 0
        %969 = vmatprep.subr.bf16.mxu0 0
        %970 = vmatpush1.bf16.xpose.msra.mxu0 0
        %971 = vmatprep.subr.bf16.mxu0 0
        %972 = vmatpush1.bf16.xpose.msra.mxu0 0
        %973 = vmatprep.subr.bf16.mxu0 0
        %974 = vmatpush1.bf16.xpose.msra.mxu0 0
        %975 = vmatprep.subr.bf16.mxu0 0
        %976 = vmatpush1.bf16.xpose.msra.mxu0 0
        %977 = vmatprep.subr.bf16.mxu0 0
        %978 = vmatpush1.bf16.xpose.msra.mxu0 0
        %979 = vmatprep.subr.bf16.mxu0 0
        %980 = vmatpush1.bf16.xpose.msra.mxu0 0
        %981 = vmatprep.subr.bf16.mxu0 0
        %982 = vmatpush1.bf16.xpose.msra.mxu0 0
        %983 = vmatprep.mubr.bf16.mxu0 0
        %984 = vmatmul.mubr.bf16.gmra.mrb[0].mxu0 %v946
        %v985 = vpop.f32.mrb[0].mxu0
        %v986 = vadd.f32 0.0, %v985
        %v987 = vpop.f32.mrb[0].mxu0
        %v988 = vpop.f32.mrb[0].mxu0
        %v989 = vpop.f32.mrb[0].mxu0
        %990 = vdwg.mxu0
        %v991 = vmul.f32 %v986, 0.35355338
        %v992 = vsel %vm767, %v991, -1000000.0
        %v993 = vsel %vm944, %v992, -inf
        %994 = vmax.xlane.f32.xlu0 %v993
        %v995 = vpop.xlane.xlu0 %994
        %v996 = vsub.f32 %v992, %v995
        %v997 = vmul.f32 %v996, 1.442695
        %v998 = vpow.pop %v997
        %v999 = vsel %vm944, %v998, 0.0
        %1000 = vadd.xlane.f32.xlu0 %v999
        %v1001 = vpop.xlane.xlu0 %1000
        %v1002 = vrcp.pop %v1001
        %v1003 = vmul.f32 %v998, %v1002
        %v1004 = vpack.c.bf16 %v1003, %v1003
        %v1006 = vsel %vm944, %v1004, 0
        %vm1008 = vcmask 1043456
        %v1010 = vsel %vm1008, %v943, 0
        %1012 = vmatprep.subr.bf16.mxu0 0
        %1013 = vmatpush1.bf16.msra.mxu0 %v1010
        %1014 = vmatprep.subr.bf16.mxu0 0
        %1015 = vmatpush1.bf16.msra.mxu0 0
        %1016 = vmatprep.subr.bf16.mxu0 0
        %1017 = vmatpush1.bf16.msra.mxu0 0
        %1018 = vmatprep.subr.bf16.mxu0 0
        %1019 = vmatpush1.bf16.msra.mxu0 0
        %1020 = vmatprep.subr.bf16.mxu0 0
        %1021 = vmatpush1.bf16.msra.mxu0 0
        %1022 = vmatprep.subr.bf16.mxu0 0
        %1023 = vmatpush1.bf16.msra.mxu0 0
        %1024 = vmatprep.subr.bf16.mxu0 0
        %1025 = vmatpush1.bf16.msra.mxu0 0
        %1026 = vmatprep.subr.bf16.mxu0 0
        %1027 = vmatpush1.bf16.msra.mxu0 0
        %1028 = vmatprep.subr.bf16.mxu0 0
        %1029 = vmatpush1.bf16.msra.mxu0 0
        %1030 = vmatprep.subr.bf16.mxu0 0
        %1031 = vmatpush1.bf16.msra.mxu0 0
        %1032 = vmatprep.subr.bf16.mxu0 0
        %1033 = vmatpush1.bf16.msra.mxu0 0
        %1034 = vmatprep.subr.bf16.mxu0 0
        %1035 = vmatpush1.bf16.msra.mxu0 0
        %1036 = vmatprep.subr.bf16.mxu0 0
        %1037 = vmatpush1.bf16.msra.mxu0 0
        %1038 = vmatprep.subr.bf16.mxu0 0
        %1039 = vmatpush1.bf16.msra.mxu0 0
        %1040 = vmatprep.subr.bf16.mxu0 0
        %1041 = vmatpush1.bf16.msra.mxu0 0
        %1042 = vmatprep.subr.bf16.mxu0 0
        %1043 = vmatpush1.bf16.msra.mxu0 0
        %1044 = vmatprep.mubr.bf16.mxu0 0
        %1045 = vmatmul.mubr.bf16.gmra.mrb[0].mxu0 %v1006
        %v1046 = vpop.f32.mrb[0].mxu0
        %v1047 = vadd.f32 0.0, %v1046
        %v1048 = vpop.f32.mrb[0].mxu0
        %v1049 = vpop.f32.mrb[0].mxu0
        %v1050 = vpop.f32.mrb[0].mxu0
        %1051 = vdwg.mxu0
        %1053 = vrot.lane.b32.xlu0 %v941, 120
        %v1054 = vpop.permute.xlu0 %1053
        %1056 = vrot.lane.b32.xlu0 %v942, 120
        %v1057 = vpop.permute.xlu0 %1056
        %v1059 = vsel %vm944, %v1054, 0
        %v1062 = vsel %vm944, %v1057, 0
        %1064 = vmatprep.subr.bf16.mxu0 0
        %1065 = vmatpush1.bf16.xpose.msra.mxu0 %v1062
        %1066 = vmatprep.subr.bf16.mxu0 0
        %1067 = vmatpush1.bf16.xpose.msra.mxu0 0
        %1068 = vmatprep.subr.bf16.mxu0 0
        %1069 = vmatpush1.bf16.xpose.msra.mxu0 0
        %1070 = vmatprep.subr.bf16.mxu0 0
        %1071 = vmatpush1.bf16.xpose.msra.mxu0 0
        %1072 = vmatprep.subr.bf16.mxu0 0
        %1073 = vmatpush1.bf16.xpose.msra.mxu0 0
        %1074 = vmatprep.subr.bf16.mxu0 0
        %1075 = vmatpush1.bf16.xpose.msra.mxu0 0
        %1076 = vmatprep.subr.bf16.mxu0 0
        %1077 = vmatpush1.bf16.xpose.msra.mxu0 0
        %1078 = vmatprep.subr.bf16.mxu0 0
        %1079 = vmatpush1.bf16.xpose.msra.mxu0 0
        %1080 = vmatprep.subr.bf16.mxu0 0
        %1081 = vmatpush1.bf16.xpose.msra.mxu0 0
        %1082 = vmatprep.subr.bf16.mxu0 0
        %1083 = vmatpush1.bf16.xpose.msra.mxu0 0
        %1084 = vmatprep.subr.bf16.mxu0 0
        %1085 = vmatpush1.bf16.xpose.msra.mxu0 0
        %1086 = vmatprep.subr.bf16.mxu0 0
        %1087 = vmatpush1.bf16.xpose.msra.mxu0 0
        %1088 = vmatprep.subr.bf16.mxu0 0
        %1089 = vmatpush1.bf16.xpose.msra.mxu0 0
        %1090 = vmatprep.subr.bf16.mxu0 0
        %1091 = vmatpush1.bf16.xpose.msra.mxu0 0
        %1092 = vmatprep.subr.bf16.mxu0 0
        %1093 = vmatpush1.bf16.xpose.msra.mxu0 0
        %1094 = vmatprep.subr.bf16.mxu0 0
        %1095 = vmatpush1.bf16.xpose.msra.mxu0 0
        %1096 = vmatprep.mubr.bf16.mxu0 0
        %1097 = vmatmul.mubr.bf16.gmra.mrb[0].mxu0 %v1059
        %v1098 = vpop.f32.mrb[0].mxu0
        %v1099 = vadd.f32 0.0, %v1098
        %v1100 = vpop.f32.mrb[0].mxu0
        %v1101 = vpop.f32.mrb[0].mxu0
        %v1102 = vpop.f32.mrb[0].mxu0
        %1103 = vdwg.mxu0
        %v1104 = vmul.f32 %v1099, 0.35355338
        %v1105 = vsel %vm767, %v1104, -1000000.0
        %v1106 = vsel %vm944, %v1105, -inf
        %1107 = vmax.xlane.f32.xlu0 %v1106
        %v1108 = vpop.xlane.xlu0 %1107
        %v1109 = vsub.f32 %v1105, %v1108
        %v1110 = vmul.f32 %v1109, 1.442695
        %v1111 = vpow.pop %v1110
        %v1112 = vsel %vm944, %v1111, 0.0
        %1113 = vadd.xlane.f32.xlu0 %v1112
        %v1114 = vpop.xlane.xlu0 %1113
        %v1115 = vrcp.pop %v1114
        %v1116 = vmul.f32 %v1111, %v1115
        %v1117 = vpack.c.bf16 %v1116, %v1116
        %1119 = vrot.lane.b32.xlu0 %v943, 120
        %v1120 = vpop.permute.xlu0 %1119
        %v1122 = vsel %vm944, %v1117, 0
        %v1125 = vsel %vm1008, %v1120, 0
        %1127 = vmatprep.subr.bf16.mxu0 0
        %1128 = vmatpush1.bf16.msra.mxu0 %v1125
        %1129 = vmatprep.subr.bf16.mxu0 0
        %1130 = vmatpush1.bf16.msra.mxu0 0
        %1131 = vmatprep.subr.bf16.mxu0 0
        %1132 = vmatpush1.bf16.msra.mxu0 0
        %1133 = vmatprep.subr.bf16.mxu0 0
        %1134 = vmatpush1.bf16.msra.mxu0 0
        %1135 = vmatprep.subr.bf16.mxu0 0
        %1136 = vmatpush1.bf16.msra.mxu0 0
        %1137 = vmatprep.subr.bf16.mxu0 0
        %1138 = vmatpush1.bf16.msra.mxu0 0
        %1139 = vmatprep.subr.bf16.mxu0 0
        %1140 = vmatpush1.bf16.msra.mxu0 0
        %1141 = vmatprep.subr.bf16.mxu0 0
        %1142 = vmatpush1.bf16.msra.mxu0 0
        %1143 = vmatprep.subr.bf16.mxu0 0
        %1144 = vmatpush1.bf16.msra.mxu0 0
        %1145 = vmatprep.subr.bf16.mxu0 0
        %1146 = vmatpush1.bf16.msra.mxu0 0
        %1147 = vmatprep.subr.bf16.mxu0 0
        %1148 = vmatpush1.bf16.msra.mxu0 0
        %1149 = vmatprep.subr.bf16.mxu0 0
        %1150 = vmatpush1.bf16.msra.mxu0 0
        %1151 = vmatprep.subr.bf16.mxu0 0
        %1152 = vmatpush1.bf16.msra.mxu0 0
        %1153 = vmatprep.subr.bf16.mxu0 0
        %1154 = vmatpush1.bf16.msra.mxu0 0
        %1155 = vmatprep.subr.bf16.mxu0 0
        %1156 = vmatpush1.bf16.msra.mxu0 0
        %1157 = vmatprep.subr.bf16.mxu0 0
        %1158 = vmatpush1.bf16.msra.mxu0 0
        %1159 = vmatprep.mubr.bf16.mxu0 0
        %1160 = vmatmul.mubr.bf16.gmra.mrb[0].mxu0 %v1122
        %v1161 = vpop.f32.mrb[0].mxu0
        %v1162 = vadd.f32 0.0, %v1161
        %v1163 = vpop.f32.mrb[0].mxu0
        %v1164 = vpop.f32.mrb[0].mxu0
        %v1165 = vpop.f32.mrb[0].mxu0
        %1166 = vdwg.mxu0
        %1167 = vrot.lane.b32.xlu0 %v941, 112
        %v1168 = vpop.permute.xlu0 %1167
        %1169 = vrot.lane.b32.xlu0 %v942, 112
        %v1170 = vpop.permute.xlu0 %1169
        %v1172 = vsel %vm944, %v1168, 0
        %v1175 = vsel %vm944, %v1170, 0
        %1177 = vmatprep.subr.bf16.mxu0 0
        %1178 = vmatpush1.bf16.xpose.msra.mxu0 %v1175
        %1179 = vmatprep.subr.bf16.mxu0 0
        %1180 = vmatpush1.bf16.xpose.msra.mxu0 0
        %1181 = vmatprep.subr.bf16.mxu0 0
        %1182 = vmatpush1.bf16.xpose.msra.mxu0 0
        %1183 = vmatprep.subr.bf16.mxu0 0
        %1184 = vmatpush1.bf16.xpose.msra.mxu0 0
        %1185 = vmatprep.subr.bf16.mxu0 0
        %1186 = vmatpush1.bf16.xpose.msra.mxu0 0
        %1187 = vmatprep.subr.bf16.mxu0 0
        %1188 = vmatpush1.bf16.xpose.msra.mxu0 0
        %1189 = vmatprep.subr.bf16.mxu0 0
        %1190 = vmatpush1.bf16.xpose.msra.mxu0 0
        %1191 = vmatprep.subr.bf16.mxu0 0
        %1192 = vmatpush1.bf16.xpose.msra.mxu0 0
        %1193 = vmatprep.subr.bf16.mxu0 0
        %1194 = vmatpush1.bf16.xpose.msra.mxu0 0
        %1195 = vmatprep.subr.bf16.mxu0 0
        %1196 = vmatpush1.bf16.xpose.msra.mxu0 0
        %1197 = vmatprep.subr.bf16.mxu0 0
        %1198 = vmatpush1.bf16.xpose.msra.mxu0 0
        %1199 = vmatprep.subr.bf16.mxu0 0
        %1200 = vmatpush1.bf16.xpose.msra.mxu0 0
        %1201 = vmatprep.subr.bf16.mxu0 0
        %1202 = vmatpush1.bf16.xpose.msra.mxu0 0
        %1203 = vmatprep.subr.bf16.mxu0 0
        %1204 = vmatpush1.bf16.xpose.msra.mxu0 0
        %1205 = vmatprep.subr.bf16.mxu0 0
        %1206 = vmatpush1.bf16.xpose.msra.mxu0 0
        %1207 = vmatprep.subr.bf16.mxu0 0
        %1208 = vmatpush1.bf16.xpose.msra.mxu0 0
        %1209 = vmatprep.mubr.bf16.mxu0 0
        %1210 = vmatmul.mubr.bf16.gmra.mrb[0].mxu0 %v1172
        %v1211 = vpop.f32.mrb[0].mxu0
        %v1212 = vadd.f32 0.0, %v1211
        %v1213 = vpop.f32.mrb[0].mxu0
        %v1214 = vpop.f32.mrb[0].mxu0
        %v1215 = vpop.f32.mrb[0].mxu0
        %1216 = vdwg.mxu0
        %v1217 = vmul.f32 %v1212, 0.35355338
        %v1218 = vsel %vm767, %v1217, -1000000.0
        %v1219 = vsel %vm944, %v1218, -inf
        %1220 = vmax.xlane.f32.xlu0 %v1219
        %v1221 = vpop.xlane.xlu0 %1220
        %v1222 = vsub.f32 %v1218, %v1221
        %v1223 = vmul.f32 %v1222, 1.442695
        %v1224 = vpow.pop %v1223
        %v1225 = vsel %vm944, %v1224, 0.0
        %1226 = vadd.xlane.f32.xlu0 %v1225
        %v1227 = vpop.xlane.xlu0 %1226
        %v1228 = vrcp.pop %v1227
        %v1229 = vmul.f32 %v1224, %v1228
        %v1230 = vpack.c.bf16 %v1229, %v1229
        %1231 = vrot.lane.b32.xlu0 %v943, 112
        %v1232 = vpop.permute.xlu0 %1231
        %v1234 = vsel %vm944, %v1230, 0
        %v1237 = vsel %vm1008, %v1232, 0
        %1239 = vmatprep.subr.bf16.mxu0 0
        %1240 = vmatpush1.bf16.msra.mxu0 %v1237
        %1241 = vmatprep.subr.bf16.mxu0 0
        %1242 = vmatpush1.bf16.msra.mxu0 0
        %1243 = vmatprep.subr.bf16.mxu0 0
        %1244 = vmatpush1.bf16.msra.mxu0 0
        %1245 = vmatprep.subr.bf16.mxu0 0
        %1246 = vmatpush1.bf16.msra.mxu0 0
        %1247 = vmatprep.subr.bf16.mxu0 0
        %1248 = vmatpush1.bf16.msra.mxu0 0
        %1249 = vmatprep.subr.bf16.mxu0 0
        %1250 = vmatpush1.bf16.msra.mxu0 0
        %1251 = vmatprep.subr.bf16.mxu0 0
        %1252 = vmatpush1.bf16.msra.mxu0 0
        %1253 = vmatprep.subr.bf16.mxu0 0
        %1254 = vmatpush1.bf16.msra.mxu0 0
        %1255 = vmatprep.subr.bf16.mxu0 0
        %1256 = vmatpush1.bf16.msra.mxu0 0
        %1257 = vmatprep.subr.bf16.mxu0 0
        %1258 = vmatpush1.bf16.msra.mxu0 0
        %1259 = vmatprep.subr.bf16.mxu0 0
        %1260 = vmatpush1.bf16.msra.mxu0 0
        %1261 = vmatprep.subr.bf16.mxu0 0
        %1262 = vmatpush1.bf16.msra.mxu0 0
        %1263 = vmatprep.subr.bf16.mxu0 0
        %1264 = vmatpush1.bf16.msra.mxu0 0
        %1265 = vmatprep.subr.bf16.mxu0 0
        %1266 = vmatpush1.bf16.msra.mxu0 0
        %1267 = vmatprep.subr.bf16.mxu0 0
        %1268 = vmatpush1.bf16.msra.mxu0 0
        %1269 = vmatprep.subr.bf16.mxu0 0
        %1270 = vmatpush1.bf16.msra.mxu0 0
        %1271 = vmatprep.mubr.bf16.mxu0 0
        %1272 = vmatmul.mubr.bf16.gmra.mrb[0].mxu0 %v1234
        %v1273 = vpop.f32.mrb[0].mxu0
        %v1274 = vadd.f32 0.0, %v1273
        %v1275 = vpop.f32.mrb[0].mxu0
        %v1276 = vpop.f32.mrb[0].mxu0
        %v1277 = vpop.f32.mrb[0].mxu0
        %1278 = vdwg.mxu0
        %1279 = vrot.lane.b32.xlu0 %v941, 104
        %v1280 = vpop.permute.xlu0 %1279
        %1281 = vrot.lane.b32.xlu0 %v942, 104
        %v1282 = vpop.permute.xlu0 %1281
        %v1284 = vsel %vm944, %v1280, 0
        %v1287 = vsel %vm944, %v1282, 0
        %1289 = vmatprep.subr.bf16.mxu0 0
        %1290 = vmatpush1.bf16.xpose.msra.mxu0 %v1287
        %1291 = vmatprep.subr.bf16.mxu0 0
        %1292 = vmatpush1.bf16.xpose.msra.mxu0 0
        %1293 = vmatprep.subr.bf16.mxu0 0
        %1294 = vmatpush1.bf16.xpose.msra.mxu0 0
        %1295 = vmatprep.subr.bf16.mxu0 0
        %1296 = vmatpush1.bf16.xpose.msra.mxu0 0
        %1297 = vmatprep.subr.bf16.mxu0 0
        %1298 = vmatpush1.bf16.xpose.msra.mxu0 0
        %1299 = vmatprep.subr.bf16.mxu0 0
        %1300 = vmatpush1.bf16.xpose.msra.mxu0 0
        %1301 = vmatprep.subr.bf16.mxu0 0
        %1302 = vmatpush1.bf16.xpose.msra.mxu0 0
        %1303 = vmatprep.subr.bf16.mxu0 0
        %1304 = vmatpush1.bf16.xpose.msra.mxu0 0
        %1305 = vmatprep.subr.bf16.mxu0 0
        %1306 = vmatpush1.bf16.xpose.msra.mxu0 0
        %1307 = vmatprep.subr.bf16.mxu0 0
        %1308 = vmatpush1.bf16.xpose.msra.mxu0 0
        %1309 = vmatprep.subr.bf16.mxu0 0
        %1310 = vmatpush1.bf16.xpose.msra.mxu0 0
        %1311 = vmatprep.subr.bf16.mxu0 0
        %1312 = vmatpush1.bf16.xpose.msra.mxu0 0
        %1313 = vmatprep.subr.bf16.mxu0 0
        %1314 = vmatpush1.bf16.xpose.msra.mxu0 0
        %1315 = vmatprep.subr.bf16.mxu0 0
        %1316 = vmatpush1.bf16.xpose.msra.mxu0 0
        %1317 = vmatprep.subr.bf16.mxu0 0
        %1318 = vmatpush1.bf16.xpose.msra.mxu0 0
        %1319 = vmatprep.subr.bf16.mxu0 0
        %1320 = vmatpush1.bf16.xpose.msra.mxu0 0
        %1321 = vmatprep.mubr.bf16.mxu0 0
        %1322 = vmatmul.mubr.bf16.gmra.mrb[0].mxu0 %v1284
        %v1323 = vpop.f32.mrb[0].mxu0
        %v1324 = vadd.f32 0.0, %v1323
        %v1325 = vpop.f32.mrb[0].mxu0
        %v1326 = vpop.f32.mrb[0].mxu0
        %v1327 = vpop.f32.mrb[0].mxu0
        %1328 = vdwg.mxu0
        %v1329 = vmul.f32 %v1324, 0.35355338
        %v1330 = vsel %vm767, %v1329, -1000000.0
        %v1331 = vsel %vm944, %v1330, -inf
        %1332 = vmax.xlane.f32.xlu0 %v1331
        %v1333 = vpop.xlane.xlu0 %1332
        %v1334 = vsub.f32 %v1330, %v1333
        %v1335 = vmul.f32 %v1334, 1.442695
        %v1336 = vpow.pop %v1335
        %v1337 = vsel %vm944, %v1336, 0.0
        %1338 = vadd.xlane.f32.xlu0 %v1337
        %v1339 = vpop.xlane.xlu0 %1338
        %v1340 = vrcp.pop %v1339
        %v1341 = vmul.f32 %v1336, %v1340
        %v1342 = vpack.c.bf16 %v1341, %v1341
        %1343 = vrot.lane.b32.xlu0 %v943, 104
        %v1344 = vpop.permute.xlu0 %1343
        %v1346 = vsel %vm944, %v1342, 0
        %v1349 = vsel %vm1008, %v1344, 0
        %1351 = vmatprep.subr.bf16.mxu0 0
        %1352 = vmatpush1.bf16.msra.mxu0 %v1349
        %1353 = vmatprep.subr.bf16.mxu0 0
        %1354 = vmatpush1.bf16.msra.mxu0 0
        %1355 = vmatprep.subr.bf16.mxu0 0
        %1356 = vmatpush1.bf16.msra.mxu0 0
        %1357 = vmatprep.subr.bf16.mxu0 0
        %1358 = vmatpush1.bf16.msra.mxu0 0
        %1359 = vmatprep.subr.bf16.mxu0 0
        %1360 = vmatpush1.bf16.msra.mxu0 0
        %1361 = vmatprep.subr.bf16.mxu0 0
        %1362 = vmatpush1.bf16.msra.mxu0 0
        %1363 = vmatprep.subr.bf16.mxu0 0
        %1364 = vmatpush1.bf16.msra.mxu0 0
        %1365 = vmatprep.subr.bf16.mxu0 0
        %1366 = vmatpush1.bf16.msra.mxu0 0
        %1367 = vmatprep.subr.bf16.mxu0 0
        %1368 = vmatpush1.bf16.msra.mxu0 0
        %1369 = vmatprep.subr.bf16.mxu0 0
        %1370 = vmatpush1.bf16.msra.mxu0 0
        %1371 = vmatprep.subr.bf16.mxu0 0
        %1372 = vmatpush1.bf16.msra.mxu0 0
        %1373 = vmatprep.subr.bf16.mxu0 0
        %1374 = vmatpush1.bf16.msra.mxu0 0
        %1375 = vmatprep.subr.bf16.mxu0 0
        %1376 = vmatpush1.bf16.msra.mxu0 0
        %1377 = vmatprep.subr.bf16.mxu0 0
        %1378 = vmatpush1.bf16.msra.mxu0 0
        %1379 = vmatprep.subr.bf16.mxu0 0
        %1380 = vmatpush1.bf16.msra.mxu0 0
        %1381 = vmatprep.subr.bf16.mxu0 0
        %1382 = vmatpush1.bf16.msra.mxu0 0
        %1383 = vmatprep.mubr.bf16.mxu0 0
        %1384 = vmatmul.mubr.bf16.gmra.mrb[0].mxu0 %v1346
        %v1385 = vpop.f32.mrb[0].mxu0
        %v1386 = vadd.f32 0.0, %v1385
        %v1387 = vpop.f32.mrb[0].mxu0
        %v1388 = vpop.f32.mrb[0].mxu0
        %v1389 = vpop.f32.mrb[0].mxu0
        %1390 = vdwg.mxu0
        %1392 = vrot.lane.b32.xlu0 %v1162, 8
        %v1393 = vpop.permute.xlu0 %1392
        %1396 = vrot.lane.b32.xlu0 %v1274, 16
        %v1397 = vpop.permute.xlu0 %1396
        %1400 = vrot.lane.b32.xlu0 %v1386, 24
        %v1401 = vpop.permute.xlu0 %1400
        %v1403 = vsel %vm944, %v1047, %v1393
        %vm1404 = vcmask 130048
        %v1405 = vsel %vm1404, %v1403, %v1397
        %vm1406 = vcmask 195584
        %v1407 = vsel %vm1406, %v1405, %v1401
        %v1408 = vpack.c.bf16 %v1407, %v1407
        %v1409 = vld [vmem:[#allocation9] sm:$0xf]
        %v1410 = vld [vmem:[#allocation9 + $0x4] sm:$0xf]
        %v1411 = vld [vmem:[#allocation9 + $0x8] sm:$0xf]
        %v1412 = vld [vmem:[#allocation9 + $0xc] sm:$0xf]
        %v1417 = vunpack.c.l.b16 %v1409
        %v1418 = vunpack.c.l.b16 %v1410
        %v1419 = vunpack.c.l.b16 %v1411
        %v1420 = vunpack.c.l.b16 %v1412
        %v1421 = vpack.c.b16 %v1418, %v1417
        %v1422 = vpack.c.b16 %v1420, %v1419
        %v1426 = vsel %vm785, %v1408, 0
        %1428 = vmatprep.subr.bf16.mxu0 0
        %1429 = vmatpush1.bf16.msra.mxu0 %v1421
        %1430 = vmatprep.subr.bf16.mxu0 0
        %1431 = vmatpush1.bf16.msra.mxu0 %v1422
        %1432 = vmatprep.subr.bf16.mxu0 0
        %1433 = vmatpush1.bf16.msra.mxu0 0
        %1434 = vmatprep.subr.bf16.mxu0 0
        %1435 = vmatpush1.bf16.msra.mxu0 0
        %1436 = vmatprep.subr.bf16.mxu0 0
        %1437 = vmatpush1.bf16.msra.mxu0 0
        %1438 = vmatprep.subr.bf16.mxu0 0
        %1439 = vmatpush1.bf16.msra.mxu0 0
        %1440 = vmatprep.subr.bf16.mxu0 0
        %1441 = vmatpush1.bf16.msra.mxu0 0
        %1442 = vmatprep.subr.bf16.mxu0 0
        %1443 = vmatpush1.bf16.msra.mxu0 0
        %1444 = vmatprep.subr.bf16.mxu0 0
        %1445 = vmatpush1.bf16.msra.mxu0 0
        %1446 = vmatprep.subr.bf16.mxu0 0
        %1447 = vmatpush1.bf16.msra.mxu0 0
        %1448 = vmatprep.subr.bf16.mxu0 0
        %1449 = vmatpush1.bf16.msra.mxu0 0
        %1450 = vmatprep.subr.bf16.mxu0 0
        %1451 = vmatpush1.bf16.msra.mxu0 0
        %1452 = vmatprep.subr.bf16.mxu0 0
        %1453 = vmatpush1.bf16.msra.mxu0 0
        %1454 = vmatprep.subr.bf16.mxu0 0
        %1455 = vmatpush1.bf16.msra.mxu0 0
        %1456 = vmatprep.subr.bf16.mxu0 0
        %1457 = vmatpush1.bf16.msra.mxu0 0
        %1458 = vmatprep.subr.bf16.mxu0 0
        %1459 = vmatpush1.bf16.msra.mxu0 0
        %1460 = vmatprep.mubr.bf16.mxu0 0
        %1461 = vmatmul.mubr.bf16.gmra.mrb[0].mxu0 %v1426
        %v1462 = vpop.f32.mrb[0].mxu0
        %v1463 = vadd.f32 0.0, %v1462
        %v1464 = vpop.f32.mrb[0].mxu0
        %v1465 = vpop.f32.mrb[0].mxu0
        %v1466 = vpop.f32.mrb[0].mxu0
        %1467 = vdwg.mxu0
        %v1468 = vadd.f32 %v761, %v1463
        %v1469 = vld [vmem:[%s7] sm:$0x1]
        %v1470 = vld [vmem:[#allocation10] sm:$0x1]
        %v1471 = vsel %vm785, %v1468, 0.0
        %1472 = vadd.xlane.f32.xlu0 %v1471
        %v1473 = vpop.xlane.xlu0 %1472
        %v1474 = vrcp.pop 32.0
        %v1475 = vmul.f32 %v1473, %v1474
        %v1476 = vsub.f32 %v1468, %v1475
        %v1477 = vmul.f32 %v1476, %v1476
        %v1478 = vsel %vm785, %v1477, 0.0
        %1479 = vadd.xlane.f32.xlu0 %v1478
        %v1480 = vpop.xlane.xlu0 %1479
        %v1481 = vmul.f32 %v1480, %v1474
        %v1482 = vadd.f32 %v1481, 1e-05
        %v1483 = vrsqrt.pop %v1482
        %v1484 = vmul.f32 %v1476, %v1483
        %v1486 = vlaneseq
        %v1487 = vshrl.u32 %v1486, 7
        %v1488 = vsub.s32 0, %v1487
        %v1489 = vrot.slane %v1469, %v1488
        %v1491 = vmul.f32 %v1484, %v1489
        %v1493 = vlaneseq
        %v1494 = vshrl.u32 %v1493, 7
        %v1495 = vsub.s32 0, %v1494
        %v1496 = vrot.slane %v1470, %v1495
        %v1498 = vadd.f32 %v1491, %v1496
        %s1499 = sld [smem:[#allocation3 + %s44]]
        %v1500 = vstv %s1499
        %vm1501 = vcmp.lt.s32.totalorder %v766, %v1500
        %v1502 = vpack.c.bf16 %v1498, %v1498
        %v1503 = vld [vmem:[%s9] sm:$0xf]
        %v1504 = vld [vmem:[%s9 + $0x4] sm:$0xf]
        %v1505 = vld [vmem:[%s9 + $0x8] sm:$0xf]
        %v1506 = vld [vmem:[%s9 + $0xc] sm:$0xf]
        %v1511 = vunpack.c.l.b16 %v1503
        %v1512 = vunpack.c.l.b16 %v1504
        %v1513 = vunpack.c.l.b16 %v1505
        %v1514 = vunpack.c.l.b16 %v1506
        %v1515 = vpack.c.b16 %v1512, %v1511
        %v1516 = vpack.c.b16 %v1514, %v1513
        %v1520 = vsel %vm785, %v1502, 0
        %1522 = vmatprep.subr.bf16.mxu0 0
        %1523 = vmatpush1.bf16.msra.mxu0 %v1515
        %1524 = vmatprep.subr.bf16.mxu0 0
        %1525 = vmatpush1.bf16.msra.mxu0 %v1516
        %1526 = vmatprep.subr.bf16.mxu0 0
        %1527 = vmatpush1.bf16.msra.mxu0 0
        %1528 = vmatprep.subr.bf16.mxu0 0
        %1529 = vmatpush1.bf16.msra.mxu0 0
        %1530 = vmatprep.subr.bf16.mxu0 0
        %1531 = vmatpush1.bf16.msra.mxu0 0
        %1532 = vmatprep.subr.bf16.mxu0 0
        %1533 = vmatpush1.bf16.msra.mxu0 0
        %1534 = vmatprep.subr.bf16.mxu0 0
        %1535 = vmatpush1.bf16.msra.mxu0 0
        %1536 = vmatprep.subr.bf16.mxu0 0
        %1537 = vmatpush1.bf16.msra.mxu0 0
        %1538 = vmatprep.subr.bf16.mxu0 0
        %1539 = vmatpush1.bf16.msra.mxu0 0
        %1540 = vmatprep.subr.bf16.mxu0 0
        %1541 = vmatpush1.bf16.msra.mxu0 0
        %1542 = vmatprep.subr.bf16.mxu0 0
        %1543 = vmatpush1.bf16.msra.mxu0 0
        %1544 = vmatprep.subr.bf16.mxu0 0
        %1545 = vmatpush1.bf16.msra.mxu0 0
        %1546 = vmatprep.subr.bf16.mxu0 0
        %1547 = vmatpush1.bf16.msra.mxu0 0
        %1548 = vmatprep.subr.bf16.mxu0 0
        %1549 = vmatpush1.bf16.msra.mxu0 0
        %1550 = vmatprep.subr.bf16.mxu0 0
        %1551 = vmatpush1.bf16.msra.mxu0 0
        %1552 = vmatprep.subr.bf16.mxu0 0
        %1553 = vmatpush1.bf16.msra.mxu0 0
        %1554 = vmatprep.mubr.bf16.mxu0 0
        %1555 = vmatmul.mubr.bf16.gmra.mrb[0].mxu0 %v1520
        %v1556 = vpop.f32.mrb[0].mxu0
        %v1557 = vadd.f32 0.0, %v1556
        %v1558 = vpop.f32.mrb[0].mxu0
        %v1559 = vpop.f32.mrb[0].mxu0
        %v1560 = vpop.f32.mrb[0].mxu0
        %1561 = vdwg.mxu0
        %v1562 = vpack.c.bf16 %v762, %v762
        %v1563 = vld [vmem:[#allocation12] sm:$0xf]
        %v1564 = vld [vmem:[#allocation12 + $0x4] sm:$0xf]
        %v1565 = vld [vmem:[#allocation12 + $0x8] sm:$0xf]
        %v1566 = vld [vmem:[#allocation12 + $0xc] sm:$0xf]
        %v1571 = vunpack.c.l.b16 %v1563
        %v1572 = vunpack.c.l.b16 %v1564
        %v1573 = vunpack.c.l.b16 %v1565
        %v1574 = vunpack.c.l.b16 %v1566
        %v1575 = vpack.c.b16 %v1572, %v1571
        %v1576 = vpack.c.b16 %v1574, %v1573
        %v1580 = vsel %vm785, %v1562, 0
        %1582 = vmatprep.subr.bf16.mxu0 0
        %1583 = vmatpush1.bf16.msra.mxu0 %v1575
        %1584 = vmatprep.subr.bf16.mxu0 0
        %1585 = vmatpush1.bf16.msra.mxu0 %v1576
        %1586 = vmatprep.subr.bf16.mxu0 0
        %1587 = vmatpush1.bf16.msra.mxu0 0
        %1588 = vmatprep.subr.bf16.mxu0 0
        %1589 = vmatpush1.bf16.msra.mxu0 0
        %1590 = vmatprep.subr.bf16.mxu0 0
        %1591 = vmatpush1.bf16.msra.mxu0 0
        %1592 = vmatprep.subr.bf16.mxu0 0
        %1593 = vmatpush1.bf16.msra.mxu0 0
        %1594 = vmatprep.subr.bf16.mxu0 0
        %1595 = vmatpush1.bf16.msra.mxu0 0
        %1596 = vmatprep.subr.bf16.mxu0 0
        %1597 = vmatpush1.bf16.msra.mxu0 0
        %1598 = vmatprep.subr.bf16.mxu0 0
        %1599 = vmatpush1.bf16.msra.mxu0 0
        %1600 = vmatprep.subr.bf16.mxu0 0
        %1601 = vmatpush1.bf16.msra.mxu0 0
        %1602 = vmatprep.subr.bf16.mxu0 0
        %1603 = vmatpush1.bf16.msra.mxu0 0
        %1604 = vmatprep.subr.bf16.mxu0 0
        %1605 = vmatpush1.bf16.msra.mxu0 0
        %1606 = vmatprep.subr.bf16.mxu0 0
        %1607 = vmatpush1.bf16.msra.mxu0 0
        %1608 = vmatprep.subr.bf16.mxu0 0
        %1609 = vmatpush1.bf16.msra.mxu0 0
        %1610 = vmatprep.subr.bf16.mxu0 0
        %1611 = vmatpush1.bf16.msra.mxu0 0
        %1612 = vmatprep.subr.bf16.mxu0 0
        %1613 = vmatpush1.bf16.msra.mxu0 0
        %1614 = vmatprep.mubr.bf16.mxu0 0
        %1615 = vmatmul.mubr.bf16.gmra.mrb[0].mxu0 %v1580
        %v1616 = vpop.f32.mrb[0].mxu0
        %v1617 = vadd.f32 0.0, %v1616
        %v1618 = vpop.f32.mrb[0].mxu0
        %v1619 = vpop.f32.mrb[0].mxu0
        %v1620 = vpop.f32.mrb[0].mxu0
        %1621 = vdwg.mxu0
        %v1622 = vld [vmem:[#allocation13] sm:$0xf]
        %v1623 = vld [vmem:[#allocation13 + $0x4] sm:$0xf]
        %v1624 = vld [vmem:[#allocation13 + $0x8] sm:$0xf]
        %v1625 = vld [vmem:[#allocation13 + $0xc] sm:$0xf]
        %v1630 = vunpack.c.l.b16 %v1622
        %v1631 = vunpack.c.l.b16 %v1623
        %v1632 = vunpack.c.l.b16 %v1624
        %v1633 = vunpack.c.l.b16 %v1625
        %v1634 = vpack.c.b16 %v1631, %v1630
        %v1635 = vpack.c.b16 %v1633, %v1632
        %1638 = vmatprep.subr.bf16.mxu0 0
        %1639 = vmatpush1.bf16.msra.mxu0 %v1634
        %1640 = vmatprep.subr.bf16.mxu0 0
        %1641 = vmatpush1.bf16.msra.mxu0 %v1635
        %1642 = vmatprep.subr.bf16.mxu0 0
        %1643 = vmatpush1.bf16.msra.mxu0 0
        %1644 = vmatprep.subr.bf16.mxu0 0
        %1645 = vmatpush1.bf16.msra.mxu0 0
        %1646 = vmatprep.subr.bf16.mxu0 0
        %1647 = vmatpush1.bf16.msra.mxu0 0
        %1648 = vmatprep.subr.bf16.mxu0 0
        %1649 = vmatpush1.bf16.msra.mxu0 0
        %1650 = vmatprep.subr.bf16.mxu0 0
        %1651 = vmatpush1.bf16.msra.mxu0 0
        %1652 = vmatprep.subr.bf16.mxu0 0
        %1653 = vmatpush1.bf16.msra.mxu0 0
        %1654 = vmatprep.subr.bf16.mxu0 0
        %1655 = vmatpush1.bf16.msra.mxu0 0
        %1656 = vmatprep.subr.bf16.mxu0 0
        %1657 = vmatpush1.bf16.msra.mxu0 0
        %1658 = vmatprep.subr.bf16.mxu0 0
        %1659 = vmatpush1.bf16.msra.mxu0 0
        %1660 = vmatprep.subr.bf16.mxu0 0
        %1661 = vmatpush1.bf16.msra.mxu0 0
        %1662 = vmatprep.subr.bf16.mxu0 0
        %1663 = vmatpush1.bf16.msra.mxu0 0
        %1664 = vmatprep.subr.bf16.mxu0 0
        %1665 = vmatpush1.bf16.msra.mxu0 0
        %1666 = vmatprep.subr.bf16.mxu0 0
        %1667 = vmatpush1.bf16.msra.mxu0 0
        %1668 = vmatprep.subr.bf16.mxu0 0
        %1669 = vmatpush1.bf16.msra.mxu0 0
        %1670 = vmatprep.mubr.bf16.mxu0 0
        %1671 = vmatmul.mubr.bf16.gmra.mrb[0].mxu0 %v1580
        %v1672 = vpop.f32.mrb[0].mxu0
        %v1673 = vadd.f32 0.0, %v1672
        %v1674 = vpop.f32.mrb[0].mxu0
        %v1675 = vpop.f32.mrb[0].mxu0
        %v1676 = vpop.f32.mrb[0].mxu0
        %1677 = vdwg.mxu0
        %v1678 = vpack.c.bf16 %v1557, %v1557
        %v1679 = vpack.c.bf16 %v1617, %v1617
        %v1680 = vpack.c.bf16 %v1673, %v1673
        %v1682 = vsel %vm944, %v1678, 0
        %v1685 = vsel %vm944, %v1679, 0
        %1687 = vmatprep.subr.bf16.mxu0 0
        %1688 = vmatpush1.bf16.xpose.msra.mxu0 %v1685
        %1689 = vmatprep.subr.bf16.mxu0 0
        %1690 = vmatpush1.bf16.xpose.msra.mxu0 0
        %1691 = vmatprep.subr.bf16.mxu0 0
        %1692 = vmatpush1.bf16.xpose.msra.mxu0 0
        %1693 = vmatprep.subr.bf16.mxu0 0
        %1694 = vmatpush1.bf16.xpose.msra.mxu0 0
        %1695 = vmatprep.subr.bf16.mxu0 0
        %1696 = vmatpush1.bf16.xpose.msra.mxu0 0
        %1697 = vmatprep.subr.bf16.mxu0 0
        %1698 = vmatpush1.bf16.xpose.msra.mxu0 0
        %1699 = vmatprep.subr.bf16.mxu0 0
        %1700 = vmatpush1.bf16.xpose.msra.mxu0 0
        %1701 = vmatprep.subr.bf16.mxu0 0
        %1702 = vmatpush1.bf16.xpose.msra.mxu0 0
        %1703 = vmatprep.subr.bf16.mxu0 0
        %1704 = vmatpush1.bf16.xpose.msra.mxu0 0
        %1705 = vmatprep.subr.bf16.mxu0 0
        %1706 = vmatpush1.bf16.xpose.msra.mxu0 0
        %1707 = vmatprep.subr.bf16.mxu0 0
        %1708 = vmatpush1.bf16.xpose.msra.mxu0 0
        %1709 = vmatprep.subr.bf16.mxu0 0
        %1710 = vmatpush1.bf16.xpose.msra.mxu0 0
        %1711 = vmatprep.subr.bf16.mxu0 0
        %1712 = vmatpush1.bf16.xpose.msra.mxu0 0
        %1713 = vmatprep.subr.bf16.mxu0 0
        %1714 = vmatpush1.bf16.xpose.msra.mxu0 0
        %1715 = vmatprep.subr.bf16.mxu0 0
        %1716 = vmatpush1.bf16.xpose.msra.mxu0 0
        %1717 = vmatprep.subr.bf16.mxu0 0
        %1718 = vmatpush1.bf16.xpose.msra.mxu0 0
        %1719 = vmatprep.mubr.bf16.mxu0 0
        %1720 = vmatmul.mubr.bf16.gmra.mrb[0].mxu0 %v1682
        %v1721 = vpop.f32.mrb[0].mxu0
        %v1722 = vadd.f32 0.0, %v1721
        %v1723 = vpop.f32.mrb[0].mxu0
        %v1724 = vpop.f32.mrb[0].mxu0
        %v1725 = vpop.f32.mrb[0].mxu0
        %1726 = vdwg.mxu0
        %v1727 = vmul.f32 %v1722, 0.35355338
        %v1728 = vsel %vm1501, 1, 0
        %vm1729 = vcmp.eq.s32.totalorder %v1728, 1
        %v1730 = vsel %vm1729, %v1727, -1000000.0
        %v1731 = vsel %vm944, %v1730, -inf
        %1732 = vmax.xlane.f32.xlu0 %v1731
        %v1733 = vpop.xlane.xlu0 %1732
        %v1734 = vsub.f32 %v1730, %v1733
        %v1735 = vmul.f32 %v1734, 1.442695
        %v1736 = vpow.pop %v1735
        %v1737 = vsel %vm944, %v1736, 0.0
        %1738 = vadd.xlane.f32.xlu0 %v1737
        %v1739 = vpop.xlane.xlu0 %1738
        %v1740 = vrcp.pop %v1739
        %v1741 = vmul.f32 %v1736, %v1740
        %v1742 = vpack.c.bf16 %v1741, %v1741
        %v1744 = vsel %vm944, %v1742, 0
        %v1747 = vsel %vm1008, %v1680, 0
        %1749 = vmatprep.subr.bf16.mxu0 0
        %1750 = vmatpush1.bf16.msra.mxu0 %v1747
        %1751 = vmatprep.subr.bf16.mxu0 0
        %1752 = vmatpush1.bf16.msra.mxu0 0
        %1753 = vmatprep.subr.bf16.mxu0 0
        %1754 = vmatpush1.bf16.msra.mxu0 0
        %1755 = vmatprep.subr.bf16.mxu0 0
        %1756 = vmatpush1.bf16.msra.mxu0 0
        %1757 = vmatprep.subr.bf16.mxu0 0
        %1758 = vmatpush1.bf16.msra.mxu0 0
        %1759 = vmatprep.subr.bf16.mxu0 0
        %1760 = vmatpush1.bf16.msra.mxu0 0
        %1761 = vmatprep.subr.bf16.mxu0 0
        %1762 = vmatpush1.bf16.msra.mxu0 0
        %1763 = vmatprep.subr.bf16.mxu0 0
        %1764 = vmatpush1.bf16.msra.mxu0 0
        %1765 = vmatprep.subr.bf16.mxu0 0
        %1766 = vmatpush1.bf16.msra.mxu0 0
        %1767 = vmatprep.subr.bf16.mxu0 0
        %1768 = vmatpush1.bf16.msra.mxu0 0
        %1769 = vmatprep.subr.bf16.mxu0 0
        %1770 = vmatpush1.bf16.msra.mxu0 0
        %1771 = vmatprep.subr.bf16.mxu0 0
        %1772 = vmatpush1.bf16.msra.mxu0 0
        %1773 = vmatprep.subr.bf16.mxu0 0
        %1774 = vmatpush1.bf16.msra.mxu0 0
        %1775 = vmatprep.subr.bf16.mxu0 0
        %1776 = vmatpush1.bf16.msra.mxu0 0
        %1777 = vmatprep.subr.bf16.mxu0 0
        %1778 = vmatpush1.bf16.msra.mxu0 0
        %1779 = vmatprep.subr.bf16.mxu0 0
        %1780 = vmatpush1.bf16.msra.mxu0 0
        %1781 = vmatprep.mubr.bf16.mxu0 0
        %1782 = vmatmul.mubr.bf16.gmra.mrb[0].mxu0 %v1744
        %v1783 = vpop.f32.mrb[0].mxu0
        %v1784 = vadd.f32 0.0, %v1783
        %v1785 = vpop.f32.mrb[0].mxu0
        %v1786 = vpop.f32.mrb[0].mxu0
        %v1787 = vpop.f32.mrb[0].mxu0
        %1788 = vdwg.mxu0
        %1790 = vrot.lane.b32.xlu0 %v1678, 120
        %v1791 = vpop.permute.xlu0 %1790
        %1793 = vrot.lane.b32.xlu0 %v1679, 120
        %v1794 = vpop.permute.xlu0 %1793
        %v1796 = vsel %vm944, %v1791, 0
        %v1799 = vsel %vm944, %v1794, 0
        %1801 = vmatprep.subr.bf16.mxu0 0
        %1802 = vmatpush1.bf16.xpose.msra.mxu0 %v1799
        %1803 = vmatprep.subr.bf16.mxu0 0
        %1804 = vmatpush1.bf16.xpose.msra.mxu0 0
        %1805 = vmatprep.subr.bf16.mxu0 0
        %1806 = vmatpush1.bf16.xpose.msra.mxu0 0
        %1807 = vmatprep.subr.bf16.mxu0 0
        %1808 = vmatpush1.bf16.xpose.msra.mxu0 0
        %1809 = vmatprep.subr.bf16.mxu0 0
        %1810 = vmatpush1.bf16.xpose.msra.mxu0 0
        %1811 = vmatprep.subr.bf16.mxu0 0
        %1812 = vmatpush1.bf16.xpose.msra.mxu0 0
        %1813 = vmatprep.subr.bf16.mxu0 0
        %1814 = vmatpush1.bf16.xpose.msra.mxu0 0
        %1815 = vmatprep.subr.bf16.mxu0 0
        %1816 = vmatpush1.bf16.xpose.msra.mxu0 0
        %1817 = vmatprep.subr.bf16.mxu0 0
        %1818 = vmatpush1.bf16.xpose.msra.mxu0 0
        %1819 = vmatprep.subr.bf16.mxu0 0
        %1820 = vmatpush1.bf16.xpose.msra.mxu0 0
        %1821 = vmatprep.subr.bf16.mxu0 0
        %1822 = vmatpush1.bf16.xpose.msra.mxu0 0
        %1823 = vmatprep.subr.bf16.mxu0 0
        %1824 = vmatpush1.bf16.xpose.msra.mxu0 0
        %1825 = vmatprep.subr.bf16.mxu0 0
        %1826 = vmatpush1.bf16.xpose.msra.mxu0 0
        %1827 = vmatprep.subr.bf16.mxu0 0
        %1828 = vmatpush1.bf16.xpose.msra.mxu0 0
        %1829 = vmatprep.subr.bf16.mxu0 0
        %1830 = vmatpush1.bf16.xpose.msra.mxu0 0
        %1831 = vmatprep.subr.bf16.mxu0 0
        %1832 = vmatpush1.bf16.xpose.msra.mxu0 0
        %1833 = vmatprep.mubr.bf16.mxu0 0
        %1834 = vmatmul.mubr.bf16.gmra.mrb[0].mxu0 %v1796
        %v1835 = vpop.f32.mrb[0].mxu0
        %v1836 = vadd.f32 0.0, %v1835
        %v1837 = vpop.f32.mrb[0].mxu0
        %v1838 = vpop.f32.mrb[0].mxu0
        %v1839 = vpop.f32.mrb[0].mxu0
        %1840 = vdwg.mxu0
        %v1841 = vmul.f32 %v1836, 0.35355338
        %v1842 = vsel %vm1729, %v1841, -1000000.0
        %v1843 = vsel %vm944, %v1842, -inf
        %1844 = vmax.xlane.f32.xlu0 %v1843
        %v1845 = vpop.xlane.xlu0 %1844
        %v1846 = vsub.f32 %v1842, %v1845
        %v1847 = vmul.f32 %v1846, 1.442695
        %v1848 = vpow.pop %v1847
        %v1849 = vsel %vm944, %v1848, 0.0
        %1850 = vadd.xlane.f32.xlu0 %v1849
        %v1851 = vpop.xlane.xlu0 %1850
        %v1852 = vrcp.pop %v1851
        %v1853 = vmul.f32 %v1848, %v1852
        %v1854 = vpack.c.bf16 %v1853, %v1853
        %1856 = vrot.lane.b32.xlu0 %v1680, 120
        %v1857 = vpop.permute.xlu0 %1856
        %v1859 = vsel %vm944, %v1854, 0
        %v1862 = vsel %vm1008, %v1857, 0
        %1864 = vmatprep.subr.bf16.mxu0 0
        %1865 = vmatpush1.bf16.msra.mxu0 %v1862
        %1866 = vmatprep.subr.bf16.mxu0 0
        %1867 = vmatpush1.bf16.msra.mxu0 0
        %1868 = vmatprep.subr.bf16.mxu0 0
        %1869 = vmatpush1.bf16.msra.mxu0 0
        %1870 = vmatprep.subr.bf16.mxu0 0
        %1871 = vmatpush1.bf16.msra.mxu0 0
        %1872 = vmatprep.subr.bf16.mxu0 0
        %1873 = vmatpush1.bf16.msra.mxu0 0
        %1874 = vmatprep.subr.bf16.mxu0 0
        %1875 = vmatpush1.bf16.msra.mxu0 0
        %1876 = vmatprep.subr.bf16.mxu0 0
        %1877 = vmatpush1.bf16.msra.mxu0 0
        %1878 = vmatprep.subr.bf16.mxu0 0
        %1879 = vmatpush1.bf16.msra.mxu0 0
        %1880 = vmatprep.subr.bf16.mxu0 0
        %1881 = vmatpush1.bf16.msra.mxu0 0
        %1882 = vmatprep.subr.bf16.mxu0 0
        %1883 = vmatpush1.bf16.msra.mxu0 0
        %1884 = vmatprep.subr.bf16.mxu0 0
        %1885 = vmatpush1.bf16.msra.mxu0 0
        %1886 = vmatprep.subr.bf16.mxu0 0
        %1887 = vmatpush1.bf16.msra.mxu0 0
        %1888 = vmatprep.subr.bf16.mxu0 0
        %1889 = vmatpush1.bf16.msra.mxu0 0
        %1890 = vmatprep.subr.bf16.mxu0 0
        %1891 = vmatpush1.bf16.msra.mxu0 0
        %1892 = vmatprep.subr.bf16.mxu0 0
        %1893 = vmatpush1.bf16.msra.mxu0 0
        %1894 = vmatprep.subr.bf16.mxu0 0
        %1895 = vmatpush1.bf16.msra.mxu0 0
        %1896 = vmatprep.mubr.bf16.mxu0 0
        %1897 = vmatmul.mubr.bf16.gmra.mrb[0].mxu0 %v1859
        %v1898 = vpop.f32.mrb[0].mxu0
        %v1899 = vadd.f32 0.0, %v1898
        %v1900 = vpop.f32.mrb[0].mxu0
        %v1901 = vpop.f32.mrb[0].mxu0
        %v1902 = vpop.f32.mrb[0].mxu0
        %1903 = vdwg.mxu0
        %1904 = vrot.lane.b32.xlu0 %v1678, 112
        %v1905 = vpop.permute.xlu0 %1904
        %1906 = vrot.lane.b32.xlu0 %v1679, 112
        %v1907 = vpop.permute.xlu0 %1906
        %v1909 = vsel %vm944, %v1905, 0
        %v1912 = vsel %vm944, %v1907, 0
        %1914 = vmatprep.subr.bf16.mxu0 0
        %1915 = vmatpush1.bf16.xpose.msra.mxu0 %v1912
        %1916 = vmatprep.subr.bf16.mxu0 0
        %1917 = vmatpush1.bf16.xpose.msra.mxu0 0
        %1918 = vmatprep.subr.bf16.mxu0 0
        %1919 = vmatpush1.bf16.xpose.msra.mxu0 0
        %1920 = vmatprep.subr.bf16.mxu0 0
        %1921 = vmatpush1.bf16.xpose.msra.mxu0 0
        %1922 = vmatprep.subr.bf16.mxu0 0
        %1923 = vmatpush1.bf16.xpose.msra.mxu0 0
        %1924 = vmatprep.subr.bf16.mxu0 0
        %1925 = vmatpush1.bf16.xpose.msra.mxu0 0
        %1926 = vmatprep.subr.bf16.mxu0 0
        %1927 = vmatpush1.bf16.xpose.msra.mxu0 0
        %1928 = vmatprep.subr.bf16.mxu0 0
        %1929 = vmatpush1.bf16.xpose.msra.mxu0 0
        %1930 = vmatprep.subr.bf16.mxu0 0
        %1931 = vmatpush1.bf16.xpose.msra.mxu0 0
        %1932 = vmatprep.subr.bf16.mxu0 0
        %1933 = vmatpush1.bf16.xpose.msra.mxu0 0
        %1934 = vmatprep.subr.bf16.mxu0 0
        %1935 = vmatpush1.bf16.xpose.msra.mxu0 0
        %1936 = vmatprep.subr.bf16.mxu0 0
        %1937 = vmatpush1.bf16.xpose.msra.mxu0 0
        %1938 = vmatprep.subr.bf16.mxu0 0
        %1939 = vmatpush1.bf16.xpose.msra.mxu0 0
        %1940 = vmatprep.subr.bf16.mxu0 0
        %1941 = vmatpush1.bf16.xpose.msra.mxu0 0
        %1942 = vmatprep.subr.bf16.mxu0 0
        %1943 = vmatpush1.bf16.xpose.msra.mxu0 0
        %1944 = vmatprep.subr.bf16.mxu0 0
        %1945 = vmatpush1.bf16.xpose.msra.mxu0 0
        %1946 = vmatprep.mubr.bf16.mxu0 0
        %1947 = vmatmul.mubr.bf16.gmra.mrb[0].mxu0 %v1909
        %v1948 = vpop.f32.mrb[0].mxu0
        %v1949 = vadd.f32 0.0, %v1948
        %v1950 = vpop.f32.mrb[0].mxu0
        %v1951 = vpop.f32.mrb[0].mxu0
        %v1952 = vpop.f32.mrb[0].mxu0
        %1953 = vdwg.mxu0
        %v1954 = vmul.f32 %v1949, 0.35355338
        %v1955 = vsel %vm1729, %v1954, -1000000.0
        %v1956 = vsel %vm944, %v1955, -inf
        %1957 = vmax.xlane.f32.xlu0 %v1956
        %v1958 = vpop.xlane.xlu0 %1957
        %v1959 = vsub.f32 %v1955, %v1958
        %v1960 = vmul.f32 %v1959, 1.442695
        %v1961 = vpow.pop %v1960
        %v1962 = vsel %vm944, %v1961, 0.0
        %1963 = vadd.xlane.f32.xlu0 %v1962
        %v1964 = vpop.xlane.xlu0 %1963
        %v1965 = vrcp.pop %v1964
        %v1966 = vmul.f32 %v1961, %v1965
        %v1967 = vpack.c.bf16 %v1966, %v1966
        %1968 = vrot.lane.b32.xlu0 %v1680, 112
        %v1969 = vpop.permute.xlu0 %1968
        %v1971 = vsel %vm944, %v1967, 0
        %v1974 = vsel %vm1008, %v1969, 0
        %1976 = vmatprep.subr.bf16.mxu0 0
        %1977 = vmatpush1.bf16.msra.mxu0 %v1974
        %1978 = vmatprep.subr.bf16.mxu0 0
        %1979 = vmatpush1.bf16.msra.mxu0 0
        %1980 = vmatprep.subr.bf16.mxu0 0
        %1981 = vmatpush1.bf16.msra.mxu0 0
        %1982 = vmatprep.subr.bf16.mxu0 0
        %1983 = vmatpush1.bf16.msra.mxu0 0
        %1984 = vmatprep.subr.bf16.mxu0 0
        %1985 = vmatpush1.bf16.msra.mxu0 0
        %1986 = vmatprep.subr.bf16.mxu0 0
        %1987 = vmatpush1.bf16.msra.mxu0 0
        %1988 = vmatprep.subr.bf16.mxu0 0
        %1989 = vmatpush1.bf16.msra.mxu0 0
        %1990 = vmatprep.subr.bf16.mxu0 0
        %1991 = vmatpush1.bf16.msra.mxu0 0
        %1992 = vmatprep.subr.bf16.mxu0 0
        %1993 = vmatpush1.bf16.msra.mxu0 0
        %1994 = vmatprep.subr.bf16.mxu0 0
        %1995 = vmatpush1.bf16.msra.mxu0 0
        %1996 = vmatprep.subr.bf16.mxu0 0
        %1997 = vmatpush1.bf16.msra.mxu0 0
        %1998 = vmatprep.subr.bf16.mxu0 0
        %1999 = vmatpush1.bf16.msra.mxu0 0
        %2000 = vmatprep.subr.bf16.mxu0 0
        %2001 = vmatpush1.bf16.msra.mxu0 0
        %2002 = vmatprep.subr.bf16.mxu0 0
        %2003 = vmatpush1.bf16.msra.mxu0 0
        %2004 = vmatprep.subr.bf16.mxu0 0
        %2005 = vmatpush1.bf16.msra.mxu0 0
        %2006 = vmatprep.subr.bf16.mxu0 0
        %2007 = vmatpush1.bf16.msra.mxu0 0
        %2008 = vmatprep.mubr.bf16.mxu0 0
        %2009 = vmatmul.mubr.bf16.gmra.mrb[0].mxu0 %v1971
        %v2010 = vpop.f32.mrb[0].mxu0
        %v2011 = vadd.f32 0.0, %v2010
        %v2012 = vpop.f32.mrb[0].mxu0
        %v2013 = vpop.f32.mrb[0].mxu0
        %v2014 = vpop.f32.mrb[0].mxu0
        %2015 = vdwg.mxu0
        %2016 = vrot.lane.b32.xlu0 %v1678, 104
        %v2017 = vpop.permute.xlu0 %2016
        %2018 = vrot.lane.b32.xlu0 %v1679, 104
        %v2019 = vpop.permute.xlu0 %2018
        %v2021 = vsel %vm944, %v2017, 0
        %v2024 = vsel %vm944, %v2019, 0
        %2026 = vmatprep.subr.bf16.mxu0 0
        %2027 = vmatpush1.bf16.xpose.msra.mxu0 %v2024
        %2028 = vmatprep.subr.bf16.mxu0 0
        %2029 = vmatpush1.bf16.xpose.msra.mxu0 0
        %2030 = vmatprep.subr.bf16.mxu0 0
        %2031 = vmatpush1.bf16.xpose.msra.mxu0 0
        %2032 = vmatprep.subr.bf16.mxu0 0
        %2033 = vmatpush1.bf16.xpose.msra.mxu0 0
        %2034 = vmatprep.subr.bf16.mxu0 0
        %2035 = vmatpush1.bf16.xpose.msra.mxu0 0
        %2036 = vmatprep.subr.bf16.mxu0 0
        %2037 = vmatpush1.bf16.xpose.msra.mxu0 0
        %2038 = vmatprep.subr.bf16.mxu0 0
        %2039 = vmatpush1.bf16.xpose.msra.mxu0 0
        %2040 = vmatprep.subr.bf16.mxu0 0
        %2041 = vmatpush1.bf16.xpose.msra.mxu0 0
        %2042 = vmatprep.subr.bf16.mxu0 0
        %2043 = vmatpush1.bf16.xpose.msra.mxu0 0
        %2044 = vmatprep.subr.bf16.mxu0 0
        %2045 = vmatpush1.bf16.xpose.msra.mxu0 0
        %2046 = vmatprep.subr.bf16.mxu0 0
        %2047 = vmatpush1.bf16.xpose.msra.mxu0 0
        %2048 = vmatprep.subr.bf16.mxu0 0
        %2049 = vmatpush1.bf16.xpose.msra.mxu0 0
        %2050 = vmatprep.subr.bf16.mxu0 0
        %2051 = vmatpush1.bf16.xpose.msra.mxu0 0
        %2052 = vmatprep.subr.bf16.mxu0 0
        %2053 = vmatpush1.bf16.xpose.msra.mxu0 0
        %2054 = vmatprep.subr.bf16.mxu0 0
        %2055 = vmatpush1.bf16.xpose.msra.mxu0 0
        %2056 = vmatprep.subr.bf16.mxu0 0
        %2057 = vmatpush1.bf16.xpose.msra.mxu0 0
        %2058 = vmatprep.mubr.bf16.mxu0 0
        %2059 = vmatmul.mubr.bf16.gmra.mrb[0].mxu0 %v2021
        %v2060 = vpop.f32.mrb[0].mxu0
        %v2061 = vadd.f32 0.0, %v2060
        %v2062 = vpop.f32.mrb[0].mxu0
        %v2063 = vpop.f32.mrb[0].mxu0
        %v2064 = vpop.f32.mrb[0].mxu0
        %2065 = vdwg.mxu0
        %v2066 = vmul.f32 %v2061, 0.35355338
        %v2067 = vsel %vm1729, %v2066, -1000000.0
        %v2068 = vsel %vm944, %v2067, -inf
        %2069 = vmax.xlane.f32.xlu0 %v2068
        %v2070 = vpop.xlane.xlu0 %2069
        %v2071 = vsub.f32 %v2067, %v2070
        %v2072 = vmul.f32 %v2071, 1.442695
        %v2073 = vpow.pop %v2072
        %v2074 = vsel %vm944, %v2073, 0.0
        %2075 = vadd.xlane.f32.xlu0 %v2074
        %v2076 = vpop.xlane.xlu0 %2075
        %v2077 = vrcp.pop %v2076
        %v2078 = vmul.f32 %v2073, %v2077
        %v2079 = vpack.c.bf16 %v2078, %v2078
        %2080 = vrot.lane.b32.xlu0 %v1680, 104
        %v2081 = vpop.permute.xlu0 %2080
        %v2083 = vsel %vm944, %v2079, 0
        %v2086 = vsel %vm1008, %v2081, 0
        %2088 = vmatprep.subr.bf16.mxu0 0
        %2089 = vmatpush1.bf16.msra.mxu0 %v2086
        %2090 = vmatprep.subr.bf16.mxu0 0
        %2091 = vmatpush1.bf16.msra.mxu0 0
        %2092 = vmatprep.subr.bf16.mxu0 0
        %2093 = vmatpush1.bf16.msra.mxu0 0
        %2094 = vmatprep.subr.bf16.mxu0 0
        %2095 = vmatpush1.bf16.msra.mxu0 0
        %2096 = vmatprep.subr.bf16.mxu0 0
        %2097 = vmatpush1.bf16.msra.mxu0 0
        %2098 = vmatprep.subr.bf16.mxu0 0
        %2099 = vmatpush1.bf16.msra.mxu0 0
        %2100 = vmatprep.subr.bf16.mxu0 0
        %2101 = vmatpush1.bf16.msra.mxu0 0
        %2102 = vmatprep.subr.bf16.mxu0 0
        %2103 = vmatpush1.bf16.msra.mxu0 0
        %2104 = vmatprep.subr.bf16.mxu0 0
        %2105 = vmatpush1.bf16.msra.mxu0 0
        %2106 = vmatprep.subr.bf16.mxu0 0
        %2107 = vmatpush1.bf16.msra.mxu0 0
        %2108 = vmatprep.subr.bf16.mxu0 0
        %2109 = vmatpush1.bf16.msra.mxu0 0
        %2110 = vmatprep.subr.bf16.mxu0 0
        %2111 = vmatpush1.bf16.msra.mxu0 0
        %2112 = vmatprep.subr.bf16.mxu0 0
        %2113 = vmatpush1.bf16.msra.mxu0 0
        %2114 = vmatprep.subr.bf16.mxu0 0
        %2115 = vmatpush1.bf16.msra.mxu0 0
        %2116 = vmatprep.subr.bf16.mxu0 0
        %2117 = vmatpush1.bf16.msra.mxu0 0
        %2118 = vmatprep.subr.bf16.mxu0 0
        %2119 = vmatpush1.bf16.msra.mxu0 0
        %2120 = vmatprep.mubr.bf16.mxu0 0
        %2121 = vmatmul.mubr.bf16.gmra.mrb[0].mxu0 %v2083
        %v2122 = vpop.f32.mrb[0].mxu0
        %v2123 = vadd.f32 0.0, %v2122
        %v2124 = vpop.f32.mrb[0].mxu0
        %v2125 = vpop.f32.mrb[0].mxu0
        %v2126 = vpop.f32.mrb[0].mxu0
        %2127 = vdwg.mxu0
        %2129 = vrot.lane.b32.xlu0 %v1899, 8
        %v2130 = vpop.permute.xlu0 %2129
        %2133 = vrot.lane.b32.xlu0 %v2011, 16
        %v2134 = vpop.permute.xlu0 %2133
        %2137 = vrot.lane.b32.xlu0 %v2123, 24
        %v2138 = vpop.permute.xlu0 %2137
        %v2140 = vsel %vm944, %v1784, %v2130
        %v2141 = vsel %vm1404, %v2140, %v2134
        %v2142 = vsel %vm1406, %v2141, %v2138
        %v2143 = vpack.c.bf16 %v2142, %v2142
        %v2144 = vld [vmem:[#allocation15] sm:$0xf]
        %v2145 = vld [vmem:[#allocation15 + $0x4] sm:$0xf]
        %v2146 = vld [vmem:[#allocation15 + $0x8] sm:$0xf]
        %v2147 = vld [vmem:[#allocation15 + $0xc] sm:$0xf]
        %v2152 = vunpack.c.l.b16 %v2144
        %v2153 = vunpack.c.l.b16 %v2145
        %v2154 = vunpack.c.l.b16 %v2146
        %v2155 = vunpack.c.l.b16 %v2147
        %v2156 = vpack.c.b16 %v2153, %v2152
        %v2157 = vpack.c.b16 %v2155, %v2154
        %v2161 = vsel %vm785, %v2143, 0
        %2163 = vmatprep.subr.bf16.mxu0 0
        %2164 = vmatpush1.bf16.msra.mxu0 %v2156
        %2165 = vmatprep.subr.bf16.mxu0 0
        %2166 = vmatpush1.bf16.msra.mxu0 %v2157
        %2167 = vmatprep.subr.bf16.mxu0 0
        %2168 = vmatpush1.bf16.msra.mxu0 0
        %2169 = vmatprep.subr.bf16.mxu0 0
        %2170 = vmatpush1.bf16.msra.mxu0 0
        %2171 = vmatprep.subr.bf16.mxu0 0
        %2172 = vmatpush1.bf16.msra.mxu0 0
        %2173 = vmatprep.subr.bf16.mxu0 0
        %2174 = vmatpush1.bf16.msra.mxu0 0
        %2175 = vmatprep.subr.bf16.mxu0 0
        %2176 = vmatpush1.bf16.msra.mxu0 0
        %2177 = vmatprep.subr.bf16.mxu0 0
        %2178 = vmatpush1.bf16.msra.mxu0 0
        %2179 = vmatprep.subr.bf16.mxu0 0
        %2180 = vmatpush1.bf16.msra.mxu0 0
        %2181 = vmatprep.subr.bf16.mxu0 0
        %2182 = vmatpush1.bf16.msra.mxu0 0
        %2183 = vmatprep.subr.bf16.mxu0 0
        %2184 = vmatpush1.bf16.msra.mxu0 0
        %2185 = vmatprep.subr.bf16.mxu0 0
        %2186 = vmatpush1.bf16.msra.mxu0 0
        %2187 = vmatprep.subr.bf16.mxu0 0
        %2188 = vmatpush1.bf16.msra.mxu0 0
        %2189 = vmatprep.subr.bf16.mxu0 0
        %2190 = vmatpush1.bf16.msra.mxu0 0
        %2191 = vmatprep.subr.bf16.mxu0 0
        %2192 = vmatpush1.bf16.msra.mxu0 0
        %2193 = vmatprep.subr.bf16.mxu0 0
        %2194 = vmatpush1.bf16.msra.mxu0 0
        %2195 = vmatprep.mubr.bf16.mxu0 0
        %2196 = vmatmul.mubr.bf16.gmra.mrb[0].mxu0 %v2161
        %v2197 = vpop.f32.mrb[0].mxu0
        %v2198 = vadd.f32 0.0, %v2197
        %v2199 = vpop.f32.mrb[0].mxu0
        %v2200 = vpop.f32.mrb[0].mxu0
        %v2201 = vpop.f32.mrb[0].mxu0
        %2202 = vdwg.mxu0
        %v2203 = vadd.f32 %v1498, %v2198
        %v2204 = vld [vmem:[#allocation16] sm:$0x1]
        %v2205 = vld [vmem:[%s14] sm:$0x1]
        %v2206 = vsel %vm785, %v2203, 0.0
        %2207 = vadd.xlane.f32.xlu0 %v2206
        %v2208 = vpop.xlane.xlu0 %2207
        %v2209 = vmul.f32 %v2208, %v1474
        %v2210 = vsub.f32 %v2203, %v2209
        %v2211 = vmul.f32 %v2210, %v2210
        %v2212 = vsel %vm785, %v2211, 0.0
        %2213 = vadd.xlane.f32.xlu0 %v2212
        %v2214 = vpop.xlane.xlu0 %2213
        %v2215 = vmul.f32 %v2214, %v1474
        %v2216 = vadd.f32 %v2215, 1e-05
        %v2217 = vrsqrt.pop %v2216
        %v2218 = vmul.f32 %v2210, %v2217
        %v2220 = vlaneseq
        %v2221 = vshrl.u32 %v2220, 7
        %v2222 = vsub.s32 0, %v2221
        %v2223 = vrot.slane %v2204, %v2222
        %v2225 = vmul.f32 %v2218, %v2223
        %v2227 = vlaneseq
        %v2228 = vshrl.u32 %v2227, 7
        %v2229 = vsub.s32 0, %v2228
        %v2230 = vrot.slane %v2205, %v2229
        %v2232 = vadd.f32 %v2225, %v2230
        %v2233 = vpack.c.bf16 %v2232, %v2232
        %v2234 = vld [vmem:[%s15] sm:$0xf]
        %v2235 = vld [vmem:[%s15 + $0x4] sm:$0xf]
        %v2236 = vld [vmem:[%s15 + $0x8] sm:$0xf]
        %v2237 = vld [vmem:[%s15 + $0xc] sm:$0xf]
        %v2238 = vld [vmem:[%s16] sm:$0x1]
        %v2240 = vlaneseq
        %v2241 = vshrl.u32 %v2240, 7
        %v2242 = vsub.s32 0, %v2241
        %v2243 = vrot.slane %v2238, %v2242
        %v2249 = vunpack.c.l.b16 %v2234
        %v2250 = vunpack.c.l.b16 %v2235
        %v2251 = vunpack.c.l.b16 %v2236
        %v2252 = vunpack.c.l.b16 %v2237
        %v2253 = vpack.c.b16 %v2250, %v2249
        %v2254 = vpack.c.b16 %v2252, %v2251
        %v2258 = vsel %vm785, %v2233, 0
        %2260 = vmatprep.subr.bf16.mxu0 0
        %2261 = vmatpush1.bf16.msra.mxu0 %v2253
        %2262 = vmatprep.subr.bf16.mxu0 0
        %2263 = vmatpush1.bf16.msra.mxu0 %v2254
        %2264 = vmatprep.subr.bf16.mxu0 0
        %2265 = vmatpush1.bf16.msra.mxu0 0
        %2266 = vmatprep.subr.bf16.mxu0 0
        %2267 = vmatpush1.bf16.msra.mxu0 0
        %2268 = vmatprep.subr.bf16.mxu0 0
        %2269 = vmatpush1.bf16.msra.mxu0 0
        %2270 = vmatprep.subr.bf16.mxu0 0
        %2271 = vmatpush1.bf16.msra.mxu0 0
        %2272 = vmatprep.subr.bf16.mxu0 0
        %2273 = vmatpush1.bf16.msra.mxu0 0
        %2274 = vmatprep.subr.bf16.mxu0 0
        %2275 = vmatpush1.bf16.msra.mxu0 0
        %2276 = vmatprep.subr.bf16.mxu0 0
        %2277 = vmatpush1.bf16.msra.mxu0 0
        %2278 = vmatprep.subr.bf16.mxu0 0
        %2279 = vmatpush1.bf16.msra.mxu0 0
        %2280 = vmatprep.subr.bf16.mxu0 0
        %2281 = vmatpush1.bf16.msra.mxu0 0
        %2282 = vmatprep.subr.bf16.mxu0 0
        %2283 = vmatpush1.bf16.msra.mxu0 0
        %2284 = vmatprep.subr.bf16.mxu0 0
        %2285 = vmatpush1.bf16.msra.mxu0 0
        %2286 = vmatprep.subr.bf16.mxu0 0
        %2287 = vmatpush1.bf16.msra.mxu0 0
        %2288 = vmatprep.subr.bf16.mxu0 0
        %2289 = vmatpush1.bf16.msra.mxu0 0
        %2290 = vmatprep.subr.bf16.mxu0 0
        %2291 = vmatpush1.bf16.msra.mxu0 0
        %2292 = vmatprep.mubr.bf16.mxu0 0
        %2293 = vmatmul.mubr.bf16.gmra.mrb[0].mxu0 %v2258
        %v2294 = vpop.f32.mrb[0].mxu0
        %v2295 = vadd.f32 %v2243, %v2294
        %v2296 = vpop.f32.mrb[0].mxu0
        %v2297 = vpop.f32.mrb[0].mxu0
        %v2298 = vpop.f32.mrb[0].mxu0
        %2299 = vdwg.mxu0
        %v2300 = vmax.f32 %v2295, 0.0
        %v2301 = vpack.c.bf16 %v2300, %v2300
        %v2302 = vld [vmem:[%s17] sm:$0xf]
        %v2303 = vld [vmem:[%s17 + $0x4] sm:$0xf]
        %v2304 = vld [vmem:[%s17 + $0x8] sm:$0xf]
        %v2305 = vld [vmem:[%s17 + $0xc] sm:$0xf]
        %v2306 = vld [vmem:[%s17 + $0x10] sm:$0xf]
        %v2307 = vld [vmem:[%s17 + $0x14] sm:$0xf]
        %v2308 = vld [vmem:[%s17 + $0x18] sm:$0xf]
        %v2309 = vld [vmem:[%s17 + $0x1c] sm:$0xf]
        %v2310 = vld [vmem:[%s18] sm:$0x1]
        %v2312 = vlaneseq
        %v2313 = vshrl.u32 %v2312, 7
        %v2314 = vsub.s32 0, %v2313
        %v2315 = vrot.slane %v2310, %v2314
        %v2325 = vunpack.c.l.b16 %v2302
        %v2326 = vunpack.c.l.b16 %v2303
        %v2327 = vunpack.c.l.b16 %v2304
        %v2328 = vunpack.c.l.b16 %v2305
        %v2329 = vunpack.c.l.b16 %v2306
        %v2330 = vunpack.c.l.b16 %v2307
        %v2331 = vunpack.c.l.b16 %v2308
        %v2332 = vunpack.c.l.b16 %v2309
        %v2333 = vpack.c.b16 %v2326, %v2325
        %v2334 = vpack.c.b16 %v2328, %v2327
        %v2335 = vpack.c.b16 %v2330, %v2329
        %v2336 = vpack.c.b16 %v2332, %v2331
        %vm2341 = vcmask 523264
        %v2343 = vsel %vm2341, %v2301, 0
        %2345 = vmatprep.subr.bf16.mxu0 0
        %2346 = vmatpush1.bf16.msra.mxu0 %v2333
        %2347 = vmatprep.subr.bf16.mxu0 0
        %2348 = vmatpush1.bf16.msra.mxu0 %v2334
        %2349 = vmatprep.subr.bf16.mxu0 0
        %2350 = vmatpush1.bf16.msra.mxu0 %v2335
        %2351 = vmatprep.subr.bf16.mxu0 0
        %2352 = vmatpush1.bf16.msra.mxu0 %v2336
        %2353 = vmatprep.subr.bf16.mxu0 0
        %2354 = vmatpush1.bf16.msra.mxu0 0
        %2355 = vmatprep.subr.bf16.mxu0 0
        %2356 = vmatpush1.bf16.msra.mxu0 0
        %2357 = vmatprep.subr.bf16.mxu0 0
        %2358 = vmatpush1.bf16.msra.mxu0 0
        %2359 = vmatprep.subr.bf16.mxu0 0
        %2360 = vmatpush1.bf16.msra.mxu0 0
        %2361 = vmatprep.subr.bf16.mxu0 0
        %2362 = vmatpush1.bf16.msra.mxu0 0
        %2363 = vmatprep.subr.bf16.mxu0 0
        %2364 = vmatpush1.bf16.msra.mxu0 0
        %2365 = vmatprep.subr.bf16.mxu0 0
        %2366 = vmatpush1.bf16.msra.mxu0 0
        %2367 = vmatprep.subr.bf16.mxu0 0
        %2368 = vmatpush1.bf16.msra.mxu0 0
        %2369 = vmatprep.subr.bf16.mxu0 0
        %2370 = vmatpush1.bf16.msra.mxu0 0
        %2371 = vmatprep.subr.bf16.mxu0 0
        %2372 = vmatpush1.bf16.msra.mxu0 0
        %2373 = vmatprep.subr.bf16.mxu0 0
        %2374 = vmatpush1.bf16.msra.mxu0 0
        %2375 = vmatprep.subr.bf16.mxu0 0
        %2376 = vmatpush1.bf16.msra.mxu0 0
        %2377 = vmatprep.mubr.bf16.mxu0 0
        %2378 = vmatmul.mubr.bf16.gmra.mrb[0].mxu0 %v2343
        %v2379 = vpop.f32.mrb[0].mxu0
        %v2380 = vadd.f32 %v2315, %v2379
        %v2381 = vpop.f32.mrb[0].mxu0
        %v2382 = vpop.f32.mrb[0].mxu0
        %v2383 = vpop.f32.mrb[0].mxu0
        %2384 = vdwg.mxu0
        %v2385 = vadd.f32 %v2232, %v2380
        %v2386 = vld [vmem:[%s19] sm:$0x1]
        %v2387 = vld [vmem:[%s20] sm:$0x1]
        %v2388 = vsel %vm785, %v2385, 0.0
        %2389 = vadd.xlane.f32.xlu0 %v2388
        %v2390 = vpop.xlane.xlu0 %2389
        %v2391 = vmul.f32 %v2390, %v1474
        %v2392 = vsub.f32 %v2385, %v2391
        %v2393 = vmul.f32 %v2392, %v2392
        %v2394 = vsel %vm785, %v2393, 0.0
        %2395 = vadd.xlane.f32.xlu0 %v2394
        %v2396 = vpop.xlane.xlu0 %2395
        %v2397 = vmul.f32 %v2396, %v1474
        %v2398 = vadd.f32 %v2397, 1e-05
        %v2399 = vrsqrt.pop %v2398
        %v2400 = vmul.f32 %v2392, %v2399
        %v2402 = vlaneseq
        %v2403 = vshrl.u32 %v2402, 7
        %v2404 = vsub.s32 0, %v2403
        %v2405 = vrot.slane %v2386, %v2404
        %v2407 = vmul.f32 %v2400, %v2405
        %v2409 = vlaneseq
        %v2410 = vshrl.u32 %v2409, 7
        %v2411 = vsub.s32 0, %v2410
        %v2412 = vrot.slane %v2387, %v2411
        %v2414 = vadd.f32 %v2407, %v2412
        %2415 = vst.msk [vmem:[%s751] sm:$0xff] %vm785, %v2414
        %s2416 = sand.u32 %s482, 1
        %s2417 = scalar_lea.sflag [#allocation6], %s2416
        %s2418 = sand.u32 %s482, 1
        %s2419 = smul.addr %s2418, 8
        %s2420 = scalar_lea.vmem [#allocation18], %s2419
        // Predicated region
        $region133: #{tpu_custom_call.1} parent=99 // pred_check
          %p2421 = pneg %p492
        $region134: #{tpu_custom_call.1} parent=99 // pred_check_branch
          %2423 = sbr.rel (%p2421) target = $region136
        $region135: #{tpu_custom_call.1} parent=99 // pred_region
          %s2425 = ssub.s32 128, 128
          %2426 = vsyncadd %s2417, %s2425
          %s2427 = smul.addr %s44, 128
          %s2428 = scalar_lea.hbm %s21, %s2427
          %s2430 = sshll.u32 %s2420, 4
          %s2431 = int_to_ptr.vmem [resolvable:$true] %s2430
          %2433 = dma.vmem_to_hbm [thread:$0]  %s2431, 128, %s2428, %s2417
        $region136: #{tpu_custom_call.1} parent=99 // pred_fallthru
          _
      $region100: #{tpu_custom_call.1} parent=5 // pred_fallthru
        _
      %p2434 = scmp.le.s32.totalorder 2, %s39
      // Predicated region
      $region137: #{tpu_custom_call.1} parent=5 // pred_check
        %p2435 = pneg %p2434
      $region138: #{tpu_custom_call.1} parent=5 // pred_check_branch
        %2437 = sbr.rel (%p2435) target = $region140
      $region139: #{tpu_custom_call.1} parent=5 // pred_region
        %s2438 = ssub.s32 %s39, 2
        // Predicated region
        $region141: #{tpu_custom_call.1} parent=139 // pred_check
          %p2439 = pneg %p498
        $region142: #{tpu_custom_call.1} parent=139 // pred_check_branch
          %2441 = sbr.rel (%p2439) target = $region144
        $region143: #{tpu_custom_call.1} parent=139 // pred_region
          %s2442 = sand.u32 %s483, 1
          %s2443 = scalar_lea.sflag [#allocation6], %s2442
          %s2444 = sand.u32 %s483, 1
          %s2445 = smul.addr %s2444, 8
          %s2446 = scalar_lea.vmem [#allocation18], %s2445
          %2447 = dma.done %s2443, 128
        $region144: #{tpu_custom_call.1} parent=139 // pred_fallthru
          _
      $region140: #{tpu_custom_call.1} parent=5 // pred_fallthru
        _
    $region6: #{tpu_custom_call.1} parent=1 // loop_footer
      %s43 = sadd.s32 1, %s39
    $region7: #{tpu_custom_call.1} parent=1 // loop_footer_branch
      %38 = sbr.rel target = $region3
    $region8: #{tpu_custom_call.1} parent=1 // loop_exit
      _
    %2448 = vsyncpa [#allocation5], 1
    %s2449 = scalar_lea.sflag [#allocation5], 1
    %2450 = vsyncpa %s2449, 1
    %2451 = vsyncpa [#allocation8], 1
    %2452 = vsyncpa [#allocation11], 1
    %2453 = vsyncpa [#allocation14], 1
    %2454 = vsyncpa [#allocation17], 1
    %2455 = vsyncpa [#allocation6], 1
    %s2456 = scalar_lea.sflag [#allocation6], 1
    %2457 = vsyncpa %s2456, 1

</llo_original>
